<compile_context>
chip_gen: v5e
topology: v5e:2x2
jax: 0.10.0
libtpu: 0.0.40
codegen_flags: <defaults>
</compile_context>

<pallas_src>
import functools

import jax
import jax.numpy as jnp
from jax.experimental import pallas as pl
from jax.experimental.pallas import tpu as pltpu


# --------------------------------- tiling helpers ---------------------------------- #

def _vmem_limit_bytes():
    """Generation-aware scoped-VMEM budget: ~3/4 of physical VMEM
    (96 MiB on 128 MiB v5e/v6e, 48 MiB on 64 MiB v7x)."""
    try:
        cap = int(pltpu.get_tpu_info().vmem_capacity_bytes)
    except Exception:
        cap = 64 * 1024 * 1024
    return int(min(cap * 3 // 4, 100 * 1024 * 1024))


def _rows_cap(vmem_limit, c4, c_in, w_in):
    """Rough per-block row budget so the y double-buffer (bf16), the f32
    accumulator and the x halo double-buffer fit next to the resident weights."""
    w_bytes = 2 * 9 * c_in * c4 * 2                          # double-buffered bf16 weights
    budget = max(vmem_limit - w_bytes - (4 << 20), 2 << 20)
    per_row = c4 * (2 * 2 + 4) + (c_in * 2 * 2 * (w_in + 2)) // max(w_in, 1)
    return max(8, min(8192, budget // (3 * per_row)))


def _pick_row_blocks(n, h, w_in, rows_cap):
    """Row-blocks per image: largest block (smallest rb) that fits the VMEM row
    budget, keeps the y block sublane-aligned (rows % 8 == 0), and — when
    possible — gives an even total grid so v7x's two TensorCores both get work."""
    divs = [d for d in range(1, h + 1) if h % d == 0]

    def ok(rb, need_even):
        rows_blk = (h // rb) * w_in
        if rows_blk % 8 != 0 or rows_blk > rows_cap:
            return False
        return (not need_even) or (n * rb) % 2 == 0

    for rb in divs:
        if ok(rb, True):
            return rb
    for rb in divs:
        if ok(rb, False):
            return rb
    return 1


def _pick_lane_fold(c4, tile_rows):
    """Fold g row-groups into lanes for the elementwise pass so its last dim is
    lane-dense (target ~512 lanes) even when 4*C_out is small."""
    g = 1
    while (c4 * g < 512 and tile_rows % (2 * g) == 0
           and (tile_rows // (2 * g)) % 8 == 0):
        g *= 2
    return g


# --------------- pass 1: halo-tile deconv matmuls + fused BN partial stats --------- #

def _conv_stats_kernel(x_ref, w_ref, y_ref, stat_ref, *, th, w_in):
    """One (image, row-block) tile.  The 3x3-tap im2col never touches HBM: the
    halo tile of x lives in VMEM (auto-pipelined) and the nine shifted views are
    contracted directly on the MXU with f32 accumulation:
        y[(a,b), (ph,pw,co)] = sum_{u,v,ci} x[a+u, b+v, ci] * Wtap[3u+v, ci, (ph,pw,co)]
    The epilogue emits per-tile per-column mean and centered sum-of-squares
    (Chan-style partials) so BatchNorm never re-reads y from HBM, and stores y
    in bf16 to halve the inter-pass round trip."""
    c_in = x_ref.shape[-1]
    c4 = y_ref.shape[-1]
    rows = th * w_in

    acc = jnp.zeros((rows, c4), jnp.float32)
    for u in range(3):
        for v in range(3):
            lhs = x_ref[pl.ds(u, th), pl.ds(v, w_in), :].reshape(rows, c_in)
            acc = acc + jnp.dot(lhs, w_ref[3 * u + v],
                                preferred_element_type=jnp.float32)

    y_ref[...] = acc.astype(y_ref.dtype)

    mu = jnp.mean(acc, axis=0, keepdims=True)                       # (1, c4)
    stat_ref[0, 0:1, :] = mu
    stat_ref[0, 1:2, :] = jnp.sum((acc - mu) ** 2, axis=0, keepdims=True)


# --------------- pass 2: fused BatchNorm affine + LeakyReLU (lane-dense) ----------- #

def _bn_lrelu_kernel(y_ref, scale_ref, shift_ref, o_ref, *, neg_slope):
    # y arrives bf16; all elementwise math stays in f32 (v5e has no bf16 VPU).
    yhat = y_ref[...].astype(jnp.float32) * scale_ref[...] + shift_ref[...]
    o_ref[...] = jnp.maximum(yhat, neg_slope * yhat)


# ------------------------------------ wrapper -------------------------------------- #

def conv_transpose_block(x_nchw, weight, gamma, beta, *, eps=1e-5, neg_slope=0.2):
    """Forward of ConvTransposeBlock, specialized to the module's configuration
    (kernel_size=5, stride=2, padding=2, output_padding=1, bias=False).
    x_nchw: (N, C_in, H, W); weight: (C_in, C_out, 5, 5) (PyTorch layout)."""
    n, c_in, h_in, w_in = x_nchw.shape
    c_in_w, c_out, kh, kw = weight.shape
    assert c_in == c_in_w and kh == 5 and kw == 5
    h_out, w_out = 2 * h_in, 2 * w_in
    c4 = 4 * c_out                                   # (ph, pw, co) folded into lanes

    vmem_limit = _vmem_limit_bytes()
    rb = _pick_row_blocks(n, h_in, w_in, _rows_cap(vmem_limit, c4, c_in, w_in))
    th = h_in // rb                                  # coarse image rows per block
    rows_blk = th * w_in
    assert rows_blk % 8 == 0, "rows per block must be sublane-aligned"
    num_tiles = n * rb
    rows_total = num_tiles * rows_blk                # == n * h_in * w_in

    # ---- layout glue (bf16, ~1x of x): NHWC, 1-pixel halo, row-blocked. ----
    x = jnp.transpose(x_nchw, (0, 2, 3, 1)).astype(jnp.bfloat16)
    x_pad = jnp.pad(x, ((0, 0), (1, 1), (1, 1), (0, 0)))
    if rb == 1:
        x_halo = x_pad
    else:
        x_halo = jnp.stack([x_pad[:, r * th:r * th + th + 2] for r in range(rb)],
                           axis=1).reshape(num_tiles, th + 2, w_in + 2, c_in)

    # ---- per-tap weights: w_taps[3u+v] maps C_in -> (ph, pw, co). ----
    # Output (2A+ph, 2B+pw) uses kernel tap p = 4-2u+ph, q = 4-2v+pw; p,q == 5
    # are structural zeros, realized by padding the 5x5 kernel to 6x6.
    w_p = jnp.pad(weight.astype(jnp.float32), ((0, 0), (0, 0), (0, 1), (0, 1)))
    idx = 4 - 2 * jnp.arange(3)[:, None] + jnp.arange(2)[None, :]
    w_big = w_p[:, :, idx][:, :, :, :, idx]                  # (ci, co, u, ph, v, pw)
    w_taps = jnp.transpose(w_big, (2, 4, 0, 3, 5, 1)).reshape(9, c_in, c4)
    w_taps = w_taps.astype(jnp.bfloat16)
    # TODO(synk): for very large layers (9*C_in*4*C_out bf16 > ~1/3 of VMEM, e.g.
    # C_in=1024 -> C_out=512) split c4/K over an extra grid axis on v7x.

    # ---- Pallas pass 1: per-tile deconv matmuls + fused BN partial stats. ----
    y, stats = pl.pallas_call(
        functools.partial(_conv_stats_kernel, th=th, w_in=w_in),
        out_shape=(
            jax.ShapeDtypeStruct((rows_total, c4), jnp.bfloat16),
            jax.ShapeDtypeStruct((num_tiles, 2, c4), jnp.float32),
        ),
        grid=(num_tiles,),
        in_specs=[
            pl.BlockSpec((None, th + 2, w_in + 2, c_in), lambda i: (i, 0, 0, 0)),
            pl.BlockSpec((9, c_in, c4), lambda i: (0, 0, 0)),   # resident weights
        ],
        out_specs=(
            pl.BlockSpec((rows_blk, c4), lambda i: (i, 0)),
            pl.BlockSpec((1, 2, c4), lambda i: (i, 0, 0)),
        ),
        compiler_params=pltpu.CompilerParams(
            dimension_semantics=("parallel",),
            vmem_limit_bytes=vmem_limit),
    )(x_halo, w_taps)

    # ---- Tiny JAX combine (Chan-style) -> per-channel fused affine. ----
    mu_g = stats[:, 0, :].reshape(num_tiles, 4, c_out)     # per-(tile, phase) means
    css_g = stats[:, 1, :].reshape(num_tiles, 4, c_out)    # centered sums of squares
    mean = mu_g.mean(axis=(0, 1))
    css = css_g.sum(axis=(0, 1)) + rows_blk * jnp.sum((mu_g - mean) ** 2, axis=(0, 1))
    n_bn = num_tiles * 4 * rows_blk                        # == n * h_out * w_out
    var = css / n_bn                                       # biased var (PyTorch training BN)
    scale = gamma.astype(jnp.float32) * jax.lax.rsqrt(var + eps)
    shift = beta.astype(jnp.float32) - mean * scale

    # ---- Pallas pass 2: bf16 y -> f32 out, affine + LeakyReLU, lane-dense view. ----
    g = _pick_lane_fold(c4, rows_blk)
    y_wide = y.reshape(rows_total // g, g * c4)            # free row-major reshape
    scale_w = jnp.tile(scale, 4 * g).reshape(1, g * c4)    # channel = col % C_out
    shift_w = jnp.tile(shift, 4 * g).reshape(1, g * c4)
    out_wide = pl.pallas_call(
        functools.partial(_bn_lrelu_kernel, neg_slope=neg_slope),
        out_shape=jax.ShapeDtypeStruct((rows_total // g, g * c4), jnp.float32),
        grid=(num_tiles,),
        in_specs=[
            pl.BlockSpec((rows_blk // g, g * c4), lambda i: (i, 0)),
            pl.BlockSpec((1, g * c4), lambda i: (0, 0)),
            pl.BlockSpec((1, g * c4), lambda i: (0, 0)),
        ],
        out_specs=pl.BlockSpec((rows_blk // g, g * c4), lambda i: (i, 0)),
        compiler_params=pltpu.CompilerParams(
            dimension_semantics=("parallel",),
            vmem_limit_bytes=vmem_limit),
    )(y_wide, scale_w, shift_w)

    # ---- Reassemble phases -> NCHW (layout plumbing only). ----
    # TODO(synk): fold this phase interleave / channel transpose into pass 2's store
    # (or emit NHWC) to save one extra HBM round trip of the output.
    out = out_wide.reshape(n, rb, th, w_in, 2, 2, c_out)   # (n, rb, a, b, ph, pw, co)
    out = jnp.transpose(out, (0, 6, 1, 2, 4, 3, 5)).reshape(n, c_out, h_out, w_out)
    return out


# ------------------------------------ reference ------------------------------------ #

def _reference(x, weight, gamma, beta, *, stride=2, padding=2,
               output_padding=1, eps=1e-5, neg_slope=0.2):
    kh = weight.shape[2]
    w_conv = jnp.transpose(weight[:, :, ::-1, ::-1], (1, 0, 2, 3))
    pad = (kh - 1 - padding, kh - 1 - padding + output_padding)
    y = jax.lax.conv_general_dilated(
        x, w_conv, window_strides=(1, 1), padding=[pad, pad],
        lhs_dilation=(stride, stride),
        dimension_numbers=("NCHW", "OIHW", "NCHW"),
        precision=jax.lax.Precision.HIGHEST)
    mean = y.mean(axis=(0, 2, 3), keepdims=True)
    var = y.var(axis=(0, 2, 3), keepdims=True)
    yn = (y - mean) / jnp.sqrt(var + eps)
    yn = yn * gamma.reshape(1, -1, 1, 1) + beta.reshape(1, -1, 1, 1)
    return jnp.where(yn >= 0, yn, neg_slope * yn)


if __name__ == "__main__":
    key = jax.random.PRNGKey(0)
    k1, k2 = jax.random.split(key)
    N, C_IN, C_OUT, H, W, K = 2, 4, 8, 16, 16, 5

    x = jax.random.normal(k1, (N, C_IN, H, W), jnp.float32)
    # PyTorch ConvTranspose2d weight layout: (in_channels, out_channels, kH, kW)
    weight = 0.05 * jax.random.normal(k2, (C_IN, C_OUT, K, K), jnp.float32)
    gamma = jnp.ones((C_OUT,), jnp.float32)   # BatchNorm2d weight init
    beta = jnp.zeros((C_OUT,), jnp.float32)   # BatchNorm2d bias init

    fwd = jax.jit(conv_transpose_block)
    out = jax.block_until_ready(fwd(x, weight, gamma, beta))
    assert out.shape == (N, C_OUT, 2 * H, 2 * W), out.shape

    ref = _reference(x, weight, gamma, beta)
    err = float(jnp.max(jnp.abs(out - ref)))
    # Tolerance accounts for bf16 MXU inputs, the bf16 inter-pass y, and f32
    # accumulation vs the f32 HIGHEST-precision XLA reference (outputs are O(1)).
    if err > 4e-2:
        raise AssertionError(f"mismatch vs reference, max abs err = {err}")
    print("KERNEL_OK")
</pallas_src>

<mosaic_0001>
module attributes {stable_mosaic.version = 11 : i64} {
  func.func @_conv_stats_kernel(%arg0: i32, %arg1: memref<1x18x18x4xbf16, #tpu.memory_space<vmem>>, %arg2: memref<9x4x32xbf16, #tpu.memory_space<vmem>>, %arg3: memref<256x32xbf16, #tpu.memory_space<vmem>>, %arg4: memref<1x2x32xf32, #tpu.memory_space<vmem>>) attributes {dimension_semantics = [#tpu.dimension_semantics<parallel>], iteration_bounds = array<i64: 2>, scalar_prefetch = 0 : i64, scratch_operands = 0 : i64, tpu.core_type = #tpu.core_type<tc>, window_params = [{transform_indices = @transform_0, window_bounds = array<i64: 1, 18, 18, 4>}, {pipeline_mode = #tpu.pipeline_mode<synchronous>, transform_indices = @transform_1, window_bounds = array<i64: 9, 4, 32>}, {transform_indices = @transform_2, window_bounds = array<i64: 256, 32>}, {transform_indices = @transform_3, window_bounds = array<i64: 1, 2, 32>}]} {
    %cst = arith.constant 0.000000e+00 : f32
    %0 = vector.broadcast %cst : f32 to vector<256x32xf32>
    %c0 = arith.constant 0 : index
    %c0_0 = arith.constant 0 : index
    %c0_1 = arith.constant 0 : index
    %c0_2 = arith.constant 0 : index
    %1 = vector.load %arg1[%c0, %c0_0, %c0_1, %c0_2] : memref<1x18x18x4xbf16, #tpu.memory_space<vmem>>, vector<1x16x16x4xbf16>
    %2 = vector.shape_cast %1 : vector<1x16x16x4xbf16> to vector<16x16x4xbf16>
    %3 = vector.shape_cast %2 : vector<16x16x4xbf16> to vector<256x4xbf16>
    %c0_3 = arith.constant 0 : index
    %c0_4 = arith.constant 0 : index
    %c0_5 = arith.constant 0 : index
    %4 = vector.load %arg2[%c0_3, %c0_4, %c0_5] : memref<9x4x32xbf16, #tpu.memory_space<vmem>>, vector<1x4x32xbf16>
    %5 = vector.shape_cast %4 : vector<1x4x32xbf16> to vector<4x32xbf16>
    %cst_6 = arith.constant dense<0.000000e+00> : vector<256x32xf32>
    %6 = tpu.matmul %3, %5, %cst_6 {dimension_numbers = #tpu.dot_dimension_numbers<[1], [0], [0], [1], [0, 0, 1, 1], [], []>} : vector<256x4xbf16>, vector<4x32xbf16>, vector<256x32xf32> -> vector<256x32xf32>
    %7 = arith.addf %0, %6 : vector<256x32xf32>
    %c0_7 = arith.constant 0 : index
    %c0_8 = arith.constant 0 : index
    %c1 = arith.constant 1 : index
    %c0_9 = arith.constant 0 : index
    %8 = vector.load %arg1[%c0_7, %c0_8, %c1, %c0_9] : memref<1x18x18x4xbf16, #tpu.memory_space<vmem>>, vector<1x16x16x4xbf16>
    %9 = vector.shape_cast %8 : vector<1x16x16x4xbf16> to vector<16x16x4xbf16>
    %10 = vector.shape_cast %9 : vector<16x16x4xbf16> to vector<256x4xbf16>
    %c1_10 = arith.constant 1 : index
    %c0_11 = arith.constant 0 : index
    %c0_12 = arith.constant 0 : index
    %11 = vector.load %arg2[%c1_10, %c0_11, %c0_12] : memref<9x4x32xbf16, #tpu.memory_space<vmem>>, vector<1x4x32xbf16>
    %12 = vector.shape_cast %11 : vector<1x4x32xbf16> to vector<4x32xbf16>
    %cst_13 = arith.constant dense<0.000000e+00> : vector<256x32xf32>
    %13 = tpu.matmul %10, %12, %cst_13 {dimension_numbers = #tpu.dot_dimension_numbers<[1], [0], [0], [1], [0, 0, 1, 1], [], []>} : vector<256x4xbf16>, vector<4x32xbf16>, vector<256x32xf32> -> vector<256x32xf32>
    %14 = arith.addf %7, %13 : vector<256x32xf32>
    %c0_14 = arith.constant 0 : index
    %c0_15 = arith.constant 0 : index
    %c2 = arith.constant 2 : index
    %c0_16 = arith.constant 0 : index
    %15 = vector.load %arg1[%c0_14, %c0_15, %c2, %c0_16] : memref<1x18x18x4xbf16, #tpu.memory_space<vmem>>, vector<1x16x16x4xbf16>
    %16 = vector.shape_cast %15 : vector<1x16x16x4xbf16> to vector<16x16x4xbf16>
    %17 = vector.shape_cast %16 : vector<16x16x4xbf16> to vector<256x4xbf16>
    %c2_17 = arith.constant 2 : index
    %c0_18 = arith.constant 0 : index
    %c0_19 = arith.constant 0 : index
    %18 = vector.load %arg2[%c2_17, %c0_18, %c0_19] : memref<9x4x32xbf16, #tpu.memory_space<vmem>>, vector<1x4x32xbf16>
    %19 = vector.shape_cast %18 : vector<1x4x32xbf16> to vector<4x32xbf16>
    %cst_20 = arith.constant dense<0.000000e+00> : vector<256x32xf32>
    %20 = tpu.matmul %17, %19, %cst_20 {dimension_numbers = #tpu.dot_dimension_numbers<[1], [0], [0], [1], [0, 0, 1, 1], [], []>} : vector<256x4xbf16>, vector<4x32xbf16>, vector<256x32xf32> -> vector<256x32xf32>
    %21 = arith.addf %14, %20 : vector<256x32xf32>
    %c0_21 = arith.constant 0 : index
    %c1_22 = arith.constant 1 : index
    %c0_23 = arith.constant 0 : index
    %c0_24 = arith.constant 0 : index
    %22 = vector.load %arg1[%c0_21, %c1_22, %c0_23, %c0_24] : memref<1x18x18x4xbf16, #tpu.memory_space<vmem>>, vector<1x16x16x4xbf16>
    %23 = vector.shape_cast %22 : vector<1x16x16x4xbf16> to vector<16x16x4xbf16>
    %24 = vector.shape_cast %23 : vector<16x16x4xbf16> to vector<256x4xbf16>
    %c3 = arith.constant 3 : index
    %c0_25 = arith.constant 0 : index
    %c0_26 = arith.constant 0 : index
    %25 = vector.load %arg2[%c3, %c0_25, %c0_26] : memref<9x4x32xbf16, #tpu.memory_space<vmem>>, vector<1x4x32xbf16>
    %26 = vector.shape_cast %25 : vector<1x4x32xbf16> to vector<4x32xbf16>
    %cst_27 = arith.constant dense<0.000000e+00> : vector<256x32xf32>
    %27 = tpu.matmul %24, %26, %cst_27 {dimension_numbers = #tpu.dot_dimension_numbers<[1], [0], [0], [1], [0, 0, 1, 1], [], []>} : vector<256x4xbf16>, vector<4x32xbf16>, vector<256x32xf32> -> vector<256x32xf32>
    %28 = arith.addf %21, %27 : vector<256x32xf32>
    %c0_28 = arith.constant 0 : index
    %c1_29 = arith.constant 1 : index
    %c1_30 = arith.constant 1 : index
    %c0_31 = arith.constant 0 : index
    %29 = vector.load %arg1[%c0_28, %c1_29, %c1_30, %c0_31] : memref<1x18x18x4xbf16, #tpu.memory_space<vmem>>, vector<1x16x16x4xbf16>
    %30 = vector.shape_cast %29 : vector<1x16x16x4xbf16> to vector<16x16x4xbf16>
    %31 = vector.shape_cast %30 : vector<16x16x4xbf16> to vector<256x4xbf16>
    %c4 = arith.constant 4 : index
    %c0_32 = arith.constant 0 : index
    %c0_33 = arith.constant 0 : index
    %32 = vector.load %arg2[%c4, %c0_32, %c0_33] : memref<9x4x32xbf16, #tpu.memory_space<vmem>>, vector<1x4x32xbf16>
    %33 = vector.shape_cast %32 : vector<1x4x32xbf16> to vector<4x32xbf16>
    %cst_34 = arith.constant dense<0.000000e+00> : vector<256x32xf32>
    %34 = tpu.matmul %31, %33, %cst_34 {dimension_numbers = #tpu.dot_dimension_numbers<[1], [0], [0], [1], [0, 0, 1, 1], [], []>} : vector<256x4xbf16>, vector<4x32xbf16>, vector<256x32xf32> -> vector<256x32xf32>
    %35 = arith.addf %28, %34 : vector<256x32xf32>
    %c0_35 = arith.constant 0 : index
    %c1_36 = arith.constant 1 : index
    %c2_37 = arith.constant 2 : index
    %c0_38 = arith.constant 0 : index
    %36 = vector.load %arg1[%c0_35, %c1_36, %c2_37, %c0_38] : memref<1x18x18x4xbf16, #tpu.memory_space<vmem>>, vector<1x16x16x4xbf16>
    %37 = vector.shape_cast %36 : vector<1x16x16x4xbf16> to vector<16x16x4xbf16>
    %38 = vector.shape_cast %37 : vector<16x16x4xbf16> to vector<256x4xbf16>
    %c5 = arith.constant 5 : index
    %c0_39 = arith.constant 0 : index
    %c0_40 = arith.constant 0 : index
    %39 = vector.load %arg2[%c5, %c0_39, %c0_40] : memref<9x4x32xbf16, #tpu.memory_space<vmem>>, vector<1x4x32xbf16>
    %40 = vector.shape_cast %39 : vector<1x4x32xbf16> to vector<4x32xbf16>
    %cst_41 = arith.constant dense<0.000000e+00> : vector<256x32xf32>
    %41 = tpu.matmul %38, %40, %cst_41 {dimension_numbers = #tpu.dot_dimension_numbers<[1], [0], [0], [1], [0, 0, 1, 1], [], []>} : vector<256x4xbf16>, vector<4x32xbf16>, vector<256x32xf32> -> vector<256x32xf32>
    %42 = arith.addf %35, %41 : vector<256x32xf32>
    %c0_42 = arith.constant 0 : index
    %c2_43 = arith.constant 2 : index
    %c0_44 = arith.constant 0 : index
    %c0_45 = arith.constant 0 : index
    %43 = vector.load %arg1[%c0_42, %c2_43, %c0_44, %c0_45] : memref<1x18x18x4xbf16, #tpu.memory_space<vmem>>, vector<1x16x16x4xbf16>
    %44 = vector.shape_cast %43 : vector<1x16x16x4xbf16> to vector<16x16x4xbf16>
    %45 = vector.shape_cast %44 : vector<16x16x4xbf16> to vector<256x4xbf16>
    %c6 = arith.constant 6 : index
    %c0_46 = arith.constant 0 : index
    %c0_47 = arith.constant 0 : index
    %46 = vector.load %arg2[%c6, %c0_46, %c0_47] : memref<9x4x32xbf16, #tpu.memory_space<vmem>>, vector<1x4x32xbf16>
    %47 = vector.shape_cast %46 : vector<1x4x32xbf16> to vector<4x32xbf16>
    %cst_48 = arith.constant dense<0.000000e+00> : vector<256x32xf32>
    %48 = tpu.matmul %45, %47, %cst_48 {dimension_numbers = #tpu.dot_dimension_numbers<[1], [0], [0], [1], [0, 0, 1, 1], [], []>} : vector<256x4xbf16>, vector<4x32xbf16>, vector<256x32xf32> -> vector<256x32xf32>
    %49 = arith.addf %42, %48 : vector<256x32xf32>
    %c0_49 = arith.constant 0 : index
    %c2_50 = arith.constant 2 : index
    %c1_51 = arith.constant 1 : index
    %c0_52 = arith.constant 0 : index
    %50 = vector.load %arg1[%c0_49, %c2_50, %c1_51, %c0_52] : memref<1x18x18x4xbf16, #tpu.memory_space<vmem>>, vector<1x16x16x4xbf16>
    %51 = vector.shape_cast %50 : vector<1x16x16x4xbf16> to vector<16x16x4xbf16>
    %52 = vector.shape_cast %51 : vector<16x16x4xbf16> to vector<256x4xbf16>
    %c7 = arith.constant 7 : index
    %c0_53 = arith.constant 0 : index
    %c0_54 = arith.constant 0 : index
    %53 = vector.load %arg2[%c7, %c0_53, %c0_54] : memref<9x4x32xbf16, #tpu.memory_space<vmem>>, vector<1x4x32xbf16>
    %54 = vector.shape_cast %53 : vector<1x4x32xbf16> to vector<4x32xbf16>
    %cst_55 = arith.constant dense<0.000000e+00> : vector<256x32xf32>
    %55 = tpu.matmul %52, %54, %cst_55 {dimension_numbers = #tpu.dot_dimension_numbers<[1], [0], [0], [1], [0, 0, 1, 1], [], []>} : vector<256x4xbf16>, vector<4x32xbf16>, vector<256x32xf32> -> vector<256x32xf32>
    %56 = arith.addf %49, %55 : vector<256x32xf32>
    %c0_56 = arith.constant 0 : index
    %c2_57 = arith.constant 2 : index
    %c2_58 = arith.constant 2 : index
    %c0_59 = arith.constant 0 : index
    %57 = vector.load %arg1[%c0_56, %c2_57, %c2_58, %c0_59] : memref<1x18x18x4xbf16, #tpu.memory_space<vmem>>, vector<1x16x16x4xbf16>
    %58 = vector.shape_cast %57 : vector<1x16x16x4xbf16> to vector<16x16x4xbf16>
    %59 = vector.shape_cast %58 : vector<16x16x4xbf16> to vector<256x4xbf16>
    %c8 = arith.constant 8 : index
    %c0_60 = arith.constant 0 : index
    %c0_61 = arith.constant 0 : index
    %60 = vector.load %arg2[%c8, %c0_60, %c0_61] : memref<9x4x32xbf16, #tpu.memory_space<vmem>>, vector<1x4x32xbf16>
    %61 = vector.shape_cast %60 : vector<1x4x32xbf16> to vector<4x32xbf16>
    %cst_62 = arith.constant dense<0.000000e+00> : vector<256x32xf32>
    %62 = tpu.matmul %59, %61, %cst_62 {dimension_numbers = #tpu.dot_dimension_numbers<[1], [0], [0], [1], [0, 0, 1, 1], [], []>} : vector<256x4xbf16>, vector<4x32xbf16>, vector<256x32xf32> -> vector<256x32xf32>
    %63 = arith.addf %56, %62 : vector<256x32xf32>
    %64 = arith.truncf %63 : vector<256x32xf32> to vector<256x32xbf16>
    %c0_63 = arith.constant 0 : index
    %c0_64 = arith.constant 0 : index
    %65 = vector.load %arg3[%c0_63, %c0_64] : memref<256x32xbf16, #tpu.memory_space<vmem>>, vector<256x32xbf16>
    tpu.vector_store %arg3[%c0_63, %c0_64], %64 {strides = array<i32>} : memref<256x32xbf16, #tpu.memory_space<vmem>>, vector<256x32xbf16>,
    %cst_65 = arith.constant dense<0.000000e+00> : vector<32xf32>
    %66 = vector.multi_reduction <add>, %63, %cst_65 [0] : vector<256x32xf32> to vector<32xf32>
    %67 = vector.shape_cast %66 : vector<32xf32> to vector<1x32xf32>
    %cst_66 = arith.constant 2.560000e+02 : f32
    %68 = vector.broadcast %cst_66 : f32 to vector<1x32xf32>
    %69 = arith.divf %67, %68 : vector<1x32xf32>
    %c0_67 = arith.constant 0 : index
    %c0_68 = arith.constant 0 : index
    %c0_69 = arith.constant 0 : index
    %70 = vector.load %arg4[%c0_67, %c0_68, %c0_69] : memref<1x2x32xf32, #tpu.memory_space<vmem>>, vector<1x1x32xf32>
    %71 = vector.shape_cast %70 : vector<1x1x32xf32> to vector<1x32xf32>
    %72 = vector.shape_cast %69 : vector<1x32xf32> to vector<1x1x32xf32>
    tpu.vector_store %arg4[%c0_67, %c0_68, %c0_69], %72 {strides = array<i32>} : memref<1x2x32xf32, #tpu.memory_space<vmem>>, vector<1x1x32xf32>,
    %73 = vector.broadcast %69 : vector<1x32xf32> to vector<256x32xf32>
    %74 = arith.subf %63, %73 : vector<256x32xf32>
    %75 = arith.mulf %74, %74 : vector<256x32xf32>
    %cst_70 = arith.constant dense<0.000000e+00> : vector<32xf32>
    %76 = vector.multi_reduction <add>, %75, %cst_70 [0] : vector<256x32xf32> to vector<32xf32>
    %77 = vector.shape_cast %76 : vector<32xf32> to vector<1x32xf32>
    %c0_71 = arith.constant 0 : index
    %c1_72 = arith.constant 1 : index
    %c0_73 = arith.constant 0 : index
    %78 = vector.load %arg4[%c0_71, %c1_72, %c0_73] : memref<1x2x32xf32, #tpu.memory_space<vmem>>, vector<1x1x32xf32>
    %79 = vector.shape_cast %78 : vector<1x1x32xf32> to vector<1x32xf32>
    %80 = vector.shape_cast %77 : vector<1x32xf32> to vector<1x1x32xf32>
    tpu.vector_store %arg4[%c0_71, %c1_72, %c0_73], %80 {strides = array<i32>} : memref<1x2x32xf32, #tpu.memory_space<vmem>>, vector<1x1x32xf32>,
    return
  }
  func.func @transform_0(%arg0: i32) -> (i32, i32, i32, i32) {
    %c0_i32 = arith.constant 0 : i32
    %c0_i32_0 = arith.constant 0 : i32
    %c0_i32_1 = arith.constant 0 : i32
    %c0_i32_2 = arith.constant 0 : i32
    return %arg0, %c0_i32, %c0_i32_0, %c0_i32_1 : i32, i32, i32, i32
  }
  func.func @transform_1(%arg0: i32) -> (i32, i32, i32) {
    %c0_i32 = arith.constant 0 : i32
    %c0_i32_0 = arith.constant 0 : i32
    %c0_i32_1 = arith.constant 0 : i32
    %c0_i32_2 = arith.constant 0 : i32
    return %c0_i32, %c0_i32_0, %c0_i32_1 : i32, i32, i32
  }
  func.func @transform_2(%arg0: i32) -> (i32, i32) {
    %c0_i32 = arith.constant 0 : i32
    %c0_i32_0 = arith.constant 0 : i32
    return %arg0, %c0_i32 : i32, i32
  }
  func.func @transform_3(%arg0: i32) -> (i32, i32, i32) {
    %c0_i32 = arith.constant 0 : i32
    %c0_i32_0 = arith.constant 0 : i32
    %c0_i32_1 = arith.constant 0 : i32
    return %arg0, %c0_i32, %c0_i32_0 : i32, i32, i32
  }
}

module attributes {stable_mosaic.version = 11 : i64} {
  func.func @_bn_lrelu_kernel(%arg0: i32, %arg1: memref<16x512xbf16, #tpu.memory_space<vmem>>, %arg2: memref<1x512xf32, #tpu.memory_space<vmem>>, %arg3: memref<1x512xf32, #tpu.memory_space<vmem>>, %arg4: memref<16x512xf32, #tpu.memory_space<vmem>>) attributes {dimension_semantics = [#tpu.dimension_semantics<parallel>], iteration_bounds = array<i64: 2>, scalar_prefetch = 0 : i64, scratch_operands = 0 : i64, tpu.core_type = #tpu.core_type<tc>, window_params = [{transform_indices = @transform_0, window_bounds = array<i64: 16, 512>}, {pipeline_mode = #tpu.pipeline_mode<synchronous>, transform_indices = @transform_1, window_bounds = array<i64: 1, 512>}, {pipeline_mode = #tpu.pipeline_mode<synchronous>, transform_indices = @transform_2, window_bounds = array<i64: 1, 512>}, {transform_indices = @transform_3, window_bounds = array<i64: 16, 512>}]} {
    %c0 = arith.constant 0 : index
    %c0_0 = arith.constant 0 : index
    %0 = vector.load %arg1[%c0, %c0_0] : memref<16x512xbf16, #tpu.memory_space<vmem>>, vector<16x512xbf16>
    %1 = arith.extf %0 : vector<16x512xbf16> to vector<16x512xf32>
    %c0_1 = arith.constant 0 : index
    %c0_2 = arith.constant 0 : index
    %2 = vector.load %arg2[%c0_1, %c0_2] : memref<1x512xf32, #tpu.memory_space<vmem>>, vector<1x512xf32>
    %3 = vector.broadcast %2 : vector<1x512xf32> to vector<16x512xf32>
    %4 = arith.mulf %1, %3 : vector<16x512xf32>
    %c0_3 = arith.constant 0 : index
    %c0_4 = arith.constant 0 : index
    %5 = vector.load %arg3[%c0_3, %c0_4] : memref<1x512xf32, #tpu.memory_space<vmem>>, vector<1x512xf32>
    %6 = vector.broadcast %5 : vector<1x512xf32> to vector<16x512xf32>
    %7 = arith.addf %4, %6 : vector<16x512xf32>
    %cst = arith.constant 2.000000e-01 : f32
    %8 = vector.broadcast %cst : f32 to vector<16x512xf32>
    %9 = arith.mulf %8, %7 : vector<16x512xf32>
    %10 = arith.maximumf %7, %9 : vector<16x512xf32>
    %c0_5 = arith.constant 0 : index
    %c0_6 = arith.constant 0 : index
    %11 = vector.load %arg4[%c0_5, %c0_6] : memref<16x512xf32, #tpu.memory_space<vmem>>, vector<16x512xf32>
    tpu.vector_store %arg4[%c0_5, %c0_6], %10 {strides = array<i32>} : memref<16x512xf32, #tpu.memory_space<vmem>>, vector<16x512xf32>,
    return
  }
  func.func @transform_0(%arg0: i32) -> (i32, i32) {
    %c0_i32 = arith.constant 0 : i32
    %c0_i32_0 = arith.constant 0 : i32
    return %arg0, %c0_i32 : i32, i32
  }
  func.func @transform_1(%arg0: i32) -> (i32, i32) {
    %c0_i32 = arith.constant 0 : i32
    %c0_i32_0 = arith.constant 0 : i32
    %c0_i32_1 = arith.constant 0 : i32
    return %c0_i32, %c0_i32_0 : i32, i32
  }
  func.func @transform_2(%arg0: i32) -> (i32, i32) {
    %c0_i32 = arith.constant 0 : i32
    %c0_i32_0 = arith.constant 0 : i32
    %c0_i32_1 = arith.constant 0 : i32
    return %c0_i32, %c0_i32_0 : i32, i32
  }
  func.func @transform_3(%arg0: i32) -> (i32, i32) {
    %c0_i32 = arith.constant 0 : i32
    %c0_i32_0 = arith.constant 0 : i32
    return %arg0, %c0_i32 : i32, i32
  }
}

</mosaic_0001>

<llo_original>
// kernel: tile.18
$region0: #{tile.18}
  #allocation0 [shape = 's32[1]{0}', space=sflag, size = 0x4, scoped, tag = 'scoped memory for tile.18']
  %s0 = inlined_call_operand.vmem [shape: f32[8], index: 0, kind: input, shape index: {}]
  %s1 = inlined_call_operand.vmem [shape: f32[64,8], index: 1, kind: output, shape index: {}]
  // Predicated region
  $region2: #{tile.18} parent=0 // pred_check
    _
  $region3: #{tile.18} parent=0 // pred_check_branch
    %3 = sbr.rel (0) target = $region5
  $region4: #{tile.18} parent=0 // pred_region
    _
  $region5: #{tile.18} parent=0 // pred_fallthru
    _
  %v4 = vld [vmem:[%s0] ss:$0 sm:$0xff]
  %5 = vst [vmem:[%s1] sm:$0xff] %v4
  %s6 = scalar_lea.vmem %s1, 8
  %7 = vst [vmem:[%s6] sm:$0xff] %v4
  %s8 = scalar_lea.vmem %s1, 16
  %9 = vst [vmem:[%s8] sm:$0xff] %v4
  %s10 = scalar_lea.vmem %s1, 24
  %11 = vst [vmem:[%s10] sm:$0xff] %v4
  %s12 = scalar_lea.vmem %s1, 32
  %13 = vst [vmem:[%s12] sm:$0xff] %v4
  %s14 = scalar_lea.vmem %s1, 40
  %15 = vst [vmem:[%s14] sm:$0xff] %v4
  %s16 = scalar_lea.vmem %s1, 48
  %17 = vst [vmem:[%s16] sm:$0xff] %v4
  %s18 = scalar_lea.vmem %s1, 56
  %19 = vst [vmem:[%s18] sm:$0xff] %v4

// kernel: tile.19
$region0: #{tile.19}
  %s0 = inlined_call_operand.vmem [shape: f32[64,8], index: 0, kind: input, shape index: {}]
  %s1 = inlined_call_operand.vmem [shape: f32[1,512], index: 1, kind: output, shape index: {}]
  $region1: #{tile.19} parent=0
    #allocation0 [shape = 'u8[16384]{0}', space=vmem, size = 0x4000, scoped, tag = 'scoped mem for output reshape']
    %s2 = smov 3
    %v3 = vld [vmem:[%s0] ss:$16 sm:%s2]
    %s4 = smov 12
    %v5 = vld [vmem:[%s0] ss:$16 sm:%s4]
    %vm6 = vcmask 1043458
    %v7 = vsel %vm6, %v5, %v3
    %vm8 = vcmask 64512
    %9 = vst.msk [vmem:[#allocation0] ss:$8 sm:$0xf] %vm8, %v7
    %s10 = scalar_lea.vmem %s0, 15
    %s11 = smov 3
    %v12 = vld [vmem:[%s10] ss:$16 sm:%s11]
    %s13 = scalar_lea.vmem %s0, 15
    %s14 = smov 12
    %v15 = vld [vmem:[%s13] ss:$16 sm:%s14]
    %vm16 = vcmask 1043458
    %v17 = vsel %vm16, %v15, %v12
    %18 = vrot.lane.b32.xlu0 %v17, 120
    %v19 = vpop.permute.xlu0 %18
    %vm20 = vcmask 1048512
    %21 = vst.msk [vmem:[#allocation0] ss:$8 sm:$0xf] %vm20, %v19
    %s22 = scalar_lea.vmem %s0, 14
    %s23 = smov 3
    %v24 = vld [vmem:[%s22] ss:$16 sm:%s23]
    %s25 = scalar_lea.vmem %s0, 14
    %s26 = smov 12
    %v27 = vld [vmem:[%s25] ss:$16 sm:%s26]
    %vm28 = vcmask 1043458
    %v29 = vsel %vm28, %v27, %v24
    %30 = vrot.lane.b32.xlu0 %v29, 112
    %v31 = vpop.permute.xlu0 %30
    %vm32 = vcmask 982912
    %33 = vst.msk [vmem:[#allocation0] ss:$8 sm:$0xf] %vm32, %v31
    %s34 = scalar_lea.vmem %s0, 13
    %s35 = smov 3
    %v36 = vld [vmem:[%s34] ss:$16 sm:%s35]
    %s37 = scalar_lea.vmem %s0, 13
    %s38 = smov 12
    %v39 = vld [vmem:[%s37] ss:$16 sm:%s38]
    %vm40 = vcmask 1043458
    %v41 = vsel %vm40, %v39, %v36
    %42 = vrot.lane.b32.xlu0 %v41, 104
    %v43 = vpop.permute.xlu0 %42
    %vm44 = vcmask 917312
    %45 = vst.msk [vmem:[#allocation0] ss:$8 sm:$0xf] %vm44, %v43
    %s46 = scalar_lea.vmem %s0, 12
    %s47 = smov 3
    %v48 = vld [vmem:[%s46] ss:$16 sm:%s47]
    %s49 = scalar_lea.vmem %s0, 12
    %s50 = smov 12
    %v51 = vld [vmem:[%s49] ss:$16 sm:%s50]
    %vm52 = vcmask 1043458
    %v53 = vsel %vm52, %v51, %v48
    %54 = vrot.lane.b32.xlu0 %v53, 96
    %v55 = vpop.permute.xlu0 %54
    %vm56 = vcmask 851712
    %57 = vst.msk [vmem:[#allocation0] ss:$8 sm:$0xf] %vm56, %v55
    %s58 = scalar_lea.vmem %s0, 11
    %s59 = smov 3
    %v60 = vld [vmem:[%s58] ss:$16 sm:%s59]
    %s61 = scalar_lea.vmem %s0, 11
    %s62 = smov 12
    %v63 = vld [vmem:[%s61] ss:$16 sm:%s62]
    %vm64 = vcmask 1043458
    %v65 = vsel %vm64, %v63, %v60
    %66 = vrot.lane.b32.xlu0 %v65, 88
    %v67 = vpop.permute.xlu0 %66
    %vm68 = vcmask 786112
    %69 = vst.msk [vmem:[#allocation0] ss:$8 sm:$0xf] %vm68, %v67
    %s70 = scalar_lea.vmem %s0, 10
    %s71 = smov 3
    %v72 = vld [vmem:[%s70] ss:$16 sm:%s71]
    %s73 = scalar_lea.vmem %s0, 10
    %s74 = smov 12
    %v75 = vld [vmem:[%s73] ss:$16 sm:%s74]
    %vm76 = vcmask 1043458
    %v77 = vsel %vm76, %v75, %v72
    %78 = vrot.lane.b32.xlu0 %v77, 80
    %v79 = vpop.permute.xlu0 %78
    %vm80 = vcmask 720512
    %81 = vst.msk [vmem:[#allocation0] ss:$8 sm:$0xf] %vm80, %v79
    %s82 = scalar_lea.vmem %s0, 9
    %s83 = smov 3
    %v84 = vld [vmem:[%s82] ss:$16 sm:%s83]
    %s85 = scalar_lea.vmem %s0, 9
    %s86 = smov 12
    %v87 = vld [vmem:[%s85] ss:$16 sm:%s86]
    %vm88 = vcmask 1043458
    %v89 = vsel %vm88, %v87, %v84
    %90 = vrot.lane.b32.xlu0 %v89, 72
    %v91 = vpop.permute.xlu0 %90
    %vm92 = vcmask 654912
    %93 = vst.msk [vmem:[#allocation0] ss:$8 sm:$0xf] %vm92, %v91
    %s94 = scalar_lea.vmem %s0, 8
    %s95 = smov 3
    %v96 = vld [vmem:[%s94] ss:$16 sm:%s95]
    %s97 = scalar_lea.vmem %s0, 8
    %s98 = smov 12
    %v99 = vld [vmem:[%s97] ss:$16 sm:%s98]
    %vm100 = vcmask 1043458
    %v101 = vsel %vm100, %v99, %v96
    %102 = vrot.lane.b32.xlu0 %v101, 64
    %v103 = vpop.permute.xlu0 %102
    %vm104 = vcmask 589312
    %105 = vst.msk [vmem:[#allocation0] ss:$8 sm:$0xf] %vm104, %v103
    %s106 = scalar_lea.vmem %s0, 7
    %s107 = smov 3
    %v108 = vld [vmem:[%s106] ss:$16 sm:%s107]
    %s109 = scalar_lea.vmem %s0, 7
    %s110 = smov 12
    %v111 = vld [vmem:[%s109] ss:$16 sm:%s110]
    %vm112 = vcmask 1043458
    %v113 = vsel %vm112, %v111, %v108
    %114 = vrot.lane.b32.xlu0 %v113, 56
    %v115 = vpop.permute.xlu0 %114
    %vm116 = vcmask 523712
    %117 = vst.msk [vmem:[#allocation0] ss:$8 sm:$0xf] %vm116, %v115
    %s118 = scalar_lea.vmem %s0, 6
    %s119 = smov 3
    %v120 = vld [vmem:[%s118] ss:$16 sm:%s119]
    %s121 = scalar_lea.vmem %s0, 6
    %s122 = smov 12
    %v123 = vld [vmem:[%s121] ss:$16 sm:%s122]
    %vm124 = vcmask 1043458
    %v125 = vsel %vm124, %v123, %v120
    %126 = vrot.lane.b32.xlu0 %v125, 48
    %v127 = vpop.permute.xlu0 %126
    %vm128 = vcmask 458112
    %129 = vst.msk [vmem:[#allocation0] ss:$8 sm:$0xf] %vm128, %v127
    %s130 = scalar_lea.vmem %s0, 5
    %s131 = smov 3
    %v132 = vld [vmem:[%s130] ss:$16 sm:%s131]
    %s133 = scalar_lea.vmem %s0, 5
    %s134 = smov 12
    %v135 = vld [vmem:[%s133] ss:$16 sm:%s134]
    %vm136 = vcmask 1043458
    %v137 = vsel %vm136, %v135, %v132
    %138 = vrot.lane.b32.xlu0 %v137, 40
    %v139 = vpop.permute.xlu0 %138
    %vm140 = vcmask 392512
    %141 = vst.msk [vmem:[#allocation0] ss:$8 sm:$0xf] %vm140, %v139
    %s142 = scalar_lea.vmem %s0, 4
    %s143 = smov 3
    %v144 = vld [vmem:[%s142] ss:$16 sm:%s143]
    %s145 = scalar_lea.vmem %s0, 4
    %s146 = smov 12
    %v147 = vld [vmem:[%s145] ss:$16 sm:%s146]
    %vm148 = vcmask 1043458
    %v149 = vsel %vm148, %v147, %v144
    %150 = vrot.lane.b32.xlu0 %v149, 32
    %v151 = vpop.permute.xlu0 %150
    %vm152 = vcmask 326912
    %153 = vst.msk [vmem:[#allocation0] ss:$8 sm:$0xf] %vm152, %v151
    %s154 = scalar_lea.vmem %s0, 3
    %s155 = smov 3
    %v156 = vld [vmem:[%s154] ss:$16 sm:%s155]
    %s157 = scalar_lea.vmem %s0, 3
    %s158 = smov 12
    %v159 = vld [vmem:[%s157] ss:$16 sm:%s158]
    %vm160 = vcmask 1043458
    %v161 = vsel %vm160, %v159, %v156
    %162 = vrot.lane.b32.xlu0 %v161, 24
    %v163 = vpop.permute.xlu0 %162
    %vm164 = vcmask 261312
    %165 = vst.msk [vmem:[#allocation0] ss:$8 sm:$0xf] %vm164, %v163
    %s166 = scalar_lea.vmem %s0, 2
    %s167 = smov 3
    %v168 = vld [vmem:[%s166] ss:$16 sm:%s167]
    %s169 = scalar_lea.vmem %s0, 2
    %s170 = smov 12
    %v171 = vld [vmem:[%s169] ss:$16 sm:%s170]
    %vm172 = vcmask 1043458
    %v173 = vsel %vm172, %v171, %v168
    %174 = vrot.lane.b32.xlu0 %v173, 16
    %v175 = vpop.permute.xlu0 %174
    %vm176 = vcmask 195712
    %177 = vst.msk [vmem:[#allocation0] ss:$8 sm:$0xf] %vm176, %v175
    %s178 = scalar_lea.vmem %s0, 1
    %s179 = smov 3
    %v180 = vld [vmem:[%s178] ss:$16 sm:%s179]
    %s181 = scalar_lea.vmem %s0, 1
    %s182 = smov 12
    %v183 = vld [vmem:[%s181] ss:$16 sm:%s182]
    %vm184 = vcmask 1043458
    %v185 = vsel %vm184, %v183, %v180
    %186 = vrot.lane.b32.xlu0 %v185, 8
    %v187 = vpop.permute.xlu0 %186
    %vm188 = vcmask 130112
    %189 = vst.msk [vmem:[#allocation0] ss:$8 sm:$0xf] %vm188, %v187
    %s191 = ssub.s32 2, 1
    %v192 = vld [vmem:[#allocation0] sm:%s191]
    %s194 = ssub.s32 2, 1
    %195 = vst [vmem:[%s1] sm:%s194] %v192
    %s196 = scalar_lea.vmem [#allocation0], 8
    %v197 = vld [vmem:[%s196] sm:%s191]
    %s199 = ssub.s32 2, 1
    %s200 = scalar_lea.vmem %s1, 1
    %201 = vst [vmem:[%s200] sm:%s199] %v197
    %s202 = scalar_lea.vmem [#allocation0], 16
    %v203 = vld [vmem:[%s202] sm:%s191]
    %s205 = ssub.s32 2, 1
    %s206 = scalar_lea.vmem %s1, 2
    %207 = vst [vmem:[%s206] sm:%s205] %v203
    %s208 = scalar_lea.vmem [#allocation0], 24
    %v209 = vld [vmem:[%s208] sm:%s191]
    %s211 = ssub.s32 2, 1
    %s212 = scalar_lea.vmem %s1, 3
    %213 = vst [vmem:[%s212] sm:%s211] %v209

// kernel: conv_transpose_block.3
$region0: #{conv_transpose_block.3}
  #allocation0 [shape = 'u32[]', space=smem, size = 0x4, offset = 0x4, fixed_abs, tag = 'smem constant byte address 0x4 - core index']
  #allocation1 [shape = 'u32[72,128]{1,0:T(1,128)}', space=vmem, size = 0x9000, scoped, tag = 'internal scratch']
  %s0 = inlined_call_operand.vmem [shape: bf16[32,512], index: 0, kind: input, shape index: {}]
  %s1 = inlined_call_operand.vmem [shape: f32[1,512], index: 1, kind: input, shape index: {}]
  %s2 = inlined_call_operand.vmem [shape: f32[1,512], index: 2, kind: input, shape index: {}]
  %s3 = inlined_call_operand.vmem [shape: f32[32,512], index: 3, kind: output, shape index: {}]
  %s4 = sld [smem:[#allocation0]]
  $region45: #{conv_transpose_block.3} parent=0
    _
  %s6 = ssub.s32 1, %s4
  %s7 = scalar_select 0, %s6, %s4
  loop: start=0, step=1, limit=4
  $region2: #{conv_transpose_block.3} parent=0 // loop_pre_header
    _
  $region3: #{conv_transpose_block.3} parent=0 // loop_header
    %s9 = sphi 0, %s13
    %p10 = scmp.ge.s32.totalorder %s9, 4
    %s19 = sphi 0, %s21
    %s22 = sphi 0, %s19
    %s23 = sphi 0, %s22
    %s39 = sphi 0, %s23
    %s43 = sphi 0, %s43
    %s45 = sphi 0, %s43
    %s46 = sphi 0, %s45
    %s60 = sphi 0, %s46
    %s64 = sphi 0, %s64
    %s66 = sphi 0, %s64
    %s67 = sphi 0, %s66
    %s81 = sphi 0, %s67
    %s87 = sphi 0, %s89
    %s90 = sphi 0, %s87
    %s91 = sphi 0, %s90
    %s107 = sphi 0, %s91
  $region4: #{conv_transpose_block.3} parent=0 // loop_header_branch
    %12 = sbr.rel (%p10) target = $region8
  $region5: #{conv_transpose_block.3} parent=0 // loop_body
    %s14 = ssub.s32 %s9, 1
    %s15 = ssub.s32 %s9, 2
    %s16 = sadd.s32 %s9, 1
    %s17 = ssub.s32 %s9, %s16
    %p18 = scmp.eq.s32.totalorder %s17, 0
    %s20 = sadd.s32 %s19, 1
    %s21 = scalar_select %p18, %s19, %s20
    %p24 = pneg %p18
    %p25 = scmp.eq.s32.totalorder %s9, 1
    %p26 = por %p24, %p25
    %p27 = scmp.ne.s32.totalorder %s19, %s22
    %p28 = scmp.eq.s32.totalorder %s9, 0
    %p29 = por %p27, %p28
    %p30 = scmp.ne.s32.totalorder %s19, %s22
    %p31 = scmp.eq.s32.totalorder %s14, 1
    %p32 = por %p30, %p31
    %p33 = scmp.ne.s32.totalorder %s22, %s23
    %p34 = scmp.eq.s32.totalorder %s14, 0
    %p35 = por %p33, %p34
    %p36 = scmp.ne.s32.totalorder %s22, %s23
    %p37 = scmp.eq.s32.totalorder %s15, 1
    %p38 = por %p36, %p37
    %p40 = scmp.ne.s32.totalorder %s23, %s39
    %p41 = scmp.eq.s32.totalorder %s15, 0
    %p42 = por %p40, %p41
    %s44 = sadd.s32 %s43, 1
    %p47 = scmp.eq.s32.totalorder %s9, 1
    %p48 = scmp.ne.s32.totalorder %s43, %s45
    %p49 = scmp.eq.s32.totalorder %s9, 0
    %p50 = por %p48, %p49
    %p51 = scmp.ne.s32.totalorder %s43, %s45
    %p52 = scmp.eq.s32.totalorder %s14, 1
    %p53 = por %p51, %p52
    %p54 = scmp.ne.s32.totalorder %s45, %s46
    %p55 = scmp.eq.s32.totalorder %s14, 0
    %p56 = por %p54, %p55
    %p57 = scmp.ne.s32.totalorder %s45, %s46
    %p58 = scmp.eq.s32.totalorder %s15, 1
    %p59 = por %p57, %p58
    %p61 = scmp.ne.s32.totalorder %s46, %s60
    %p62 = scmp.eq.s32.totalorder %s15, 0
    %p63 = por %p61, %p62
    %s65 = sadd.s32 %s64, 1
    %p68 = scmp.eq.s32.totalorder %s9, 1
    %p69 = scmp.ne.s32.totalorder %s64, %s66
    %p70 = scmp.eq.s32.totalorder %s9, 0
    %p71 = por %p69, %p70
    %p72 = scmp.ne.s32.totalorder %s64, %s66
    %p73 = scmp.eq.s32.totalorder %s14, 1
    %p74 = por %p72, %p73
    %p75 = scmp.ne.s32.totalorder %s66, %s67
    %p76 = scmp.eq.s32.totalorder %s14, 0
    %p77 = por %p75, %p76
    %p78 = scmp.ne.s32.totalorder %s66, %s67
    %p79 = scmp.eq.s32.totalorder %s15, 1
    %p80 = por %p78, %p79
    %p82 = scmp.ne.s32.totalorder %s67, %s81
    %p83 = scmp.eq.s32.totalorder %s15, 0
    %p84 = por %p82, %p83
    %s85 = ssub.s32 %s9, %s16
    %p86 = scmp.eq.s32.totalorder %s85, 0
    %s88 = sadd.s32 %s87, 1
    %s89 = scalar_select %p86, %s87, %s88
    %p92 = pneg %p86
    %p93 = scmp.eq.s32.totalorder %s9, 1
    %p94 = por %p92, %p93
    %p95 = scmp.ne.s32.totalorder %s87, %s90
    %p96 = scmp.eq.s32.totalorder %s9, 0
    %p97 = por %p95, %p96
    %p98 = scmp.ne.s32.totalorder %s87, %s90
    %p99 = scmp.eq.s32.totalorder %s14, 1
    %p100 = por %p98, %p99
    %p101 = scmp.ne.s32.totalorder %s90, %s91
    %p102 = scmp.eq.s32.totalorder %s14, 0
    %p103 = por %p101, %p102
    %p104 = scmp.ne.s32.totalorder %s90, %s91
    %p105 = scmp.eq.s32.totalorder %s15, 1
    %p106 = por %p104, %p105
    %p108 = scmp.ne.s32.totalorder %s91, %s107
    %p109 = scmp.eq.s32.totalorder %s15, 0
    %p110 = por %p108, %p109
    %p111 = scmp.le.s32.totalorder 1, %s9
    %p112 = scmp.lt.s32.totalorder %s9, 3
    %p113 = pnand %p111, %p112
    %p114 = pneg %p113
    // Predicated region
    $region9: #{conv_transpose_block.3} parent=5 // pred_check
      _
    $region10: #{conv_transpose_block.3} parent=5 // pred_check_branch
      %116 = sbr.rel (%p113) target = $region12
    $region11: #{conv_transpose_block.3} parent=5 // pred_region
      %s117 = ssub.s32 %s9, 1
      // Predicated region
      $region13: #{conv_transpose_block.3} parent=11 // pred_check
        %p118 = pneg %p56
      $region14: #{conv_transpose_block.3} parent=11 // pred_check_branch
        %120 = sbr.rel (%p118) target = $region16
      $region15: #{conv_transpose_block.3} parent=11 // pred_region
        _
      $region16: #{conv_transpose_block.3} parent=11 // pred_fallthru
        _
      // Predicated region
      $region17: #{conv_transpose_block.3} parent=11 // pred_check
        %p121 = pneg %p77
      $region18: #{conv_transpose_block.3} parent=11 // pred_check_branch
        %123 = sbr.rel (%p121) target = $region20
      $region19: #{conv_transpose_block.3} parent=11 // pred_region
        _
      $region20: #{conv_transpose_block.3} parent=11 // pred_fallthru
        _
    $region12: #{conv_transpose_block.3} parent=5 // pred_fallthru
      _
    %p124 = scmp.lt.s32.totalorder %s9, 2
    // Predicated region
    $region21: #{conv_transpose_block.3} parent=5 // pred_check
      %p125 = pneg %p124
    $region22: #{conv_transpose_block.3} parent=5 // pred_check_branch
      %127 = sbr.rel (%p125) target = $region24
    $region23: #{conv_transpose_block.3} parent=5 // pred_region
      // Predicated region
      $region25: #{conv_transpose_block.3} parent=23 // pred_check
        %p128 = pneg %p29
      $region26: #{conv_transpose_block.3} parent=23 // pred_check_branch
        %130 = sbr.rel (%p128) target = $region28
      $region27: #{conv_transpose_block.3} parent=23 // pred_region
        %s131 = smul.u32 2, %s9
        %p132 = scmp.lt.s32.totalorder %s131, 3
        %s133 = scalar_select %p132, %s131, 3
        %s134 = smul.addr %s133, 4
        %s135 = smul.addr %s134, 4
        %s136 = scalar_lea.vmem %s0, %s135
        %s137 = smul.u32 2, %s9
      $region28: #{conv_transpose_block.3} parent=23 // pred_fallthru
        _
    $region24: #{conv_transpose_block.3} parent=5 // pred_fallthru
      _
    %p138 = scmp.le.s32.totalorder 1, %s9
    %p139 = scmp.lt.s32.totalorder %s9, 3
    %p140 = pnand %p138, %p139
    %p141 = pneg %p140
    // Predicated region
    $region29: #{conv_transpose_block.3} parent=5 // pred_check
      _
    $region30: #{conv_transpose_block.3} parent=5 // pred_check_branch
      %143 = sbr.rel (%p140) target = $region32
    $region31: #{conv_transpose_block.3} parent=5 // pred_region
      %s144 = ssub.s32 %s9, 1
      %s145 = smul.u32 2, %s14
      %p146 = scmp.lt.s32.totalorder %s145, 3
      %s147 = scalar_select %p146, %s145, 3
      %s148 = smul.addr %s147, 4
      %s149 = smul.addr %s148, 4
      %s150 = scalar_lea.vmem %s0, %s149
      %p151 = pneg %p35
      %p152 = pneg %p32
      %p153 = pneg %p56
      %p154 = pneg %p53
      %p155 = pneg %p77
      %p156 = pneg %p74
      %p157 = pneg %p103
      %p158 = pneg %p100
      %s159 = smul.u32 2, %s14
      %p160 = scmp.lt.s32.totalorder %s159, 3
      %s161 = scalar_select %p160, %s159, 3
      %s162 = smul.addr %s161, 4
      %s163 = smul.addr %s162, 8
      %s164 = scalar_lea.vmem %s3, %s163
      %s165 = smul.u32 2, %s14
      %p166 = scmp.lt.s32.totalorder %s165, 3
      %s167 = scalar_select %p166, %s165, 3
      %s168 = smul.addr %s167, 4
      %s169 = smul.addr %s168, 4
      %s170 = scalar_lea.vmem %s0, %s169
      %s171 = smul.u32 2, %s14
      %s172 = smul.u32 2, %s14
      %p173 = scmp.lt.s32.totalorder %s172, 3
      %s174 = scalar_select %p173, %s172, 3
      %s175 = smul.addr %s174, 4
      %s176 = smul.addr %s175, 8
      %s177 = scalar_lea.vmem %s3, %s176
      %s178 = smul.u32 2, %s14
      %v179 = vld [vmem:[%s170] sm:$0xff]
      %v180 = vld [vmem:[%s170 + $0x8] sm:$0xff]
      %v181 = vld [vmem:[%s170 + $0x10] sm:$0xff]
      %v182 = vld [vmem:[%s170 + $0x18] sm:$0xff]
      %v183 = vunpack.c.l.bf16 %v179
      %v184 = vunpack.c.h.bf16 %v179
      %v185 = vunpack.c.l.bf16 %v180
      %v186 = vunpack.c.h.bf16 %v180
      %v187 = vunpack.c.l.bf16 %v181
      %v188 = vunpack.c.h.bf16 %v181
      %v189 = vunpack.c.l.bf16 %v182
      %v190 = vunpack.c.h.bf16 %v182
      %v191 = vld [vmem:[%s1] sm:$0xf]
      %v193 = vperm.slane %v191, 0
      %v194 = vperm.slane %v191, 1
      %v195 = vperm.slane %v191, 2
      %v196 = vperm.slane %v191, 3
      %v201 = vmul.f32 %v183, %v193
      %v202 = vmul.f32 %v184, %v194
      %v203 = vmul.f32 %v185, %v195
      %v204 = vmul.f32 %v186, %v196
      %v205 = vmul.f32 %v187, %v193
      %v206 = vmul.f32 %v188, %v194
      %v207 = vmul.f32 %v189, %v195
      %v208 = vmul.f32 %v190, %v196
      %v209 = vld [vmem:[%s2] sm:$0xf]
      %v211 = vperm.slane %v209, 0
      %v212 = vperm.slane %v209, 1
      %v213 = vperm.slane %v209, 2
      %v214 = vperm.slane %v209, 3
      %v219 = vadd.f32 %v201, %v211
      %v220 = vadd.f32 %v202, %v212
      %v221 = vadd.f32 %v203, %v213
      %v222 = vadd.f32 %v204, %v214
      %v223 = vadd.f32 %v205, %v211
      %v224 = vadd.f32 %v206, %v212
      %v225 = vadd.f32 %v207, %v213
      %v226 = vadd.f32 %v208, %v214
      %v227 = vmul.f32 %v219, 0.2
      %v228 = vmul.f32 %v220, 0.2
      %v229 = vmul.f32 %v221, 0.2
      %v230 = vmul.f32 %v222, 0.2
      %v231 = vmul.f32 %v223, 0.2
      %v232 = vmul.f32 %v224, 0.2
      %v233 = vmul.f32 %v225, 0.2
      %v234 = vmul.f32 %v226, 0.2
      %v235 = vmax.f32 %v219, %v227
      %v236 = vmax.f32 %v220, %v228
      %v237 = vmax.f32 %v221, %v229
      %v238 = vmax.f32 %v222, %v230
      %v239 = vmax.f32 %v223, %v231
      %v240 = vmax.f32 %v224, %v232
      %v241 = vmax.f32 %v225, %v233
      %v242 = vmax.f32 %v226, %v234
      %243 = vst [vmem:[%s177] sm:$0xff] %v235
      %244 = vst [vmem:[%s177 + $0x8] sm:$0xff] %v236
      %245 = vst [vmem:[%s177 + $0x10] sm:$0xff] %v237
      %246 = vst [vmem:[%s177 + $0x18] sm:$0xff] %v238
      %247 = vst [vmem:[%s177 + $0x20] sm:$0xff] %v239
      %248 = vst [vmem:[%s177 + $0x28] sm:$0xff] %v240
      %249 = vst [vmem:[%s177 + $0x30] sm:$0xff] %v241
      %250 = vst [vmem:[%s177 + $0x38] sm:$0xff] %v242
      %s251 = smul.u32 2, %s14
      %p252 = scmp.lt.s32.totalorder %s251, 3
      %s253 = scalar_select %p252, %s251, 3
      %s254 = smul.addr %s253, 4
      %s255 = smul.addr %s254, 8
      %s256 = scalar_lea.vmem %s3, %s255
      // Predicated region
      $region33: #{conv_transpose_block.3} parent=31 // pred_check
        %p257 = pneg %p100
      $region34: #{conv_transpose_block.3} parent=31 // pred_check_branch
        %259 = sbr.rel (%p257) target = $region36
      $region35: #{conv_transpose_block.3} parent=31 // pred_region
        %s260 = smul.u32 2, %s14
      $region36: #{conv_transpose_block.3} parent=31 // pred_fallthru
        _
    $region32: #{conv_transpose_block.3} parent=5 // pred_fallthru
      _
    %p261 = scmp.le.s32.totalorder 2, %s9
    // Predicated region
    $region37: #{conv_transpose_block.3} parent=5 // pred_check
      %p262 = pneg %p261
    $region38: #{conv_transpose_block.3} parent=5 // pred_check_branch
      %264 = sbr.rel (%p262) target = $region40
    $region39: #{conv_transpose_block.3} parent=5 // pred_region
      %s265 = ssub.s32 %s9, 2
      // Predicated region
      $region41: #{conv_transpose_block.3} parent=39 // pred_check
        %p266 = pneg %p106
      $region42: #{conv_transpose_block.3} parent=39 // pred_check_branch
        %268 = sbr.rel (%p266) target = $region44
      $region43: #{conv_transpose_block.3} parent=39 // pred_region
        %s269 = smul.u32 2, %s15
        %p270 = scmp.lt.s32.totalorder %s269, 3
        %s271 = scalar_select %p270, %s269, 3
        %s272 = smul.addr %s271, 4
        %s273 = smul.addr %s272, 8
        %s274 = scalar_lea.vmem %s3, %s273
      $region44: #{conv_transpose_block.3} parent=39 // pred_fallthru
        _
    $region40: #{conv_transpose_block.3} parent=5 // pred_fallthru
      _
  $region6: #{conv_transpose_block.3} parent=0 // loop_footer
    %s13 = sadd.s32 1, %s9
  $region7: #{conv_transpose_block.3} parent=0 // loop_footer_branch
    %8 = sbr.rel target = $region3
  $region8: #{conv_transpose_block.3} parent=0 // loop_exit
    _

// kernel: conv_transpose_block.2
$region0: #{conv_transpose_block.2}
  #allocation0 [shape = 'u32[]', space=smem, size = 0x4, offset = 0x4, fixed_abs, tag = 'smem constant byte address 0x4 - core index']
  #allocation1 [shape = 'u32[72,128]{1,0:T(1,128)}', space=vmem, size = 0x9000, scoped, tag = 'internal scratch']
  %s0 = inlined_call_operand.vmem [shape: bf16[2,18,18,4], index: 0, kind: input, shape index: {}]
  %s1 = inlined_call_operand.vmem [shape: bf16[9,4,32], index: 1, kind: input, shape index: {}]
  %s2 = inlined_call_operand.vmem [shape: bf16[512,32], index: 2, kind: output, shape index: {0}]
  %s3 = inlined_call_operand.vmem [shape: f32[2,2,32], index: 3, kind: output, shape index: {1}]
  %4 = xla_tuple %s2, %s3
  %s5 = sld [smem:[#allocation0]]
  $region49: #{conv_transpose_block.2} parent=0
    _
  %s7 = ssub.s32 1, %s5
  %s8 = scalar_select 0, %s7, %s5
  loop: start=0, step=1, limit=4
  $region2: #{conv_transpose_block.2} parent=0 // loop_pre_header
    _
  $region3: #{conv_transpose_block.2} parent=0 // loop_header
    %s10 = sphi 0, %s14
    %p11 = scmp.ge.s32.totalorder %s10, 4
    %s20 = sphi 0, %s22
    %s23 = sphi 0, %s20
    %s24 = sphi 0, %s23
    %s40 = sphi 0, %s24
    %s44 = sphi 0, %s44
    %s46 = sphi 0, %s44
    %s47 = sphi 0, %s46
    %s61 = sphi 0, %s47
    %s67 = sphi 0, %s69
    %s70 = sphi 0, %s67
    %s71 = sphi 0, %s70
    %s87 = sphi 0, %s71
    %s93 = sphi 0, %s95
    %s96 = sphi 0, %s93
    %s97 = sphi 0, %s96
    %s113 = sphi 0, %s97
  $region4: #{conv_transpose_block.2} parent=0 // loop_header_branch
    %13 = sbr.rel (%p11) target = $region8
  $region5: #{conv_transpose_block.2} parent=0 // loop_body
    %s15 = ssub.s32 %s10, 1
    %s16 = ssub.s32 %s10, 2
    %s17 = sadd.s32 %s10, 1
    %s18 = ssub.s32 %s10, %s17
    %p19 = scmp.eq.s32.totalorder %s18, 0
    %s21 = sadd.s32 %s20, 1
    %s22 = scalar_select %p19, %s20, %s21
    %p25 = pneg %p19
    %p26 = scmp.eq.s32.totalorder %s10, 1
    %p27 = por %p25, %p26
    %p28 = scmp.ne.s32.totalorder %s20, %s23
    %p29 = scmp.eq.s32.totalorder %s10, 0
    %p30 = por %p28, %p29
    %p31 = scmp.ne.s32.totalorder %s20, %s23
    %p32 = scmp.eq.s32.totalorder %s15, 1
    %p33 = por %p31, %p32
    %p34 = scmp.ne.s32.totalorder %s23, %s24
    %p35 = scmp.eq.s32.totalorder %s15, 0
    %p36 = por %p34, %p35
    %p37 = scmp.ne.s32.totalorder %s23, %s24
    %p38 = scmp.eq.s32.totalorder %s16, 1
    %p39 = por %p37, %p38
    %p41 = scmp.ne.s32.totalorder %s24, %s40
    %p42 = scmp.eq.s32.totalorder %s16, 0
    %p43 = por %p41, %p42
    %s45 = sadd.s32 %s44, 1
    %p48 = scmp.eq.s32.totalorder %s10, 1
    %p49 = scmp.ne.s32.totalorder %s44, %s46
    %p50 = scmp.eq.s32.totalorder %s10, 0
    %p51 = por %p49, %p50
    %p52 = scmp.ne.s32.totalorder %s44, %s46
    %p53 = scmp.eq.s32.totalorder %s15, 1
    %p54 = por %p52, %p53
    %p55 = scmp.ne.s32.totalorder %s46, %s47
    %p56 = scmp.eq.s32.totalorder %s15, 0
    %p57 = por %p55, %p56
    %p58 = scmp.ne.s32.totalorder %s46, %s47
    %p59 = scmp.eq.s32.totalorder %s16, 1
    %p60 = por %p58, %p59
    %p62 = scmp.ne.s32.totalorder %s47, %s61
    %p63 = scmp.eq.s32.totalorder %s16, 0
    %p64 = por %p62, %p63
    %s65 = ssub.s32 %s10, %s17
    %p66 = scmp.eq.s32.totalorder %s65, 0
    %s68 = sadd.s32 %s67, 1
    %s69 = scalar_select %p66, %s67, %s68
    %p72 = pneg %p66
    %p73 = scmp.eq.s32.totalorder %s10, 1
    %p74 = por %p72, %p73
    %p75 = scmp.ne.s32.totalorder %s67, %s70
    %p76 = scmp.eq.s32.totalorder %s10, 0
    %p77 = por %p75, %p76
    %p78 = scmp.ne.s32.totalorder %s67, %s70
    %p79 = scmp.eq.s32.totalorder %s15, 1
    %p80 = por %p78, %p79
    %p81 = scmp.ne.s32.totalorder %s70, %s71
    %p82 = scmp.eq.s32.totalorder %s15, 0
    %p83 = por %p81, %p82
    %p84 = scmp.ne.s32.totalorder %s70, %s71
    %p85 = scmp.eq.s32.totalorder %s16, 1
    %p86 = por %p84, %p85
    %p88 = scmp.ne.s32.totalorder %s71, %s87
    %p89 = scmp.eq.s32.totalorder %s16, 0
    %p90 = por %p88, %p89
    %s91 = ssub.s32 %s10, %s17
    %p92 = scmp.eq.s32.totalorder %s91, 0
    %s94 = sadd.s32 %s93, 1
    %s95 = scalar_select %p92, %s93, %s94
    %p98 = pneg %p92
    %p99 = scmp.eq.s32.totalorder %s10, 1
    %p100 = por %p98, %p99
    %p101 = scmp.ne.s32.totalorder %s93, %s96
    %p102 = scmp.eq.s32.totalorder %s10, 0
    %p103 = por %p101, %p102
    %p104 = scmp.ne.s32.totalorder %s93, %s96
    %p105 = scmp.eq.s32.totalorder %s15, 1
    %p106 = por %p104, %p105
    %p107 = scmp.ne.s32.totalorder %s96, %s97
    %p108 = scmp.eq.s32.totalorder %s15, 0
    %p109 = por %p107, %p108
    %p110 = scmp.ne.s32.totalorder %s96, %s97
    %p111 = scmp.eq.s32.totalorder %s16, 1
    %p112 = por %p110, %p111
    %p114 = scmp.ne.s32.totalorder %s97, %s113
    %p115 = scmp.eq.s32.totalorder %s16, 0
    %p116 = por %p114, %p115
    %p117 = scmp.le.s32.totalorder 1, %s10
    %p118 = scmp.lt.s32.totalorder %s10, 3
    %p119 = pnand %p117, %p118
    %p120 = pneg %p119
    // Predicated region
    $region9: #{conv_transpose_block.2} parent=5 // pred_check
      _
    $region10: #{conv_transpose_block.2} parent=5 // pred_check_branch
      %122 = sbr.rel (%p119) target = $region12
    $region11: #{conv_transpose_block.2} parent=5 // pred_region
      %s123 = ssub.s32 %s10, 1
      // Predicated region
      $region13: #{conv_transpose_block.2} parent=11 // pred_check
        %p124 = pneg %p57
      $region14: #{conv_transpose_block.2} parent=11 // pred_check_branch
        %126 = sbr.rel (%p124) target = $region16
      $region15: #{conv_transpose_block.2} parent=11 // pred_region
        _
      $region16: #{conv_transpose_block.2} parent=11 // pred_fallthru
        _
    $region12: #{conv_transpose_block.2} parent=5 // pred_fallthru
      _
    %p127 = scmp.lt.s32.totalorder %s10, 2
    // Predicated region
    $region17: #{conv_transpose_block.2} parent=5 // pred_check
      %p128 = pneg %p127
    $region18: #{conv_transpose_block.2} parent=5 // pred_check_branch
      %130 = sbr.rel (%p128) target = $region20
    $region19: #{conv_transpose_block.2} parent=5 // pred_region
      // Predicated region
      $region21: #{conv_transpose_block.2} parent=19 // pred_check
        %p131 = pneg %p30
      $region22: #{conv_transpose_block.2} parent=19 // pred_check_branch
        %133 = sbr.rel (%p131) target = $region24
      $region23: #{conv_transpose_block.2} parent=19 // pred_region
        %p134 = scmp.lt.s32.totalorder %s10, 1
        %s135 = scalar_select %p134, %s10, 1
        %s136 = smul.addr %s135, 54
        %s137 = smul.addr %s136, 4
        %s138 = scalar_lea.vmem %s0, %s137
      $region24: #{conv_transpose_block.2} parent=19 // pred_fallthru
        _
    $region20: #{conv_transpose_block.2} parent=5 // pred_fallthru
      _
    %p139 = scmp.le.s32.totalorder 1, %s10
    %p140 = scmp.lt.s32.totalorder %s10, 3
    %p141 = pnand %p139, %p140
    %p142 = pneg %p141
    // Predicated region
    $region25: #{conv_transpose_block.2} parent=5 // pred_check
      _
    $region26: #{conv_transpose_block.2} parent=5 // pred_check_branch
      %144 = sbr.rel (%p141) target = $region28
    $region27: #{conv_transpose_block.2} parent=5 // pred_region
      %s145 = ssub.s32 %s10, 1
      %p146 = scmp.lt.s32.totalorder %s15, 1
      %s147 = scalar_select %p146, %s15, 1
      %s148 = smul.addr %s147, 54
      %s149 = smul.addr %s148, 4
      %s150 = scalar_lea.vmem %s0, %s149
      %p151 = pneg %p36
      %p152 = pneg %p33
      %p153 = pneg %p57
      %p154 = pneg %p54
      %p155 = pneg %p83
      %p156 = pneg %p80
      %s157 = smul.u32 32, %s15
      %p158 = scmp.lt.s32.totalorder %s157, 63
      %s159 = scalar_select %p158, %s157, 63
      %s160 = smul.addr %s159, 4
      %s161 = scalar_lea.vmem %s2, %s160
      %p162 = pneg %p109
      %p163 = pneg %p106
      %p164 = scmp.lt.s32.totalorder %s15, 1
      %s165 = scalar_select %p164, %s15, 1
      %s166 = smul.addr %s165, 2
      %s167 = scalar_lea.vmem %s3, %s166
      %p168 = scmp.lt.s32.totalorder %s15, 1
      %s169 = scalar_select %p168, %s15, 1
      %s170 = smul.addr %s169, 54
      %s171 = smul.addr %s170, 4
      %s172 = scalar_lea.vmem %s0, %s171
      %s173 = smul.u32 32, %s15
      %p174 = scmp.lt.s32.totalorder %s173, 63
      %s175 = scalar_select %p174, %s173, 63
      %s176 = smul.addr %s175, 4
      %s177 = scalar_lea.vmem %s2, %s176
      %s178 = smul.u32 32, %s15
      %p179 = scmp.lt.s32.totalorder %s15, 1
      %s180 = scalar_select %p179, %s15, 1
      %s181 = smul.addr %s180, 2
      %s182 = scalar_lea.vmem %s3, %s181
      %v184 = vld [vmem:[%s172] sm:$0xf]
      %v185 = vld [vmem:[%s172 + $0x4] sm:$0xf]
      %v186 = vld [vmem:[%s172 + $0xc] sm:$0xf]
      %v187 = vld [vmem:[%s172 + $0x10] sm:$0xf]
      %v188 = vld [vmem:[%s172 + $0x18] sm:$0xf]
      %v189 = vld [vmem:[%s172 + $0x1c] sm:$0xf]
      %v190 = vld [vmem:[%s172 + $0x24] sm:$0xf]
      %v191 = vld [vmem:[%s172 + $0x28] sm:$0xf]
      %v192 = vld [vmem:[%s172 + $0x30] sm:$0xf]
      %v193 = vld [vmem:[%s172 + $0x34] sm:$0xf]
      %v194 = vld [vmem:[%s172 + $0x3c] sm:$0xf]
      %v195 = vld [vmem:[%s172 + $0x40] sm:$0xf]
      %v196 = vld [vmem:[%s172 + $0x48] sm:$0xf]
      %v197 = vld [vmem:[%s172 + $0x4c] sm:$0xf]
      %v198 = vld [vmem:[%s172 + $0x54] sm:$0xf]
      %v199 = vld [vmem:[%s172 + $0x58] sm:$0xf]
      %v200 = vld [vmem:[%s172 + $0x60] sm:$0xf]
      %v201 = vld [vmem:[%s172 + $0x64] sm:$0xf]
      %v202 = vld [vmem:[%s172 + $0x6c] sm:$0xf]
      %v203 = vld [vmem:[%s172 + $0x70] sm:$0xf]
      %v204 = vld [vmem:[%s172 + $0x78] sm:$0xf]
      %v205 = vld [vmem:[%s172 + $0x7c] sm:$0xf]
      %v206 = vld [vmem:[%s172 + $0x84] sm:$0xf]
      %v207 = vld [vmem:[%s172 + $0x88] sm:$0xf]
      %v208 = vld [vmem:[%s172 + $0x90] sm:$0xf]
      %v209 = vld [vmem:[%s172 + $0x94] sm:$0xf]
      %v210 = vld [vmem:[%s172 + $0x9c] sm:$0xf]
      %v211 = vld [vmem:[%s172 + $0xa0] sm:$0xf]
      %v212 = vld [vmem:[%s172 + $0xa8] sm:$0xf]
      %v213 = vld [vmem:[%s172 + $0xac] sm:$0xf]
      %v214 = vld [vmem:[%s172 + $0xb4] sm:$0xf]
      %v215 = vld [vmem:[%s172 + $0xb8] sm:$0xf]
      %v216 = vld [vmem:[%s1] sm:$0x3]
      %v217 = vld [vmem:[%s172 + $0x8] sm:$0x1]
      %v218 = vld [vmem:[%s172 + $0x14] sm:$0x1]
      %v219 = vld [vmem:[%s172 + $0x20] sm:$0x1]
      %v220 = vld [vmem:[%s172 + $0x2c] sm:$0x1]
      %v221 = vld [vmem:[%s172 + $0x38] sm:$0x1]
      %v222 = vld [vmem:[%s172 + $0x44] sm:$0x1]
      %v223 = vld [vmem:[%s172 + $0x50] sm:$0x1]
      %v224 = vld [vmem:[%s172 + $0x5c] sm:$0x1]
      %v225 = vld [vmem:[%s172 + $0x68] sm:$0x1]
      %v226 = vld [vmem:[%s172 + $0x74] sm:$0x1]
      %v227 = vld [vmem:[%s172 + $0x80] sm:$0x1]
      %v228 = vld [vmem:[%s172 + $0x8c] sm:$0x1]
      %v229 = vld [vmem:[%s172 + $0x98] sm:$0x1]
      %v230 = vld [vmem:[%s172 + $0xa4] sm:$0x1]
      %v231 = vld [vmem:[%s172 + $0xb0] sm:$0x1]
      %v232 = vld [vmem:[%s172 + $0xbc] sm:$0x1]
      %vm233 = vsmask.f32 3328
      %vm234 = vsmask.f32 7440
      %vm235 = vmor %vm233, %vm234
      %v237 = vshrl.u32 %v184, 16
      %v239 = vrot.slane %v237, 4
      %v240 = vshll.u32 %v184, 16
      %v242 = vrot.slane %v240, 5
      %v243 = vor.u32 %v239, %v242
      %v244 = vrot.slane %v243, 4
      %v246 = vshll.u32 %v185, 16
      %v248 = vrot.slane %v246, 5
      %v249 = vsel %vm235, %v244, %v248
      %v250 = vshrl.u32 %v185, 16
      %v252 = vrot.slane %v250, 4
      %v253 = vor.u32 %v252, %v248
      %v254 = vrot.slane %v253, 4
      %v256 = vshll.u32 %v217, 16
      %v258 = vrot.slane %v256, 5
      %v259 = vsel %vm235, %v254, %v258
      %v261 = vshrl.u32 %v186, 16
      %v263 = vrot.slane %v261, 4
      %v264 = vshll.u32 %v186, 16
      %v266 = vrot.slane %v264, 5
      %v267 = vor.u32 %v263, %v266
      %v268 = vrot.slane %v267, 4
      %v270 = vshll.u32 %v187, 16
      %v272 = vrot.slane %v270, 5
      %v273 = vsel %vm235, %v268, %v272
      %v274 = vshrl.u32 %v187, 16
      %v276 = vrot.slane %v274, 4
      %v277 = vor.u32 %v276, %v272
      %v278 = vrot.slane %v277, 4
      %v280 = vshll.u32 %v218, 16
      %v282 = vrot.slane %v280, 5
      %v283 = vsel %vm235, %v278, %v282
      %v285 = vshrl.u32 %v188, 16
      %v287 = vrot.slane %v285, 4
      %v288 = vshll.u32 %v188, 16
      %v290 = vrot.slane %v288, 5
      %v291 = vor.u32 %v287, %v290
      %v292 = vrot.slane %v291, 4
      %v294 = vshll.u32 %v189, 16
      %v296 = vrot.slane %v294, 5
      %v297 = vsel %vm235, %v292, %v296
      %v298 = vshrl.u32 %v189, 16
      %v300 = vrot.slane %v298, 4
      %v301 = vor.u32 %v300, %v296
      %v302 = vrot.slane %v301, 4
      %v304 = vshll.u32 %v219, 16
      %v306 = vrot.slane %v304, 5
      %v307 = vsel %vm235, %v302, %v306
      %v309 = vshrl.u32 %v190, 16
      %v311 = vrot.slane %v309, 4
      %v312 = vshll.u32 %v190, 16
      %v314 = vrot.slane %v312, 5
      %v315 = vor.u32 %v311, %v314
      %v316 = vrot.slane %v315, 4
      %v318 = vshll.u32 %v191, 16
      %v320 = vrot.slane %v318, 5
      %v321 = vsel %vm235, %v316, %v320
      %v322 = vshrl.u32 %v191, 16
      %v324 = vrot.slane %v322, 4
      %v325 = vor.u32 %v324, %v320
      %v326 = vrot.slane %v325, 4
      %v328 = vshll.u32 %v220, 16
      %v330 = vrot.slane %v328, 5
      %v331 = vsel %vm235, %v326, %v330
      %v333 = vshrl.u32 %v192, 16
      %v335 = vrot.slane %v333, 4
      %v336 = vshll.u32 %v192, 16
      %v338 = vrot.slane %v336, 5
      %v339 = vor.u32 %v335, %v338
      %v340 = vrot.slane %v339, 4
      %v342 = vshll.u32 %v193, 16
      %v344 = vrot.slane %v342, 5
      %v345 = vsel %vm235, %v340, %v344
      %v346 = vshrl.u32 %v193, 16
      %v348 = vrot.slane %v346, 4
      %v349 = vor.u32 %v348, %v344
      %v350 = vrot.slane %v349, 4
      %v352 = vshll.u32 %v221, 16
      %v354 = vrot.slane %v352, 5
      %v355 = vsel %vm235, %v350, %v354
      %v357 = vshrl.u32 %v194, 16
      %v359 = vrot.slane %v357, 4
      %v360 = vshll.u32 %v194, 16
      %v362 = vrot.slane %v360, 5
      %v363 = vor.u32 %v359, %v362
      %v364 = vrot.slane %v363, 4
      %v366 = vshll.u32 %v195, 16
      %v368 = vrot.slane %v366, 5
      %v369 = vsel %vm235, %v364, %v368
      %v370 = vshrl.u32 %v195, 16
      %v372 = vrot.slane %v370, 4
      %v373 = vor.u32 %v372, %v368
      %v374 = vrot.slane %v373, 4
      %v376 = vshll.u32 %v222, 16
      %v378 = vrot.slane %v376, 5
      %v379 = vsel %vm235, %v374, %v378
      %v381 = vshrl.u32 %v196, 16
      %v383 = vrot.slane %v381, 4
      %v384 = vshll.u32 %v196, 16
      %v386 = vrot.slane %v384, 5
      %v387 = vor.u32 %v383, %v386
      %v388 = vrot.slane %v387, 4
      %v390 = vshll.u32 %v197, 16
      %v392 = vrot.slane %v390, 5
      %v393 = vsel %vm235, %v388, %v392
      %v394 = vshrl.u32 %v197, 16
      %v396 = vrot.slane %v394, 4
      %v397 = vor.u32 %v396, %v392
      %v398 = vrot.slane %v397, 4
      %v400 = vshll.u32 %v223, 16
      %v402 = vrot.slane %v400, 5
      %v403 = vsel %vm235, %v398, %v402
      %v405 = vshrl.u32 %v198, 16
      %v407 = vrot.slane %v405, 4
      %v408 = vshll.u32 %v198, 16
      %v410 = vrot.slane %v408, 5
      %v411 = vor.u32 %v407, %v410
      %v412 = vrot.slane %v411, 4
      %v414 = vshll.u32 %v199, 16
      %v416 = vrot.slane %v414, 5
      %v417 = vsel %vm235, %v412, %v416
      %v418 = vshrl.u32 %v199, 16
      %v420 = vrot.slane %v418, 4
      %v421 = vor.u32 %v420, %v416
      %v422 = vrot.slane %v421, 4
      %v424 = vshll.u32 %v224, 16
      %v426 = vrot.slane %v424, 5
      %v427 = vsel %vm235, %v422, %v426
      %v429 = vshrl.u32 %v200, 16
      %v431 = vrot.slane %v429, 4
      %v432 = vshll.u32 %v200, 16
      %v434 = vrot.slane %v432, 5
      %v435 = vor.u32 %v431, %v434
      %v436 = vrot.slane %v435, 4
      %v438 = vshll.u32 %v201, 16
      %v440 = vrot.slane %v438, 5
      %v441 = vsel %vm235, %v436, %v440
      %v442 = vshrl.u32 %v201, 16
      %v444 = vrot.slane %v442, 4
      %v445 = vor.u32 %v444, %v440
      %v446 = vrot.slane %v445, 4
      %v448 = vshll.u32 %v225, 16
      %v450 = vrot.slane %v448, 5
      %v451 = vsel %vm235, %v446, %v450
      %v453 = vshrl.u32 %v202, 16
      %v455 = vrot.slane %v453, 4
      %v456 = vshll.u32 %v202, 16
      %v458 = vrot.slane %v456, 5
      %v459 = vor.u32 %v455, %v458
      %v460 = vrot.slane %v459, 4
      %v462 = vshll.u32 %v203, 16
      %v464 = vrot.slane %v462, 5
      %v465 = vsel %vm235, %v460, %v464
      %v466 = vshrl.u32 %v203, 16
      %v468 = vrot.slane %v466, 4
      %v469 = vor.u32 %v468, %v464
      %v470 = vrot.slane %v469, 4
      %v472 = vshll.u32 %v226, 16
      %v474 = vrot.slane %v472, 5
      %v475 = vsel %vm235, %v470, %v474
      %v477 = vshrl.u32 %v204, 16
      %v479 = vrot.slane %v477, 4
      %v480 = vshll.u32 %v204, 16
      %v482 = vrot.slane %v480, 5
      %v483 = vor.u32 %v479, %v482
      %v484 = vrot.slane %v483, 4
      %v486 = vshll.u32 %v205, 16
      %v488 = vrot.slane %v486, 5
      %v489 = vsel %vm235, %v484, %v488
      %v490 = vshrl.u32 %v205, 16
      %v492 = vrot.slane %v490, 4
      %v493 = vor.u32 %v492, %v488
      %v494 = vrot.slane %v493, 4
      %v496 = vshll.u32 %v227, 16
      %v498 = vrot.slane %v496, 5
      %v499 = vsel %vm235, %v494, %v498
      %v501 = vshrl.u32 %v206, 16
      %v503 = vrot.slane %v501, 4
      %v504 = vshll.u32 %v206, 16
      %v506 = vrot.slane %v504, 5
      %v507 = vor.u32 %v503, %v506
      %v508 = vrot.slane %v507, 4
      %v510 = vshll.u32 %v207, 16
      %v512 = vrot.slane %v510, 5
      %v513 = vsel %vm235, %v508, %v512
      %v514 = vshrl.u32 %v207, 16
      %v516 = vrot.slane %v514, 4
      %v517 = vor.u32 %v516, %v512
      %v518 = vrot.slane %v517, 4
      %v520 = vshll.u32 %v228, 16
      %v522 = vrot.slane %v520, 5
      %v523 = vsel %vm235, %v518, %v522
      %v525 = vshrl.u32 %v208, 16
      %v527 = vrot.slane %v525, 4
      %v528 = vshll.u32 %v208, 16
      %v530 = vrot.slane %v528, 5
      %v531 = vor.u32 %v527, %v530
      %v532 = vrot.slane %v531, 4
      %v534 = vshll.u32 %v209, 16
      %v536 = vrot.slane %v534, 5
      %v537 = vsel %vm235, %v532, %v536
      %v538 = vshrl.u32 %v209, 16
      %v540 = vrot.slane %v538, 4
      %v541 = vor.u32 %v540, %v536
      %v542 = vrot.slane %v541, 4
      %v544 = vshll.u32 %v229, 16
      %v546 = vrot.slane %v544, 5
      %v547 = vsel %vm235, %v542, %v546
      %v549 = vshrl.u32 %v210, 16
      %v551 = vrot.slane %v549, 4
      %v552 = vshll.u32 %v210, 16
      %v554 = vrot.slane %v552, 5
      %v555 = vor.u32 %v551, %v554
      %v556 = vrot.slane %v555, 4
      %v558 = vshll.u32 %v211, 16
      %v560 = vrot.slane %v558, 5
      %v561 = vsel %vm235, %v556, %v560
      %v562 = vshrl.u32 %v211, 16
      %v564 = vrot.slane %v562, 4
      %v565 = vor.u32 %v564, %v560
      %v566 = vrot.slane %v565, 4
      %v568 = vshll.u32 %v230, 16
      %v570 = vrot.slane %v568, 5
      %v571 = vsel %vm235, %v566, %v570
      %v573 = vshrl.u32 %v212, 16
      %v575 = vrot.slane %v573, 4
      %v576 = vshll.u32 %v212, 16
      %v578 = vrot.slane %v576, 5
      %v579 = vor.u32 %v575, %v578
      %v580 = vrot.slane %v579, 4
      %v582 = vshll.u32 %v213, 16
      %v584 = vrot.slane %v582, 5
      %v585 = vsel %vm235, %v580, %v584
      %v586 = vshrl.u32 %v213, 16
      %v588 = vrot.slane %v586, 4
      %v589 = vor.u32 %v588, %v584
      %v590 = vrot.slane %v589, 4
      %v592 = vshll.u32 %v231, 16
      %v594 = vrot.slane %v592, 5
      %v595 = vsel %vm235, %v590, %v594
      %v597 = vshrl.u32 %v214, 16
      %v599 = vrot.slane %v597, 4
      %v600 = vshll.u32 %v214, 16
      %v602 = vrot.slane %v600, 5
      %v603 = vor.u32 %v599, %v602
      %v604 = vrot.slane %v603, 4
      %v606 = vshll.u32 %v215, 16
      %v608 = vrot.slane %v606, 5
      %v609 = vsel %vm235, %v604, %v608
      %v610 = vshrl.u32 %v215, 16
      %v612 = vrot.slane %v610, 4
      %v613 = vor.u32 %v612, %v608
      %v614 = vrot.slane %v613, 4
      %v616 = vshll.u32 %v232, 16
      %v618 = vrot.slane %v616, 5
      %v619 = vsel %vm235, %v614, %v618
      %s620 = scalar_lea.vmem %s1, 2
      %v621 = vld [vmem:[%s620] sm:$0x3]
      %v622 = vunpack.c.l.b16 %v249
      %v623 = vunpack.c.l.b16 %v259
      %v624 = vunpack.c.l.b16 %v273
      %v625 = vunpack.c.l.b16 %v283
      %v626 = vunpack.c.l.b16 %v297
      %v627 = vunpack.c.l.b16 %v307
      %v628 = vunpack.c.l.b16 %v321
      %v629 = vunpack.c.l.b16 %v331
      %v630 = vunpack.c.l.b16 %v345
      %v631 = vunpack.c.l.b16 %v355
      %v632 = vunpack.c.l.b16 %v369
      %v633 = vunpack.c.l.b16 %v379
      %v634 = vunpack.c.l.b16 %v393
      %v635 = vunpack.c.l.b16 %v403
      %v636 = vunpack.c.l.b16 %v417
      %v637 = vunpack.c.l.b16 %v427
      %v638 = vunpack.c.l.b16 %v441
      %v639 = vunpack.c.l.b16 %v451
      %v640 = vunpack.c.l.b16 %v465
      %v641 = vunpack.c.l.b16 %v475
      %v642 = vunpack.c.l.b16 %v489
      %v643 = vunpack.c.l.b16 %v499
      %v644 = vunpack.c.l.b16 %v513
      %v645 = vunpack.c.l.b16 %v523
      %v646 = vunpack.c.l.b16 %v537
      %v647 = vunpack.c.l.b16 %v547
      %v648 = vunpack.c.l.b16 %v561
      %v649 = vunpack.c.l.b16 %v571
      %v650 = vunpack.c.l.b16 %v585
      %v651 = vunpack.c.l.b16 %v595
      %v652 = vunpack.c.l.b16 %v609
      %v653 = vunpack.c.l.b16 %v619
      %v654 = vpack.c.b16 %v623, %v622
      %v655 = vpack.c.b16 %v625, %v624
      %v656 = vpack.c.b16 %v627, %v626
      %v657 = vpack.c.b16 %v629, %v628
      %v658 = vpack.c.b16 %v631, %v630
      %v659 = vpack.c.b16 %v633, %v632
      %v660 = vpack.c.b16 %v635, %v634
      %v661 = vpack.c.b16 %v637, %v636
      %v662 = vpack.c.b16 %v639, %v638
      %v663 = vpack.c.b16 %v641, %v640
      %v664 = vpack.c.b16 %v643, %v642
      %v665 = vpack.c.b16 %v645, %v644
      %v666 = vpack.c.b16 %v647, %v646
      %v667 = vpack.c.b16 %v649, %v648
      %v668 = vpack.c.b16 %v651, %v650
      %v669 = vpack.c.b16 %v653, %v652
      %vm670 = vcmask 31744
      %v672 = vsel %vm670, %v654, 0
      %v675 = vsel %vm670, %v655, 0
      %v678 = vsel %vm670, %v656, 0
      %v681 = vsel %vm670, %v657, 0
      %v684 = vsel %vm670, %v658, 0
      %v687 = vsel %vm670, %v659, 0
      %v690 = vsel %vm670, %v660, 0
      %v693 = vsel %vm670, %v661, 0
      %v696 = vsel %vm670, %v662, 0
      %v699 = vsel %vm670, %v663, 0
      %v702 = vsel %vm670, %v664, 0
      %v705 = vsel %vm670, %v665, 0
      %v708 = vsel %vm670, %v666, 0
      %v711 = vsel %vm670, %v667, 0
      %v714 = vsel %vm670, %v668, 0
      %v717 = vsel %vm670, %v669, 0
      %vm719 = vcmask 1041408
      %v721 = vsel %vm719, %v621, 0
      %723 = vmatpush.bf16.msra.mxu0 0
      %724 = vmatpush.bf16.msra.mxu0 0
      %725 = vmatpush.bf16.msra.mxu0 0
      %726 = vmatpush.bf16.msra.mxu0 0
      %727 = vmatpush.bf16.msra.mxu0 0
      %728 = vmatpush.bf16.msra.mxu0 0
      %729 = vmatpush.bf16.msra.mxu0 0
      %730 = vmatpush.bf16.msra.mxu0 %v721
      %731 = vmatmul.bf16.gmra.mxu0 %v672
      %v732 = vpop.f32.mrf.mxu0
      %v733 = vadd.f32 0.0, %v732
      %v734 = vpop.f32.mrf.mxu0
      %v735 = vadd.f32 0.0, %v734
      %736 = vmatmul.bf16.gmra.mxu0 %v675
      %v737 = vpop.f32.mrf.mxu0
      %v738 = vadd.f32 0.0, %v737
      %v739 = vpop.f32.mrf.mxu0
      %v740 = vadd.f32 0.0, %v739
      %741 = vmatmul.bf16.gmra.mxu0 %v678
      %v742 = vpop.f32.mrf.mxu0
      %v743 = vadd.f32 0.0, %v742
      %v744 = vpop.f32.mrf.mxu0
      %v745 = vadd.f32 0.0, %v744
      %746 = vmatmul.bf16.gmra.mxu0 %v681
      %v747 = vpop.f32.mrf.mxu0
      %v748 = vadd.f32 0.0, %v747
      %v749 = vpop.f32.mrf.mxu0
      %v750 = vadd.f32 0.0, %v749
      %751 = vmatmul.bf16.gmra.mxu0 %v684
      %v752 = vpop.f32.mrf.mxu0
      %v753 = vadd.f32 0.0, %v752
      %v754 = vpop.f32.mrf.mxu0
      %v755 = vadd.f32 0.0, %v754
      %756 = vmatmul.bf16.gmra.mxu0 %v687
      %v757 = vpop.f32.mrf.mxu0
      %v758 = vadd.f32 0.0, %v757
      %v759 = vpop.f32.mrf.mxu0
      %v760 = vadd.f32 0.0, %v759
      %761 = vmatmul.bf16.gmra.mxu0 %v690
      %v762 = vpop.f32.mrf.mxu0
      %v763 = vadd.f32 0.0, %v762
      %v764 = vpop.f32.mrf.mxu0
      %v765 = vadd.f32 0.0, %v764
      %766 = vmatmul.bf16.gmra.mxu0 %v693
      %v767 = vpop.f32.mrf.mxu0
      %v768 = vadd.f32 0.0, %v767
      %v769 = vpop.f32.mrf.mxu0
      %v770 = vadd.f32 0.0, %v769
      %771 = vmatmul.bf16.gmra.mxu0 %v696
      %v772 = vpop.f32.mrf.mxu0
      %v773 = vadd.f32 0.0, %v772
      %v774 = vpop.f32.mrf.mxu0
      %v775 = vadd.f32 0.0, %v774
      %776 = vmatmul.bf16.gmra.mxu0 %v699
      %v777 = vpop.f32.mrf.mxu0
      %v778 = vadd.f32 0.0, %v777
      %v779 = vpop.f32.mrf.mxu0
      %v780 = vadd.f32 0.0, %v779
      %781 = vmatmul.bf16.gmra.mxu0 %v702
      %v782 = vpop.f32.mrf.mxu0
      %v783 = vadd.f32 0.0, %v782
      %v784 = vpop.f32.mrf.mxu0
      %v785 = vadd.f32 0.0, %v784
      %786 = vmatmul.bf16.gmra.mxu0 %v705
      %v787 = vpop.f32.mrf.mxu0
      %v788 = vadd.f32 0.0, %v787
      %v789 = vpop.f32.mrf.mxu0
      %v790 = vadd.f32 0.0, %v789
      %791 = vmatmul.bf16.gmra.mxu0 %v708
      %v792 = vpop.f32.mrf.mxu0
      %v793 = vadd.f32 0.0, %v792
      %v794 = vpop.f32.mrf.mxu0
      %v795 = vadd.f32 0.0, %v794
      %796 = vmatmul.bf16.gmra.mxu0 %v711
      %v797 = vpop.f32.mrf.mxu0
      %v798 = vadd.f32 0.0, %v797
      %v799 = vpop.f32.mrf.mxu0
      %v800 = vadd.f32 0.0, %v799
      %801 = vmatmul.bf16.gmra.mxu0 %v714
      %v802 = vpop.f32.mrf.mxu0
      %v803 = vadd.f32 0.0, %v802
      %v804 = vpop.f32.mrf.mxu0
      %v805 = vadd.f32 0.0, %v804
      %806 = vmatmul.bf16.gmra.mxu0 %v717
      %v807 = vpop.f32.mrf.mxu0
      %v808 = vadd.f32 0.0, %v807
      %v809 = vpop.f32.mrf.mxu0
      %v810 = vadd.f32 0.0, %v809
      %811 = vdwg.mxu0
      %v844 = vunpack.c.l.b16 %v184
      %v845 = vunpack.c.l.b16 %v185
      %v846 = vunpack.c.l.b16 %v186
      %v847 = vunpack.c.l.b16 %v187
      %v848 = vunpack.c.l.b16 %v188
      %v849 = vunpack.c.l.b16 %v189
      %v850 = vunpack.c.l.b16 %v190
      %v851 = vunpack.c.l.b16 %v191
      %v852 = vunpack.c.l.b16 %v192
      %v853 = vunpack.c.l.b16 %v193
      %v854 = vunpack.c.l.b16 %v194
      %v855 = vunpack.c.l.b16 %v195
      %v856 = vunpack.c.l.b16 %v196
      %v857 = vunpack.c.l.b16 %v197
      %v858 = vunpack.c.l.b16 %v198
      %v859 = vunpack.c.l.b16 %v199
      %v860 = vunpack.c.l.b16 %v200
      %v861 = vunpack.c.l.b16 %v201
      %v862 = vunpack.c.l.b16 %v202
      %v863 = vunpack.c.l.b16 %v203
      %v864 = vunpack.c.l.b16 %v204
      %v865 = vunpack.c.l.b16 %v205
      %v866 = vunpack.c.l.b16 %v206
      %v867 = vunpack.c.l.b16 %v207
      %v868 = vunpack.c.l.b16 %v208
      %v869 = vunpack.c.l.b16 %v209
      %v870 = vunpack.c.l.b16 %v210
      %v871 = vunpack.c.l.b16 %v211
      %v872 = vunpack.c.l.b16 %v212
      %v873 = vunpack.c.l.b16 %v213
      %v874 = vunpack.c.l.b16 %v214
      %v875 = vunpack.c.l.b16 %v215
      %v876 = vpack.c.b16 %v845, %v844
      %v877 = vpack.c.b16 %v847, %v846
      %v878 = vpack.c.b16 %v849, %v848
      %v879 = vpack.c.b16 %v851, %v850
      %v880 = vpack.c.b16 %v853, %v852
      %v881 = vpack.c.b16 %v855, %v854
      %v882 = vpack.c.b16 %v857, %v856
      %v883 = vpack.c.b16 %v859, %v858
      %v884 = vpack.c.b16 %v861, %v860
      %v885 = vpack.c.b16 %v863, %v862
      %v886 = vpack.c.b16 %v865, %v864
      %v887 = vpack.c.b16 %v867, %v866
      %v888 = vpack.c.b16 %v869, %v868
      %v889 = vpack.c.b16 %v871, %v870
      %v890 = vpack.c.b16 %v873, %v872
      %v891 = vpack.c.b16 %v875, %v874
      %v893 = vsel %vm670, %v876, 0
      %v896 = vsel %vm670, %v877, 0
      %v899 = vsel %vm670, %v878, 0
      %v902 = vsel %vm670, %v879, 0
      %v905 = vsel %vm670, %v880, 0
      %v908 = vsel %vm670, %v881, 0
      %v911 = vsel %vm670, %v882, 0
      %v914 = vsel %vm670, %v883, 0
      %v917 = vsel %vm670, %v884, 0
      %v920 = vsel %vm670, %v885, 0
      %v923 = vsel %vm670, %v886, 0
      %v926 = vsel %vm670, %v887, 0
      %v929 = vsel %vm670, %v888, 0
      %v932 = vsel %vm670, %v889, 0
      %v935 = vsel %vm670, %v890, 0
      %v938 = vsel %vm670, %v891, 0
      %v941 = vsel %vm719, %v216, 0
      %943 = vmatpush.bf16.msra.mxu0 0
      %944 = vmatpush.bf16.msra.mxu0 0
      %945 = vmatpush.bf16.msra.mxu0 0
      %946 = vmatpush.bf16.msra.mxu0 0
      %947 = vmatpush.bf16.msra.mxu0 0
      %948 = vmatpush.bf16.msra.mxu0 0
      %949 = vmatpush.bf16.msra.mxu0 0
      %950 = vmatpush.bf16.msra.mxu0 %v941
      %951 = vmatmul.bf16.gmra.mxu0 %v893
      %v952 = vpop.f32.mrf.mxu0
      %v953 = vadd.f32 %v733, %v952
      %v954 = vpop.f32.mrf.mxu0
      %v955 = vadd.f32 %v735, %v954
      %956 = vmatmul.bf16.gmra.mxu0 %v896
      %v957 = vpop.f32.mrf.mxu0
      %v958 = vadd.f32 %v738, %v957
      %v959 = vpop.f32.mrf.mxu0
      %v960 = vadd.f32 %v740, %v959
      %961 = vmatmul.bf16.gmra.mxu0 %v899
      %v962 = vpop.f32.mrf.mxu0
      %v963 = vadd.f32 %v743, %v962
      %v964 = vpop.f32.mrf.mxu0
      %v965 = vadd.f32 %v745, %v964
      %966 = vmatmul.bf16.gmra.mxu0 %v902
      %v967 = vpop.f32.mrf.mxu0
      %v968 = vadd.f32 %v748, %v967
      %v969 = vpop.f32.mrf.mxu0
      %v970 = vadd.f32 %v750, %v969
      %971 = vmatmul.bf16.gmra.mxu0 %v905
      %v972 = vpop.f32.mrf.mxu0
      %v973 = vadd.f32 %v753, %v972
      %v974 = vpop.f32.mrf.mxu0
      %v975 = vadd.f32 %v755, %v974
      %976 = vmatmul.bf16.gmra.mxu0 %v908
      %v977 = vpop.f32.mrf.mxu0
      %v978 = vadd.f32 %v758, %v977
      %v979 = vpop.f32.mrf.mxu0
      %v980 = vadd.f32 %v760, %v979
      %981 = vmatmul.bf16.gmra.mxu0 %v911
      %v982 = vpop.f32.mrf.mxu0
      %v983 = vadd.f32 %v763, %v982
      %v984 = vpop.f32.mrf.mxu0
      %v985 = vadd.f32 %v765, %v984
      %986 = vmatmul.bf16.gmra.mxu0 %v914
      %v987 = vpop.f32.mrf.mxu0
      %v988 = vadd.f32 %v768, %v987
      %v989 = vpop.f32.mrf.mxu0
      %v990 = vadd.f32 %v770, %v989
      %991 = vmatmul.bf16.gmra.mxu0 %v917
      %v992 = vpop.f32.mrf.mxu0
      %v993 = vadd.f32 %v773, %v992
      %v994 = vpop.f32.mrf.mxu0
      %v995 = vadd.f32 %v775, %v994
      %996 = vmatmul.bf16.gmra.mxu0 %v920
      %v997 = vpop.f32.mrf.mxu0
      %v998 = vadd.f32 %v778, %v997
      %v999 = vpop.f32.mrf.mxu0
      %v1000 = vadd.f32 %v780, %v999
      %1001 = vmatmul.bf16.gmra.mxu0 %v923
      %v1002 = vpop.f32.mrf.mxu0
      %v1003 = vadd.f32 %v783, %v1002
      %v1004 = vpop.f32.mrf.mxu0
      %v1005 = vadd.f32 %v785, %v1004
      %1006 = vmatmul.bf16.gmra.mxu0 %v926
      %v1007 = vpop.f32.mrf.mxu0
      %v1008 = vadd.f32 %v788, %v1007
      %v1009 = vpop.f32.mrf.mxu0
      %v1010 = vadd.f32 %v790, %v1009
      %1011 = vmatmul.bf16.gmra.mxu0 %v929
      %v1012 = vpop.f32.mrf.mxu0
      %v1013 = vadd.f32 %v793, %v1012
      %v1014 = vpop.f32.mrf.mxu0
      %v1015 = vadd.f32 %v795, %v1014
      %1016 = vmatmul.bf16.gmra.mxu0 %v932
      %v1017 = vpop.f32.mrf.mxu0
      %v1018 = vadd.f32 %v798, %v1017
      %v1019 = vpop.f32.mrf.mxu0
      %v1020 = vadd.f32 %v800, %v1019
      %1021 = vmatmul.bf16.gmra.mxu0 %v935
      %v1022 = vpop.f32.mrf.mxu0
      %v1023 = vadd.f32 %v803, %v1022
      %v1024 = vpop.f32.mrf.mxu0
      %v1025 = vadd.f32 %v805, %v1024
      %1026 = vmatmul.bf16.gmra.mxu0 %v938
      %v1027 = vpop.f32.mrf.mxu0
      %v1028 = vadd.f32 %v808, %v1027
      %v1029 = vpop.f32.mrf.mxu0
      %v1030 = vadd.f32 %v810, %v1029
      %1031 = vdwg.mxu0
      %v1032 = vld [vmem:[%s172] sm:$0xe]
      %v1033 = vld [vmem:[%s172 + $0xc] sm:$0xe]
      %v1034 = vld [vmem:[%s172 + $0x18] sm:$0xe]
      %v1035 = vld [vmem:[%s172 + $0x24] sm:$0xe]
      %v1036 = vld [vmem:[%s172 + $0x30] sm:$0xe]
      %v1037 = vld [vmem:[%s172 + $0x3c] sm:$0xe]
      %v1038 = vld [vmem:[%s172 + $0x48] sm:$0xe]
      %v1039 = vld [vmem:[%s172 + $0x54] sm:$0xe]
      %v1040 = vld [vmem:[%s172 + $0x60] sm:$0xe]
      %v1041 = vld [vmem:[%s172 + $0x6c] sm:$0xe]
      %v1042 = vld [vmem:[%s172 + $0x78] sm:$0xe]
      %v1043 = vld [vmem:[%s172 + $0x84] sm:$0xe]
      %v1044 = vld [vmem:[%s172 + $0x90] sm:$0xe]
      %v1045 = vld [vmem:[%s172 + $0x9c] sm:$0xe]
      %v1046 = vld [vmem:[%s172 + $0xa8] sm:$0xe]
      %v1047 = vld [vmem:[%s172 + $0xb4] sm:$0xe]
      %vm1080 = vcmask 1042432
      %vm1081 = vcmask 1046532
      %vm1082 = vmor %vm1080, %vm1081
      %v1083 = vrot.slane %v1032, 5
      %v1084 = vrot.slane %v1083, 4
      %v1085 = vrot.slane %v185, 5
      %v1086 = vsel %vm1082, %v1084, %v1085
      %v1087 = vrot.slane %v1085, 4
      %v1088 = vrot.slane %v217, 5
      %v1089 = vsel %vm1082, %v1087, %v1088
      %v1090 = vrot.slane %v1033, 5
      %v1091 = vrot.slane %v1090, 4
      %v1092 = vrot.slane %v187, 5
      %v1093 = vsel %vm1082, %v1091, %v1092
      %v1094 = vrot.slane %v1092, 4
      %v1095 = vrot.slane %v218, 5
      %v1096 = vsel %vm1082, %v1094, %v1095
      %v1097 = vrot.slane %v1034, 5
      %v1098 = vrot.slane %v1097, 4
      %v1099 = vrot.slane %v189, 5
      %v1100 = vsel %vm1082, %v1098, %v1099
      %v1101 = vrot.slane %v1099, 4
      %v1102 = vrot.slane %v219, 5
      %v1103 = vsel %vm1082, %v1101, %v1102
      %v1104 = vrot.slane %v1035, 5
      %v1105 = vrot.slane %v1104, 4
      %v1106 = vrot.slane %v191, 5
      %v1107 = vsel %vm1082, %v1105, %v1106
      %v1108 = vrot.slane %v1106, 4
      %v1109 = vrot.slane %v220, 5
      %v1110 = vsel %vm1082, %v1108, %v1109
      %v1111 = vrot.slane %v1036, 5
      %v1112 = vrot.slane %v1111, 4
      %v1113 = vrot.slane %v193, 5
      %v1114 = vsel %vm1082, %v1112, %v1113
      %v1115 = vrot.slane %v1113, 4
      %v1116 = vrot.slane %v221, 5
      %v1117 = vsel %vm1082, %v1115, %v1116
      %v1118 = vrot.slane %v1037, 5
      %v1119 = vrot.slane %v1118, 4
      %v1120 = vrot.slane %v195, 5
      %v1121 = vsel %vm1082, %v1119, %v1120
      %v1122 = vrot.slane %v1120, 4
      %v1123 = vrot.slane %v222, 5
      %v1124 = vsel %vm1082, %v1122, %v1123
      %v1125 = vrot.slane %v1038, 5
      %v1126 = vrot.slane %v1125, 4
      %v1127 = vrot.slane %v197, 5
      %v1128 = vsel %vm1082, %v1126, %v1127
      %v1129 = vrot.slane %v1127, 4
      %v1130 = vrot.slane %v223, 5
      %v1131 = vsel %vm1082, %v1129, %v1130
      %v1132 = vrot.slane %v1039, 5
      %v1133 = vrot.slane %v1132, 4
      %v1134 = vrot.slane %v199, 5
      %v1135 = vsel %vm1082, %v1133, %v1134
      %v1136 = vrot.slane %v1134, 4
      %v1137 = vrot.slane %v224, 5
      %v1138 = vsel %vm1082, %v1136, %v1137
      %v1139 = vrot.slane %v1040, 5
      %v1140 = vrot.slane %v1139, 4
      %v1141 = vrot.slane %v201, 5
      %v1142 = vsel %vm1082, %v1140, %v1141
      %v1143 = vrot.slane %v1141, 4
      %v1144 = vrot.slane %v225, 5
      %v1145 = vsel %vm1082, %v1143, %v1144
      %v1146 = vrot.slane %v1041, 5
      %v1147 = vrot.slane %v1146, 4
      %v1148 = vrot.slane %v203, 5
      %v1149 = vsel %vm1082, %v1147, %v1148
      %v1150 = vrot.slane %v1148, 4
      %v1151 = vrot.slane %v226, 5
      %v1152 = vsel %vm1082, %v1150, %v1151
      %v1153 = vrot.slane %v1042, 5
      %v1154 = vrot.slane %v1153, 4
      %v1155 = vrot.slane %v205, 5
      %v1156 = vsel %vm1082, %v1154, %v1155
      %v1157 = vrot.slane %v1155, 4
      %v1158 = vrot.slane %v227, 5
      %v1159 = vsel %vm1082, %v1157, %v1158
      %v1160 = vrot.slane %v1043, 5
      %v1161 = vrot.slane %v1160, 4
      %v1162 = vrot.slane %v207, 5
      %v1163 = vsel %vm1082, %v1161, %v1162
      %v1164 = vrot.slane %v1162, 4
      %v1165 = vrot.slane %v228, 5
      %v1166 = vsel %vm1082, %v1164, %v1165
      %v1167 = vrot.slane %v1044, 5
      %v1168 = vrot.slane %v1167, 4
      %v1169 = vrot.slane %v209, 5
      %v1170 = vsel %vm1082, %v1168, %v1169
      %v1171 = vrot.slane %v1169, 4
      %v1172 = vrot.slane %v229, 5
      %v1173 = vsel %vm1082, %v1171, %v1172
      %v1174 = vrot.slane %v1045, 5
      %v1175 = vrot.slane %v1174, 4
      %v1176 = vrot.slane %v211, 5
      %v1177 = vsel %vm1082, %v1175, %v1176
      %v1178 = vrot.slane %v1176, 4
      %v1179 = vrot.slane %v230, 5
      %v1180 = vsel %vm1082, %v1178, %v1179
      %v1181 = vrot.slane %v1046, 5
      %v1182 = vrot.slane %v1181, 4
      %v1183 = vrot.slane %v213, 5
      %v1184 = vsel %vm1082, %v1182, %v1183
      %v1185 = vrot.slane %v1183, 4
      %v1186 = vrot.slane %v231, 5
      %v1187 = vsel %vm1082, %v1185, %v1186
      %v1188 = vrot.slane %v1047, 5
      %v1189 = vrot.slane %v1188, 4
      %v1190 = vrot.slane %v215, 5
      %v1191 = vsel %vm1082, %v1189, %v1190
      %v1192 = vrot.slane %v1190, 4
      %v1193 = vrot.slane %v232, 5
      %v1194 = vsel %vm1082, %v1192, %v1193
      %s1195 = scalar_lea.vmem %s1, 4
      %v1196 = vld [vmem:[%s1195] sm:$0x3]
      %v1197 = vunpack.c.l.b16 %v1086
      %v1198 = vunpack.c.l.b16 %v1089
      %v1199 = vunpack.c.l.b16 %v1093
      %v1200 = vunpack.c.l.b16 %v1096
      %v1201 = vunpack.c.l.b16 %v1100
      %v1202 = vunpack.c.l.b16 %v1103
      %v1203 = vunpack.c.l.b16 %v1107
      %v1204 = vunpack.c.l.b16 %v1110
      %v1205 = vunpack.c.l.b16 %v1114
      %v1206 = vunpack.c.l.b16 %v1117
      %v1207 = vunpack.c.l.b16 %v1121
      %v1208 = vunpack.c.l.b16 %v1124
      %v1209 = vunpack.c.l.b16 %v1128
      %v1210 = vunpack.c.l.b16 %v1131
      %v1211 = vunpack.c.l.b16 %v1135
      %v1212 = vunpack.c.l.b16 %v1138
      %v1213 = vunpack.c.l.b16 %v1142
      %v1214 = vunpack.c.l.b16 %v1145
      %v1215 = vunpack.c.l.b16 %v1149
      %v1216 = vunpack.c.l.b16 %v1152
      %v1217 = vunpack.c.l.b16 %v1156
      %v1218 = vunpack.c.l.b16 %v1159
      %v1219 = vunpack.c.l.b16 %v1163
      %v1220 = vunpack.c.l.b16 %v1166
      %v1221 = vunpack.c.l.b16 %v1170
      %v1222 = vunpack.c.l.b16 %v1173
      %v1223 = vunpack.c.l.b16 %v1177
      %v1224 = vunpack.c.l.b16 %v1180
      %v1225 = vunpack.c.l.b16 %v1184
      %v1226 = vunpack.c.l.b16 %v1187
      %v1227 = vunpack.c.l.b16 %v1191
      %v1228 = vunpack.c.l.b16 %v1194
      %v1229 = vpack.c.b16 %v1198, %v1197
      %v1230 = vpack.c.b16 %v1200, %v1199
      %v1231 = vpack.c.b16 %v1202, %v1201
      %v1232 = vpack.c.b16 %v1204, %v1203
      %v1233 = vpack.c.b16 %v1206, %v1205
      %v1234 = vpack.c.b16 %v1208, %v1207
      %v1235 = vpack.c.b16 %v1210, %v1209
      %v1236 = vpack.c.b16 %v1212, %v1211
      %v1237 = vpack.c.b16 %v1214, %v1213
      %v1238 = vpack.c.b16 %v1216, %v1215
      %v1239 = vpack.c.b16 %v1218, %v1217
      %v1240 = vpack.c.b16 %v1220, %v1219
      %v1241 = vpack.c.b16 %v1222, %v1221
      %v1242 = vpack.c.b16 %v1224, %v1223
      %v1243 = vpack.c.b16 %v1226, %v1225
      %v1244 = vpack.c.b16 %v1228, %v1227
      %v1246 = vsel %vm670, %v1229, 0
      %v1249 = vsel %vm670, %v1230, 0
      %v1252 = vsel %vm670, %v1231, 0
      %v1255 = vsel %vm670, %v1232, 0
      %v1258 = vsel %vm670, %v1233, 0
      %v1261 = vsel %vm670, %v1234, 0
      %v1264 = vsel %vm670, %v1235, 0
      %v1267 = vsel %vm670, %v1236, 0
      %v1270 = vsel %vm670, %v1237, 0
      %v1273 = vsel %vm670, %v1238, 0
      %v1276 = vsel %vm670, %v1239, 0
      %v1279 = vsel %vm670, %v1240, 0
      %v1282 = vsel %vm670, %v1241, 0
      %v1285 = vsel %vm670, %v1242, 0
      %v1288 = vsel %vm670, %v1243, 0
      %v1291 = vsel %vm670, %v1244, 0
      %v1294 = vsel %vm719, %v1196, 0
      %1296 = vmatpush.bf16.msra.mxu0 0
      %1297 = vmatpush.bf16.msra.mxu0 0
      %1298 = vmatpush.bf16.msra.mxu0 0
      %1299 = vmatpush.bf16.msra.mxu0 0
      %1300 = vmatpush.bf16.msra.mxu0 0
      %1301 = vmatpush.bf16.msra.mxu0 0
      %1302 = vmatpush.bf16.msra.mxu0 0
      %1303 = vmatpush.bf16.msra.mxu0 %v1294
      %1304 = vmatmul.bf16.gmra.mxu0 %v1246
      %v1305 = vpop.f32.mrf.mxu0
      %v1306 = vadd.f32 0.0, %v1305
      %v1307 = vpop.f32.mrf.mxu0
      %v1308 = vadd.f32 0.0, %v1307
      %1309 = vmatmul.bf16.gmra.mxu0 %v1249
      %v1310 = vpop.f32.mrf.mxu0
      %v1311 = vadd.f32 0.0, %v1310
      %v1312 = vpop.f32.mrf.mxu0
      %v1313 = vadd.f32 0.0, %v1312
      %1314 = vmatmul.bf16.gmra.mxu0 %v1252
      %v1315 = vpop.f32.mrf.mxu0
      %v1316 = vadd.f32 0.0, %v1315
      %v1317 = vpop.f32.mrf.mxu0
      %v1318 = vadd.f32 0.0, %v1317
      %1319 = vmatmul.bf16.gmra.mxu0 %v1255
      %v1320 = vpop.f32.mrf.mxu0
      %v1321 = vadd.f32 0.0, %v1320
      %v1322 = vpop.f32.mrf.mxu0
      %v1323 = vadd.f32 0.0, %v1322
      %1324 = vmatmul.bf16.gmra.mxu0 %v1258
      %v1325 = vpop.f32.mrf.mxu0
      %v1326 = vadd.f32 0.0, %v1325
      %v1327 = vpop.f32.mrf.mxu0
      %v1328 = vadd.f32 0.0, %v1327
      %1329 = vmatmul.bf16.gmra.mxu0 %v1261
      %v1330 = vpop.f32.mrf.mxu0
      %v1331 = vadd.f32 0.0, %v1330
      %v1332 = vpop.f32.mrf.mxu0
      %v1333 = vadd.f32 0.0, %v1332
      %1334 = vmatmul.bf16.gmra.mxu0 %v1264
      %v1335 = vpop.f32.mrf.mxu0
      %v1336 = vadd.f32 0.0, %v1335
      %v1337 = vpop.f32.mrf.mxu0
      %v1338 = vadd.f32 0.0, %v1337
      %1339 = vmatmul.bf16.gmra.mxu0 %v1267
      %v1340 = vpop.f32.mrf.mxu0
      %v1341 = vadd.f32 0.0, %v1340
      %v1342 = vpop.f32.mrf.mxu0
      %v1343 = vadd.f32 0.0, %v1342
      %1344 = vmatmul.bf16.gmra.mxu0 %v1270
      %v1345 = vpop.f32.mrf.mxu0
      %v1346 = vadd.f32 0.0, %v1345
      %v1347 = vpop.f32.mrf.mxu0
      %v1348 = vadd.f32 0.0, %v1347
      %1349 = vmatmul.bf16.gmra.mxu0 %v1273
      %v1350 = vpop.f32.mrf.mxu0
      %v1351 = vadd.f32 0.0, %v1350
      %v1352 = vpop.f32.mrf.mxu0
      %v1353 = vadd.f32 0.0, %v1352
      %1354 = vmatmul.bf16.gmra.mxu0 %v1276
      %v1355 = vpop.f32.mrf.mxu0
      %v1356 = vadd.f32 0.0, %v1355
      %v1357 = vpop.f32.mrf.mxu0
      %v1358 = vadd.f32 0.0, %v1357
      %1359 = vmatmul.bf16.gmra.mxu0 %v1279
      %v1360 = vpop.f32.mrf.mxu0
      %v1361 = vadd.f32 0.0, %v1360
      %v1362 = vpop.f32.mrf.mxu0
      %v1363 = vadd.f32 0.0, %v1362
      %1364 = vmatmul.bf16.gmra.mxu0 %v1282
      %v1365 = vpop.f32.mrf.mxu0
      %v1366 = vadd.f32 0.0, %v1365
      %v1367 = vpop.f32.mrf.mxu0
      %v1368 = vadd.f32 0.0, %v1367
      %1369 = vmatmul.bf16.gmra.mxu0 %v1285
      %v1370 = vpop.f32.mrf.mxu0
      %v1371 = vadd.f32 0.0, %v1370
      %v1372 = vpop.f32.mrf.mxu0
      %v1373 = vadd.f32 0.0, %v1372
      %1374 = vmatmul.bf16.gmra.mxu0 %v1288
      %v1375 = vpop.f32.mrf.mxu0
      %v1376 = vadd.f32 0.0, %v1375
      %v1377 = vpop.f32.mrf.mxu0
      %v1378 = vadd.f32 0.0, %v1377
      %1379 = vmatmul.bf16.gmra.mxu0 %v1291
      %v1380 = vpop.f32.mrf.mxu0
      %v1381 = vadd.f32 0.0, %v1380
      %v1382 = vpop.f32.mrf.mxu0
      %v1383 = vadd.f32 0.0, %v1382
      %1384 = vdwg.mxu0
      %v1385 = vadd.f32 %v953, %v1306
      %v1386 = vadd.f32 %v955, %v1308
      %v1387 = vadd.f32 %v958, %v1311
      %v1388 = vadd.f32 %v960, %v1313
      %v1389 = vadd.f32 %v963, %v1316
      %v1390 = vadd.f32 %v965, %v1318
      %v1391 = vadd.f32 %v968, %v1321
      %v1392 = vadd.f32 %v970, %v1323
      %v1393 = vadd.f32 %v973, %v1326
      %v1394 = vadd.f32 %v975, %v1328
      %v1395 = vadd.f32 %v978, %v1331
      %v1396 = vadd.f32 %v980, %v1333
      %v1397 = vadd.f32 %v983, %v1336
      %v1398 = vadd.f32 %v985, %v1338
      %v1399 = vadd.f32 %v988, %v1341
      %v1400 = vadd.f32 %v990, %v1343
      %v1401 = vadd.f32 %v993, %v1346
      %v1402 = vadd.f32 %v995, %v1348
      %v1403 = vadd.f32 %v998, %v1351
      %v1404 = vadd.f32 %v1000, %v1353
      %v1405 = vadd.f32 %v1003, %v1356
      %v1406 = vadd.f32 %v1005, %v1358
      %v1407 = vadd.f32 %v1008, %v1361
      %v1408 = vadd.f32 %v1010, %v1363
      %v1409 = vadd.f32 %v1013, %v1366
      %v1410 = vadd.f32 %v1015, %v1368
      %v1411 = vadd.f32 %v1018, %v1371
      %v1412 = vadd.f32 %v1020, %v1373
      %v1413 = vadd.f32 %v1023, %v1376
      %v1414 = vadd.f32 %v1025, %v1378
      %v1415 = vadd.f32 %v1028, %v1381
      %v1416 = vadd.f32 %v1030, %v1383
      %s1417 = scalar_lea.vmem %s172, 12
      %v1418 = vld [vmem:[%s1417] sm:$0xf]
      %v1419 = vld [vmem:[%s1417 + $0x4] sm:$0xf]
      %v1420 = vld [vmem:[%s1417 + $0xc] sm:$0xf]
      %v1421 = vld [vmem:[%s1417 + $0x10] sm:$0xf]
      %v1422 = vld [vmem:[%s1417 + $0x18] sm:$0xf]
      %v1423 = vld [vmem:[%s1417 + $0x1c] sm:$0xf]
      %v1424 = vld [vmem:[%s1417 + $0x24] sm:$0xf]
      %v1425 = vld [vmem:[%s1417 + $0x28] sm:$0xf]
      %v1426 = vld [vmem:[%s1417 + $0x30] sm:$0xf]
      %v1427 = vld [vmem:[%s1417 + $0x34] sm:$0xf]
      %v1428 = vld [vmem:[%s1417 + $0x3c] sm:$0xf]
      %v1429 = vld [vmem:[%s1417 + $0x40] sm:$0xf]
      %v1430 = vld [vmem:[%s1417 + $0x48] sm:$0xf]
      %v1431 = vld [vmem:[%s1417 + $0x4c] sm:$0xf]
      %v1432 = vld [vmem:[%s1417 + $0x54] sm:$0xf]
      %v1433 = vld [vmem:[%s1417 + $0x58] sm:$0xf]
      %v1434 = vld [vmem:[%s1417 + $0x60] sm:$0xf]
      %v1435 = vld [vmem:[%s1417 + $0x64] sm:$0xf]
      %v1436 = vld [vmem:[%s1417 + $0x6c] sm:$0xf]
      %v1437 = vld [vmem:[%s1417 + $0x70] sm:$0xf]
      %v1438 = vld [vmem:[%s1417 + $0x78] sm:$0xf]
      %v1439 = vld [vmem:[%s1417 + $0x7c] sm:$0xf]
      %v1440 = vld [vmem:[%s1417 + $0x84] sm:$0xf]
      %v1441 = vld [vmem:[%s1417 + $0x88] sm:$0xf]
      %v1442 = vld [vmem:[%s1417 + $0x90] sm:$0xf]
      %v1443 = vld [vmem:[%s1417 + $0x94] sm:$0xf]
      %v1444 = vld [vmem:[%s1417 + $0x9c] sm:$0xf]
      %v1445 = vld [vmem:[%s1417 + $0xa0] sm:$0xf]
      %v1446 = vld [vmem:[%s1417 + $0xa8] sm:$0xf]
      %v1447 = vld [vmem:[%s1417 + $0xac] sm:$0xf]
      %v1448 = vld [vmem:[%s1417 + $0xb4] sm:$0xf]
      %v1449 = vld [vmem:[%s1417 + $0xb8] sm:$0xf]
      %s1450 = scalar_lea.vmem %s1, 6
      %v1451 = vld [vmem:[%s1450] sm:$0x3]
      %v1484 = vunpack.c.l.b16 %v1418
      %v1485 = vunpack.c.l.b16 %v1419
      %v1486 = vunpack.c.l.b16 %v1420
      %v1487 = vunpack.c.l.b16 %v1421
      %v1488 = vunpack.c.l.b16 %v1422
      %v1489 = vunpack.c.l.b16 %v1423
      %v1490 = vunpack.c.l.b16 %v1424
      %v1491 = vunpack.c.l.b16 %v1425
      %v1492 = vunpack.c.l.b16 %v1426
      %v1493 = vunpack.c.l.b16 %v1427
      %v1494 = vunpack.c.l.b16 %v1428
      %v1495 = vunpack.c.l.b16 %v1429
      %v1496 = vunpack.c.l.b16 %v1430
      %v1497 = vunpack.c.l.b16 %v1431
      %v1498 = vunpack.c.l.b16 %v1432
      %v1499 = vunpack.c.l.b16 %v1433
      %v1500 = vunpack.c.l.b16 %v1434
      %v1501 = vunpack.c.l.b16 %v1435
      %v1502 = vunpack.c.l.b16 %v1436
      %v1503 = vunpack.c.l.b16 %v1437
      %v1504 = vunpack.c.l.b16 %v1438
      %v1505 = vunpack.c.l.b16 %v1439
      %v1506 = vunpack.c.l.b16 %v1440
      %v1507 = vunpack.c.l.b16 %v1441
      %v1508 = vunpack.c.l.b16 %v1442
      %v1509 = vunpack.c.l.b16 %v1443
      %v1510 = vunpack.c.l.b16 %v1444
      %v1511 = vunpack.c.l.b16 %v1445
      %v1512 = vunpack.c.l.b16 %v1446
      %v1513 = vunpack.c.l.b16 %v1447
      %v1514 = vunpack.c.l.b16 %v1448
      %v1515 = vunpack.c.l.b16 %v1449
      %v1516 = vpack.c.b16 %v1485, %v1484
      %v1517 = vpack.c.b16 %v1487, %v1486
      %v1518 = vpack.c.b16 %v1489, %v1488
      %v1519 = vpack.c.b16 %v1491, %v1490
      %v1520 = vpack.c.b16 %v1493, %v1492
      %v1521 = vpack.c.b16 %v1495, %v1494
      %v1522 = vpack.c.b16 %v1497, %v1496
      %v1523 = vpack.c.b16 %v1499, %v1498
      %v1524 = vpack.c.b16 %v1501, %v1500
      %v1525 = vpack.c.b16 %v1503, %v1502
      %v1526 = vpack.c.b16 %v1505, %v1504
      %v1527 = vpack.c.b16 %v1507, %v1506
      %v1528 = vpack.c.b16 %v1509, %v1508
      %v1529 = vpack.c.b16 %v1511, %v1510
      %v1530 = vpack.c.b16 %v1513, %v1512
      %v1531 = vpack.c.b16 %v1515, %v1514
      %v1533 = vsel %vm670, %v1516, 0
      %v1536 = vsel %vm670, %v1517, 0
      %v1539 = vsel %vm670, %v1518, 0
      %v1542 = vsel %vm670, %v1519, 0
      %v1545 = vsel %vm670, %v1520, 0
      %v1548 = vsel %vm670, %v1521, 0
      %v1551 = vsel %vm670, %v1522, 0
      %v1554 = vsel %vm670, %v1523, 0
      %v1557 = vsel %vm670, %v1524, 0
      %v1560 = vsel %vm670, %v1525, 0
      %v1563 = vsel %vm670, %v1526, 0
      %v1566 = vsel %vm670, %v1527, 0
      %v1569 = vsel %vm670, %v1528, 0
      %v1572 = vsel %vm670, %v1529, 0
      %v1575 = vsel %vm670, %v1530, 0
      %v1578 = vsel %vm670, %v1531, 0
      %v1581 = vsel %vm719, %v1451, 0
      %1583 = vmatpush.bf16.msra.mxu0 0
      %1584 = vmatpush.bf16.msra.mxu0 0
      %1585 = vmatpush.bf16.msra.mxu0 0
      %1586 = vmatpush.bf16.msra.mxu0 0
      %1587 = vmatpush.bf16.msra.mxu0 0
      %1588 = vmatpush.bf16.msra.mxu0 0
      %1589 = vmatpush.bf16.msra.mxu0 0
      %1590 = vmatpush.bf16.msra.mxu0 %v1581
      %1591 = vmatmul.bf16.gmra.mxu0 %v1533
      %v1592 = vpop.f32.mrf.mxu0
      %v1593 = vadd.f32 0.0, %v1592
      %v1594 = vpop.f32.mrf.mxu0
      %v1595 = vadd.f32 0.0, %v1594
      %1596 = vmatmul.bf16.gmra.mxu0 %v1536
      %v1597 = vpop.f32.mrf.mxu0
      %v1598 = vadd.f32 0.0, %v1597
      %v1599 = vpop.f32.mrf.mxu0
      %v1600 = vadd.f32 0.0, %v1599
      %1601 = vmatmul.bf16.gmra.mxu0 %v1539
      %v1602 = vpop.f32.mrf.mxu0
      %v1603 = vadd.f32 0.0, %v1602
      %v1604 = vpop.f32.mrf.mxu0
      %v1605 = vadd.f32 0.0, %v1604
      %1606 = vmatmul.bf16.gmra.mxu0 %v1542
      %v1607 = vpop.f32.mrf.mxu0
      %v1608 = vadd.f32 0.0, %v1607
      %v1609 = vpop.f32.mrf.mxu0
      %v1610 = vadd.f32 0.0, %v1609
      %1611 = vmatmul.bf16.gmra.mxu0 %v1545
      %v1612 = vpop.f32.mrf.mxu0
      %v1613 = vadd.f32 0.0, %v1612
      %v1614 = vpop.f32.mrf.mxu0
      %v1615 = vadd.f32 0.0, %v1614
      %1616 = vmatmul.bf16.gmra.mxu0 %v1548
      %v1617 = vpop.f32.mrf.mxu0
      %v1618 = vadd.f32 0.0, %v1617
      %v1619 = vpop.f32.mrf.mxu0
      %v1620 = vadd.f32 0.0, %v1619
      %1621 = vmatmul.bf16.gmra.mxu0 %v1551
      %v1622 = vpop.f32.mrf.mxu0
      %v1623 = vadd.f32 0.0, %v1622
      %v1624 = vpop.f32.mrf.mxu0
      %v1625 = vadd.f32 0.0, %v1624
      %1626 = vmatmul.bf16.gmra.mxu0 %v1554
      %v1627 = vpop.f32.mrf.mxu0
      %v1628 = vadd.f32 0.0, %v1627
      %v1629 = vpop.f32.mrf.mxu0
      %v1630 = vadd.f32 0.0, %v1629
      %1631 = vmatmul.bf16.gmra.mxu0 %v1557
      %v1632 = vpop.f32.mrf.mxu0
      %v1633 = vadd.f32 0.0, %v1632
      %v1634 = vpop.f32.mrf.mxu0
      %v1635 = vadd.f32 0.0, %v1634
      %1636 = vmatmul.bf16.gmra.mxu0 %v1560
      %v1637 = vpop.f32.mrf.mxu0
      %v1638 = vadd.f32 0.0, %v1637
      %v1639 = vpop.f32.mrf.mxu0
      %v1640 = vadd.f32 0.0, %v1639
      %1641 = vmatmul.bf16.gmra.mxu0 %v1563
      %v1642 = vpop.f32.mrf.mxu0
      %v1643 = vadd.f32 0.0, %v1642
      %v1644 = vpop.f32.mrf.mxu0
      %v1645 = vadd.f32 0.0, %v1644
      %1646 = vmatmul.bf16.gmra.mxu0 %v1566
      %v1647 = vpop.f32.mrf.mxu0
      %v1648 = vadd.f32 0.0, %v1647
      %v1649 = vpop.f32.mrf.mxu0
      %v1650 = vadd.f32 0.0, %v1649
      %1651 = vmatmul.bf16.gmra.mxu0 %v1569
      %v1652 = vpop.f32.mrf.mxu0
      %v1653 = vadd.f32 0.0, %v1652
      %v1654 = vpop.f32.mrf.mxu0
      %v1655 = vadd.f32 0.0, %v1654
      %1656 = vmatmul.bf16.gmra.mxu0 %v1572
      %v1657 = vpop.f32.mrf.mxu0
      %v1658 = vadd.f32 0.0, %v1657
      %v1659 = vpop.f32.mrf.mxu0
      %v1660 = vadd.f32 0.0, %v1659
      %1661 = vmatmul.bf16.gmra.mxu0 %v1575
      %v1662 = vpop.f32.mrf.mxu0
      %v1663 = vadd.f32 0.0, %v1662
      %v1664 = vpop.f32.mrf.mxu0
      %v1665 = vadd.f32 0.0, %v1664
      %1666 = vmatmul.bf16.gmra.mxu0 %v1578
      %v1667 = vpop.f32.mrf.mxu0
      %v1668 = vadd.f32 0.0, %v1667
      %v1669 = vpop.f32.mrf.mxu0
      %v1670 = vadd.f32 0.0, %v1669
      %1671 = vdwg.mxu0
      %v1672 = vadd.f32 %v1385, %v1593
      %v1673 = vadd.f32 %v1386, %v1595
      %v1674 = vadd.f32 %v1387, %v1598
      %v1675 = vadd.f32 %v1388, %v1600
      %v1676 = vadd.f32 %v1389, %v1603
      %v1677 = vadd.f32 %v1390, %v1605
      %v1678 = vadd.f32 %v1391, %v1608
      %v1679 = vadd.f32 %v1392, %v1610
      %v1680 = vadd.f32 %v1393, %v1613
      %v1681 = vadd.f32 %v1394, %v1615
      %v1682 = vadd.f32 %v1395, %v1618
      %v1683 = vadd.f32 %v1396, %v1620
      %v1684 = vadd.f32 %v1397, %v1623
      %v1685 = vadd.f32 %v1398, %v1625
      %v1686 = vadd.f32 %v1399, %v1628
      %v1687 = vadd.f32 %v1400, %v1630
      %v1688 = vadd.f32 %v1401, %v1633
      %v1689 = vadd.f32 %v1402, %v1635
      %v1690 = vadd.f32 %v1403, %v1638
      %v1691 = vadd.f32 %v1404, %v1640
      %v1692 = vadd.f32 %v1405, %v1643
      %v1693 = vadd.f32 %v1406, %v1645
      %v1694 = vadd.f32 %v1407, %v1648
      %v1695 = vadd.f32 %v1408, %v1650
      %v1696 = vadd.f32 %v1409, %v1653
      %v1697 = vadd.f32 %v1410, %v1655
      %v1698 = vadd.f32 %v1411, %v1658
      %v1699 = vadd.f32 %v1412, %v1660
      %v1700 = vadd.f32 %v1413, %v1663
      %v1701 = vadd.f32 %v1414, %v1665
      %v1702 = vadd.f32 %v1415, %v1668
      %v1703 = vadd.f32 %v1416, %v1670
      %v1704 = vld [vmem:[%s1417] sm:$0xf]
      %v1705 = vld [vmem:[%s1417 + $0x4] sm:$0xf]
      %v1706 = vld [vmem:[%s1417 + $0x8] sm:$0x1]
      %v1707 = vld [vmem:[%s1417 + $0xc] sm:$0xf]
      %v1708 = vld [vmem:[%s1417 + $0x10] sm:$0xf]
      %v1709 = vld [vmem:[%s1417 + $0x14] sm:$0x1]
      %v1710 = vld [vmem:[%s1417 + $0x18] sm:$0xf]
      %v1711 = vld [vmem:[%s1417 + $0x1c] sm:$0xf]
      %v1712 = vld [vmem:[%s1417 + $0x20] sm:$0x1]
      %v1713 = vld [vmem:[%s1417 + $0x24] sm:$0xf]
      %v1714 = vld [vmem:[%s1417 + $0x28] sm:$0xf]
      %v1715 = vld [vmem:[%s1417 + $0x2c] sm:$0x1]
      %v1716 = vld [vmem:[%s1417 + $0x30] sm:$0xf]
      %v1717 = vld [vmem:[%s1417 + $0x34] sm:$0xf]
      %v1718 = vld [vmem:[%s1417 + $0x38] sm:$0x1]
      %v1719 = vld [vmem:[%s1417 + $0x3c] sm:$0xf]
      %v1720 = vld [vmem:[%s1417 + $0x40] sm:$0xf]
      %v1721 = vld [vmem:[%s1417 + $0x44] sm:$0x1]
      %v1722 = vld [vmem:[%s1417 + $0x48] sm:$0xf]
      %v1723 = vld [vmem:[%s1417 + $0x4c] sm:$0xf]
      %v1724 = vld [vmem:[%s1417 + $0x50] sm:$0x1]
      %v1725 = vld [vmem:[%s1417 + $0x54] sm:$0xf]
      %v1726 = vld [vmem:[%s1417 + $0x58] sm:$0xf]
      %v1727 = vld [vmem:[%s1417 + $0x5c] sm:$0x1]
      %v1728 = vld [vmem:[%s1417 + $0x60] sm:$0xf]
      %v1729 = vld [vmem:[%s1417 + $0x64] sm:$0xf]
      %v1730 = vld [vmem:[%s1417 + $0x68] sm:$0x1]
      %v1731 = vld [vmem:[%s1417 + $0x6c] sm:$0xf]
      %v1732 = vld [vmem:[%s1417 + $0x70] sm:$0xf]
      %v1733 = vld [vmem:[%s1417 + $0x74] sm:$0x1]
      %v1734 = vld [vmem:[%s1417 + $0x78] sm:$0xf]
      %v1735 = vld [vmem:[%s1417 + $0x7c] sm:$0xf]
      %v1736 = vld [vmem:[%s1417 + $0x80] sm:$0x1]
      %v1737 = vld [vmem:[%s1417 + $0x84] sm:$0xf]
      %v1738 = vld [vmem:[%s1417 + $0x88] sm:$0xf]
      %v1739 = vld [vmem:[%s1417 + $0x8c] sm:$0x1]
      %v1740 = vld [vmem:[%s1417 + $0x90] sm:$0xf]
      %v1741 = vld [vmem:[%s1417 + $0x94] sm:$0xf]
      %v1742 = vld [vmem:[%s1417 + $0x98] sm:$0x1]
      %v1743 = vld [vmem:[%s1417 + $0x9c] sm:$0xf]
      %v1744 = vld [vmem:[%s1417 + $0xa0] sm:$0xf]
      %v1745 = vld [vmem:[%s1417 + $0xa4] sm:$0x1]
      %v1746 = vld [vmem:[%s1417 + $0xa8] sm:$0xf]
      %v1747 = vld [vmem:[%s1417 + $0xac] sm:$0xf]
      %v1748 = vld [vmem:[%s1417 + $0xb0] sm:$0x1]
      %v1749 = vld [vmem:[%s1417 + $0xb4] sm:$0xf]
      %v1750 = vld [vmem:[%s1417 + $0xb8] sm:$0xf]
      %v1751 = vld [vmem:[%s1417 + $0xbc] sm:$0x1]
      %v1753 = vshrl.u32 %v1704, 16
      %v1755 = vrot.slane %v1753, 4
      %v1756 = vshll.u32 %v1704, 16
      %v1758 = vrot.slane %v1756, 5
      %v1759 = vor.u32 %v1755, %v1758
      %v1760 = vrot.slane %v1759, 4
      %v1762 = vshll.u32 %v1705, 16
      %v1764 = vrot.slane %v1762, 5
      %v1765 = vsel %vm235, %v1760, %v1764
      %v1766 = vshrl.u32 %v1705, 16
      %v1768 = vrot.slane %v1766, 4
      %v1769 = vor.u32 %v1768, %v1764
      %v1770 = vrot.slane %v1769, 4
      %v1772 = vshll.u32 %v1706, 16
      %v1774 = vrot.slane %v1772, 5
      %v1775 = vsel %vm235, %v1770, %v1774
      %v1777 = vshrl.u32 %v1707, 16
      %v1779 = vrot.slane %v1777, 4
      %v1780 = vshll.u32 %v1707, 16
      %v1782 = vrot.slane %v1780, 5
      %v1783 = vor.u32 %v1779, %v1782
      %v1784 = vrot.slane %v1783, 4
      %v1786 = vshll.u32 %v1708, 16
      %v1788 = vrot.slane %v1786, 5
      %v1789 = vsel %vm235, %v1784, %v1788
      %v1790 = vshrl.u32 %v1708, 16
      %v1792 = vrot.slane %v1790, 4
      %v1793 = vor.u32 %v1792, %v1788
      %v1794 = vrot.slane %v1793, 4
      %v1796 = vshll.u32 %v1709, 16
      %v1798 = vrot.slane %v1796, 5
      %v1799 = vsel %vm235, %v1794, %v1798
      %v1801 = vshrl.u32 %v1710, 16
      %v1803 = vrot.slane %v1801, 4
      %v1804 = vshll.u32 %v1710, 16
      %v1806 = vrot.slane %v1804, 5
      %v1807 = vor.u32 %v1803, %v1806
      %v1808 = vrot.slane %v1807, 4
      %v1810 = vshll.u32 %v1711, 16
      %v1812 = vrot.slane %v1810, 5
      %v1813 = vsel %vm235, %v1808, %v1812
      %v1814 = vshrl.u32 %v1711, 16
      %v1816 = vrot.slane %v1814, 4
      %v1817 = vor.u32 %v1816, %v1812
      %v1818 = vrot.slane %v1817, 4
      %v1820 = vshll.u32 %v1712, 16
      %v1822 = vrot.slane %v1820, 5
      %v1823 = vsel %vm235, %v1818, %v1822
      %v1825 = vshrl.u32 %v1713, 16
      %v1827 = vrot.slane %v1825, 4
      %v1828 = vshll.u32 %v1713, 16
      %v1830 = vrot.slane %v1828, 5
      %v1831 = vor.u32 %v1827, %v1830
      %v1832 = vrot.slane %v1831, 4
      %v1834 = vshll.u32 %v1714, 16
      %v1836 = vrot.slane %v1834, 5
      %v1837 = vsel %vm235, %v1832, %v1836
      %v1838 = vshrl.u32 %v1714, 16
      %v1840 = vrot.slane %v1838, 4
      %v1841 = vor.u32 %v1840, %v1836
      %v1842 = vrot.slane %v1841, 4
      %v1844 = vshll.u32 %v1715, 16
      %v1846 = vrot.slane %v1844, 5
      %v1847 = vsel %vm235, %v1842, %v1846
      %v1849 = vshrl.u32 %v1716, 16
      %v1851 = vrot.slane %v1849, 4
      %v1852 = vshll.u32 %v1716, 16
      %v1854 = vrot.slane %v1852, 5
      %v1855 = vor.u32 %v1851, %v1854
      %v1856 = vrot.slane %v1855, 4
      %v1858 = vshll.u32 %v1717, 16
      %v1860 = vrot.slane %v1858, 5
      %v1861 = vsel %vm235, %v1856, %v1860
      %v1862 = vshrl.u32 %v1717, 16
      %v1864 = vrot.slane %v1862, 4
      %v1865 = vor.u32 %v1864, %v1860
      %v1866 = vrot.slane %v1865, 4
      %v1868 = vshll.u32 %v1718, 16
      %v1870 = vrot.slane %v1868, 5
      %v1871 = vsel %vm235, %v1866, %v1870
      %v1873 = vshrl.u32 %v1719, 16
      %v1875 = vrot.slane %v1873, 4
      %v1876 = vshll.u32 %v1719, 16
      %v1878 = vrot.slane %v1876, 5
      %v1879 = vor.u32 %v1875, %v1878
      %v1880 = vrot.slane %v1879, 4
      %v1882 = vshll.u32 %v1720, 16
      %v1884 = vrot.slane %v1882, 5
      %v1885 = vsel %vm235, %v1880, %v1884
      %v1886 = vshrl.u32 %v1720, 16
      %v1888 = vrot.slane %v1886, 4
      %v1889 = vor.u32 %v1888, %v1884
      %v1890 = vrot.slane %v1889, 4
      %v1892 = vshll.u32 %v1721, 16
      %v1894 = vrot.slane %v1892, 5
      %v1895 = vsel %vm235, %v1890, %v1894
      %v1897 = vshrl.u32 %v1722, 16
      %v1899 = vrot.slane %v1897, 4
      %v1900 = vshll.u32 %v1722, 16
      %v1902 = vrot.slane %v1900, 5
      %v1903 = vor.u32 %v1899, %v1902
      %v1904 = vrot.slane %v1903, 4
      %v1906 = vshll.u32 %v1723, 16
      %v1908 = vrot.slane %v1906, 5
      %v1909 = vsel %vm235, %v1904, %v1908
      %v1910 = vshrl.u32 %v1723, 16
      %v1912 = vrot.slane %v1910, 4
      %v1913 = vor.u32 %v1912, %v1908
      %v1914 = vrot.slane %v1913, 4
      %v1916 = vshll.u32 %v1724, 16
      %v1918 = vrot.slane %v1916, 5
      %v1919 = vsel %vm235, %v1914, %v1918
      %v1921 = vshrl.u32 %v1725, 16
      %v1923 = vrot.slane %v1921, 4
      %v1924 = vshll.u32 %v1725, 16
      %v1926 = vrot.slane %v1924, 5
      %v1927 = vor.u32 %v1923, %v1926
      %v1928 = vrot.slane %v1927, 4
      %v1930 = vshll.u32 %v1726, 16
      %v1932 = vrot.slane %v1930, 5
      %v1933 = vsel %vm235, %v1928, %v1932
      %v1934 = vshrl.u32 %v1726, 16
      %v1936 = vrot.slane %v1934, 4
      %v1937 = vor.u32 %v1936, %v1932
      %v1938 = vrot.slane %v1937, 4
      %v1940 = vshll.u32 %v1727, 16
      %v1942 = vrot.slane %v1940, 5
      %v1943 = vsel %vm235, %v1938, %v1942
      %v1945 = vshrl.u32 %v1728, 16
      %v1947 = vrot.slane %v1945, 4
      %v1948 = vshll.u32 %v1728, 16
      %v1950 = vrot.slane %v1948, 5
      %v1951 = vor.u32 %v1947, %v1950
      %v1952 = vrot.slane %v1951, 4
      %v1954 = vshll.u32 %v1729, 16
      %v1956 = vrot.slane %v1954, 5
      %v1957 = vsel %vm235, %v1952, %v1956
      %v1958 = vshrl.u32 %v1729, 16
      %v1960 = vrot.slane %v1958, 4
      %v1961 = vor.u32 %v1960, %v1956
      %v1962 = vrot.slane %v1961, 4
      %v1964 = vshll.u32 %v1730, 16
      %v1966 = vrot.slane %v1964, 5
      %v1967 = vsel %vm235, %v1962, %v1966
      %v1969 = vshrl.u32 %v1731, 16
      %v1971 = vrot.slane %v1969, 4
      %v1972 = vshll.u32 %v1731, 16
      %v1974 = vrot.slane %v1972, 5
      %v1975 = vor.u32 %v1971, %v1974
      %v1976 = vrot.slane %v1975, 4
      %v1978 = vshll.u32 %v1732, 16
      %v1980 = vrot.slane %v1978, 5
      %v1981 = vsel %vm235, %v1976, %v1980
      %v1982 = vshrl.u32 %v1732, 16
      %v1984 = vrot.slane %v1982, 4
      %v1985 = vor.u32 %v1984, %v1980
      %v1986 = vrot.slane %v1985, 4
      %v1988 = vshll.u32 %v1733, 16
      %v1990 = vrot.slane %v1988, 5
      %v1991 = vsel %vm235, %v1986, %v1990
      %v1993 = vshrl.u32 %v1734, 16
      %v1995 = vrot.slane %v1993, 4
      %v1996 = vshll.u32 %v1734, 16
      %v1998 = vrot.slane %v1996, 5
      %v1999 = vor.u32 %v1995, %v1998
      %v2000 = vrot.slane %v1999, 4
      %v2002 = vshll.u32 %v1735, 16
      %v2004 = vrot.slane %v2002, 5
      %v2005 = vsel %vm235, %v2000, %v2004
      %v2006 = vshrl.u32 %v1735, 16
      %v2008 = vrot.slane %v2006, 4
      %v2009 = vor.u32 %v2008, %v2004
      %v2010 = vrot.slane %v2009, 4
      %v2012 = vshll.u32 %v1736, 16
      %v2014 = vrot.slane %v2012, 5
      %v2015 = vsel %vm235, %v2010, %v2014
      %v2017 = vshrl.u32 %v1737, 16
      %v2019 = vrot.slane %v2017, 4
      %v2020 = vshll.u32 %v1737, 16
      %v2022 = vrot.slane %v2020, 5
      %v2023 = vor.u32 %v2019, %v2022
      %v2024 = vrot.slane %v2023, 4
      %v2026 = vshll.u32 %v1738, 16
      %v2028 = vrot.slane %v2026, 5
      %v2029 = vsel %vm235, %v2024, %v2028
      %v2030 = vshrl.u32 %v1738, 16
      %v2032 = vrot.slane %v2030, 4
      %v2033 = vor.u32 %v2032, %v2028
      %v2034 = vrot.slane %v2033, 4
      %v2036 = vshll.u32 %v1739, 16
      %v2038 = vrot.slane %v2036, 5
      %v2039 = vsel %vm235, %v2034, %v2038
      %v2041 = vshrl.u32 %v1740, 16
      %v2043 = vrot.slane %v2041, 4
      %v2044 = vshll.u32 %v1740, 16
      %v2046 = vrot.slane %v2044, 5
      %v2047 = vor.u32 %v2043, %v2046
      %v2048 = vrot.slane %v2047, 4
      %v2050 = vshll.u32 %v1741, 16
      %v2052 = vrot.slane %v2050, 5
      %v2053 = vsel %vm235, %v2048, %v2052
      %v2054 = vshrl.u32 %v1741, 16
      %v2056 = vrot.slane %v2054, 4
      %v2057 = vor.u32 %v2056, %v2052
      %v2058 = vrot.slane %v2057, 4
      %v2060 = vshll.u32 %v1742, 16
      %v2062 = vrot.slane %v2060, 5
      %v2063 = vsel %vm235, %v2058, %v2062
      %v2065 = vshrl.u32 %v1743, 16
      %v2067 = vrot.slane %v2065, 4
      %v2068 = vshll.u32 %v1743, 16
      %v2070 = vrot.slane %v2068, 5
      %v2071 = vor.u32 %v2067, %v2070
      %v2072 = vrot.slane %v2071, 4
      %v2074 = vshll.u32 %v1744, 16
      %v2076 = vrot.slane %v2074, 5
      %v2077 = vsel %vm235, %v2072, %v2076
      %v2078 = vshrl.u32 %v1744, 16
      %v2080 = vrot.slane %v2078, 4
      %v2081 = vor.u32 %v2080, %v2076
      %v2082 = vrot.slane %v2081, 4
      %v2084 = vshll.u32 %v1745, 16
      %v2086 = vrot.slane %v2084, 5
      %v2087 = vsel %vm235, %v2082, %v2086
      %v2089 = vshrl.u32 %v1746, 16
      %v2091 = vrot.slane %v2089, 4
      %v2092 = vshll.u32 %v1746, 16
      %v2094 = vrot.slane %v2092, 5
      %v2095 = vor.u32 %v2091, %v2094
      %v2096 = vrot.slane %v2095, 4
      %v2098 = vshll.u32 %v1747, 16
      %v2100 = vrot.slane %v2098, 5
      %v2101 = vsel %vm235, %v2096, %v2100
      %v2102 = vshrl.u32 %v1747, 16
      %v2104 = vrot.slane %v2102, 4
      %v2105 = vor.u32 %v2104, %v2100
      %v2106 = vrot.slane %v2105, 4
      %v2108 = vshll.u32 %v1748, 16
      %v2110 = vrot.slane %v2108, 5
      %v2111 = vsel %vm235, %v2106, %v2110
      %v2113 = vshrl.u32 %v1749, 16
      %v2115 = vrot.slane %v2113, 4
      %v2116 = vshll.u32 %v1749, 16
      %v2118 = vrot.slane %v2116, 5
      %v2119 = vor.u32 %v2115, %v2118
      %v2120 = vrot.slane %v2119, 4
      %v2122 = vshll.u32 %v1750, 16
      %v2124 = vrot.slane %v2122, 5
      %v2125 = vsel %vm235, %v2120, %v2124
      %v2126 = vshrl.u32 %v1750, 16
      %v2128 = vrot.slane %v2126, 4
      %v2129 = vor.u32 %v2128, %v2124
      %v2130 = vrot.slane %v2129, 4
      %v2132 = vshll.u32 %v1751, 16
      %v2134 = vrot.slane %v2132, 5
      %v2135 = vsel %vm235, %v2130, %v2134
      %s2136 = scalar_lea.vmem %s1, 8
      %v2137 = vld [vmem:[%s2136] sm:$0x3]
      %v2138 = vunpack.c.l.b16 %v1765
      %v2139 = vunpack.c.l.b16 %v1775
      %v2140 = vunpack.c.l.b16 %v1789
      %v2141 = vunpack.c.l.b16 %v1799
      %v2142 = vunpack.c.l.b16 %v1813
      %v2143 = vunpack.c.l.b16 %v1823
      %v2144 = vunpack.c.l.b16 %v1837
      %v2145 = vunpack.c.l.b16 %v1847
      %v2146 = vunpack.c.l.b16 %v1861
      %v2147 = vunpack.c.l.b16 %v1871
      %v2148 = vunpack.c.l.b16 %v1885
      %v2149 = vunpack.c.l.b16 %v1895
      %v2150 = vunpack.c.l.b16 %v1909
      %v2151 = vunpack.c.l.b16 %v1919
      %v2152 = vunpack.c.l.b16 %v1933
      %v2153 = vunpack.c.l.b16 %v1943
      %v2154 = vunpack.c.l.b16 %v1957
      %v2155 = vunpack.c.l.b16 %v1967
      %v2156 = vunpack.c.l.b16 %v1981
      %v2157 = vunpack.c.l.b16 %v1991
      %v2158 = vunpack.c.l.b16 %v2005
      %v2159 = vunpack.c.l.b16 %v2015
      %v2160 = vunpack.c.l.b16 %v2029
      %v2161 = vunpack.c.l.b16 %v2039
      %v2162 = vunpack.c.l.b16 %v2053
      %v2163 = vunpack.c.l.b16 %v2063
      %v2164 = vunpack.c.l.b16 %v2077
      %v2165 = vunpack.c.l.b16 %v2087
      %v2166 = vunpack.c.l.b16 %v2101
      %v2167 = vunpack.c.l.b16 %v2111
      %v2168 = vunpack.c.l.b16 %v2125
      %v2169 = vunpack.c.l.b16 %v2135
      %v2170 = vpack.c.b16 %v2139, %v2138
      %v2171 = vpack.c.b16 %v2141, %v2140
      %v2172 = vpack.c.b16 %v2143, %v2142
      %v2173 = vpack.c.b16 %v2145, %v2144
      %v2174 = vpack.c.b16 %v2147, %v2146
      %v2175 = vpack.c.b16 %v2149, %v2148
      %v2176 = vpack.c.b16 %v2151, %v2150
      %v2177 = vpack.c.b16 %v2153, %v2152
      %v2178 = vpack.c.b16 %v2155, %v2154
      %v2179 = vpack.c.b16 %v2157, %v2156
      %v2180 = vpack.c.b16 %v2159, %v2158
      %v2181 = vpack.c.b16 %v2161, %v2160
      %v2182 = vpack.c.b16 %v2163, %v2162
      %v2183 = vpack.c.b16 %v2165, %v2164
      %v2184 = vpack.c.b16 %v2167, %v2166
      %v2185 = vpack.c.b16 %v2169, %v2168
      %v2187 = vsel %vm670, %v2170, 0
      %v2190 = vsel %vm670, %v2171, 0
      %v2193 = vsel %vm670, %v2172, 0
      %v2196 = vsel %vm670, %v2173, 0
      %v2199 = vsel %vm670, %v2174, 0
      %v2202 = vsel %vm670, %v2175, 0
      %v2205 = vsel %vm670, %v2176, 0
      %v2208 = vsel %vm670, %v2177, 0
      %v2211 = vsel %vm670, %v2178, 0
      %v2214 = vsel %vm670, %v2179, 0
      %v2217 = vsel %vm670, %v2180, 0
      %v2220 = vsel %vm670, %v2181, 0
      %v2223 = vsel %vm670, %v2182, 0
      %v2226 = vsel %vm670, %v2183, 0
      %v2229 = vsel %vm670, %v2184, 0
      %v2232 = vsel %vm670, %v2185, 0
      %v2235 = vsel %vm719, %v2137, 0
      %2237 = vmatpush.bf16.msra.mxu0 0
      %2238 = vmatpush.bf16.msra.mxu0 0
      %2239 = vmatpush.bf16.msra.mxu0 0
      %2240 = vmatpush.bf16.msra.mxu0 0
      %2241 = vmatpush.bf16.msra.mxu0 0
      %2242 = vmatpush.bf16.msra.mxu0 0
      %2243 = vmatpush.bf16.msra.mxu0 0
      %2244 = vmatpush.bf16.msra.mxu0 %v2235
      %2245 = vmatmul.bf16.gmra.mxu0 %v2187
      %v2246 = vpop.f32.mrf.mxu0
      %v2247 = vadd.f32 0.0, %v2246
      %v2248 = vpop.f32.mrf.mxu0
      %v2249 = vadd.f32 0.0, %v2248
      %2250 = vmatmul.bf16.gmra.mxu0 %v2190
      %v2251 = vpop.f32.mrf.mxu0
      %v2252 = vadd.f32 0.0, %v2251
      %v2253 = vpop.f32.mrf.mxu0
      %v2254 = vadd.f32 0.0, %v2253
      %2255 = vmatmul.bf16.gmra.mxu0 %v2193
      %v2256 = vpop.f32.mrf.mxu0
      %v2257 = vadd.f32 0.0, %v2256
      %v2258 = vpop.f32.mrf.mxu0
      %v2259 = vadd.f32 0.0, %v2258
      %2260 = vmatmul.bf16.gmra.mxu0 %v2196
      %v2261 = vpop.f32.mrf.mxu0
      %v2262 = vadd.f32 0.0, %v2261
      %v2263 = vpop.f32.mrf.mxu0
      %v2264 = vadd.f32 0.0, %v2263
      %2265 = vmatmul.bf16.gmra.mxu0 %v2199
      %v2266 = vpop.f32.mrf.mxu0
      %v2267 = vadd.f32 0.0, %v2266
      %v2268 = vpop.f32.mrf.mxu0
      %v2269 = vadd.f32 0.0, %v2268
      %2270 = vmatmul.bf16.gmra.mxu0 %v2202
      %v2271 = vpop.f32.mrf.mxu0
      %v2272 = vadd.f32 0.0, %v2271
      %v2273 = vpop.f32.mrf.mxu0
      %v2274 = vadd.f32 0.0, %v2273
      %2275 = vmatmul.bf16.gmra.mxu0 %v2205
      %v2276 = vpop.f32.mrf.mxu0
      %v2277 = vadd.f32 0.0, %v2276
      %v2278 = vpop.f32.mrf.mxu0
      %v2279 = vadd.f32 0.0, %v2278
      %2280 = vmatmul.bf16.gmra.mxu0 %v2208
      %v2281 = vpop.f32.mrf.mxu0
      %v2282 = vadd.f32 0.0, %v2281
      %v2283 = vpop.f32.mrf.mxu0
      %v2284 = vadd.f32 0.0, %v2283
      %2285 = vmatmul.bf16.gmra.mxu0 %v2211
      %v2286 = vpop.f32.mrf.mxu0
      %v2287 = vadd.f32 0.0, %v2286
      %v2288 = vpop.f32.mrf.mxu0
      %v2289 = vadd.f32 0.0, %v2288
      %2290 = vmatmul.bf16.gmra.mxu0 %v2214
      %v2291 = vpop.f32.mrf.mxu0
      %v2292 = vadd.f32 0.0, %v2291
      %v2293 = vpop.f32.mrf.mxu0
      %v2294 = vadd.f32 0.0, %v2293
      %2295 = vmatmul.bf16.gmra.mxu0 %v2217
      %v2296 = vpop.f32.mrf.mxu0
      %v2297 = vadd.f32 0.0, %v2296
      %v2298 = vpop.f32.mrf.mxu0
      %v2299 = vadd.f32 0.0, %v2298
      %2300 = vmatmul.bf16.gmra.mxu0 %v2220
      %v2301 = vpop.f32.mrf.mxu0
      %v2302 = vadd.f32 0.0, %v2301
      %v2303 = vpop.f32.mrf.mxu0
      %v2304 = vadd.f32 0.0, %v2303
      %2305 = vmatmul.bf16.gmra.mxu0 %v2223
      %v2306 = vpop.f32.mrf.mxu0
      %v2307 = vadd.f32 0.0, %v2306
      %v2308 = vpop.f32.mrf.mxu0
      %v2309 = vadd.f32 0.0, %v2308
      %2310 = vmatmul.bf16.gmra.mxu0 %v2226
      %v2311 = vpop.f32.mrf.mxu0
      %v2312 = vadd.f32 0.0, %v2311
      %v2313 = vpop.f32.mrf.mxu0
      %v2314 = vadd.f32 0.0, %v2313
      %2315 = vmatmul.bf16.gmra.mxu0 %v2229
      %v2316 = vpop.f32.mrf.mxu0
      %v2317 = vadd.f32 0.0, %v2316
      %v2318 = vpop.f32.mrf.mxu0
      %v2319 = vadd.f32 0.0, %v2318
      %2320 = vmatmul.bf16.gmra.mxu0 %v2232
      %v2321 = vpop.f32.mrf.mxu0
      %v2322 = vadd.f32 0.0, %v2321
      %v2323 = vpop.f32.mrf.mxu0
      %v2324 = vadd.f32 0.0, %v2323
      %2325 = vdwg.mxu0
      %v2326 = vadd.f32 %v1672, %v2247
      %v2327 = vadd.f32 %v1673, %v2249
      %v2328 = vadd.f32 %v1674, %v2252
      %v2329 = vadd.f32 %v1675, %v2254
      %v2330 = vadd.f32 %v1676, %v2257
      %v2331 = vadd.f32 %v1677, %v2259
      %v2332 = vadd.f32 %v1678, %v2262
      %v2333 = vadd.f32 %v1679, %v2264
      %v2334 = vadd.f32 %v1680, %v2267
      %v2335 = vadd.f32 %v1681, %v2269
      %v2336 = vadd.f32 %v1682, %v2272
      %v2337 = vadd.f32 %v1683, %v2274
      %v2338 = vadd.f32 %v1684, %v2277
      %v2339 = vadd.f32 %v1685, %v2279
      %v2340 = vadd.f32 %v1686, %v2282
      %v2341 = vadd.f32 %v1687, %v2284
      %v2342 = vadd.f32 %v1688, %v2287
      %v2343 = vadd.f32 %v1689, %v2289
      %v2344 = vadd.f32 %v1690, %v2292
      %v2345 = vadd.f32 %v1691, %v2294
      %v2346 = vadd.f32 %v1692, %v2297
      %v2347 = vadd.f32 %v1693, %v2299
      %v2348 = vadd.f32 %v1694, %v2302
      %v2349 = vadd.f32 %v1695, %v2304
      %v2350 = vadd.f32 %v1696, %v2307
      %v2351 = vadd.f32 %v1697, %v2309
      %v2352 = vadd.f32 %v1698, %v2312
      %v2353 = vadd.f32 %v1699, %v2314
      %v2354 = vadd.f32 %v1700, %v2317
      %v2355 = vadd.f32 %v1701, %v2319
      %v2356 = vadd.f32 %v1702, %v2322
      %v2357 = vadd.f32 %v1703, %v2324
      %v2358 = vld [vmem:[%s1417] sm:$0xe]
      %v2359 = vld [vmem:[%s1417 + $0xc] sm:$0xe]
      %v2360 = vld [vmem:[%s1417 + $0x18] sm:$0xe]
      %v2361 = vld [vmem:[%s1417 + $0x24] sm:$0xe]
      %v2362 = vld [vmem:[%s1417 + $0x30] sm:$0xe]
      %v2363 = vld [vmem:[%s1417 + $0x3c] sm:$0xe]
      %v2364 = vld [vmem:[%s1417 + $0x48] sm:$0xe]
      %v2365 = vld [vmem:[%s1417 + $0x54] sm:$0xe]
      %v2366 = vld [vmem:[%s1417 + $0x60] sm:$0xe]
      %v2367 = vld [vmem:[%s1417 + $0x6c] sm:$0xe]
      %v2368 = vld [vmem:[%s1417 + $0x78] sm:$0xe]
      %v2369 = vld [vmem:[%s1417 + $0x84] sm:$0xe]
      %v2370 = vld [vmem:[%s1417 + $0x90] sm:$0xe]
      %v2371 = vld [vmem:[%s1417 + $0x9c] sm:$0xe]
      %v2372 = vld [vmem:[%s1417 + $0xa8] sm:$0xe]
      %v2373 = vld [vmem:[%s1417 + $0xb4] sm:$0xe]
      %v2422 = vrot.slane %v2358, 5
      %v2423 = vrot.slane %v2422, 4
      %v2424 = vrot.slane %v1705, 5
      %v2425 = vsel %vm1082, %v2423, %v2424
      %v2426 = vrot.slane %v2424, 4
      %v2427 = vrot.slane %v1706, 5
      %v2428 = vsel %vm1082, %v2426, %v2427
      %v2429 = vrot.slane %v2359, 5
      %v2430 = vrot.slane %v2429, 4
      %v2431 = vrot.slane %v1708, 5
      %v2432 = vsel %vm1082, %v2430, %v2431
      %v2433 = vrot.slane %v2431, 4
      %v2434 = vrot.slane %v1709, 5
      %v2435 = vsel %vm1082, %v2433, %v2434
      %v2436 = vrot.slane %v2360, 5
      %v2437 = vrot.slane %v2436, 4
      %v2438 = vrot.slane %v1711, 5
      %v2439 = vsel %vm1082, %v2437, %v2438
      %v2440 = vrot.slane %v2438, 4
      %v2441 = vrot.slane %v1712, 5
      %v2442 = vsel %vm1082, %v2440, %v2441
      %v2443 = vrot.slane %v2361, 5
      %v2444 = vrot.slane %v2443, 4
      %v2445 = vrot.slane %v1714, 5
      %v2446 = vsel %vm1082, %v2444, %v2445
      %v2447 = vrot.slane %v2445, 4
      %v2448 = vrot.slane %v1715, 5
      %v2449 = vsel %vm1082, %v2447, %v2448
      %v2450 = vrot.slane %v2362, 5
      %v2451 = vrot.slane %v2450, 4
      %v2452 = vrot.slane %v1717, 5
      %v2453 = vsel %vm1082, %v2451, %v2452
      %v2454 = vrot.slane %v2452, 4
      %v2455 = vrot.slane %v1718, 5
      %v2456 = vsel %vm1082, %v2454, %v2455
      %v2457 = vrot.slane %v2363, 5
      %v2458 = vrot.slane %v2457, 4
      %v2459 = vrot.slane %v1720, 5
      %v2460 = vsel %vm1082, %v2458, %v2459
      %v2461 = vrot.slane %v2459, 4
      %v2462 = vrot.slane %v1721, 5
      %v2463 = vsel %vm1082, %v2461, %v2462
      %v2464 = vrot.slane %v2364, 5
      %v2465 = vrot.slane %v2464, 4
      %v2466 = vrot.slane %v1723, 5
      %v2467 = vsel %vm1082, %v2465, %v2466
      %v2468 = vrot.slane %v2466, 4
      %v2469 = vrot.slane %v1724, 5
      %v2470 = vsel %vm1082, %v2468, %v2469
      %v2471 = vrot.slane %v2365, 5
      %v2472 = vrot.slane %v2471, 4
      %v2473 = vrot.slane %v1726, 5
      %v2474 = vsel %vm1082, %v2472, %v2473
      %v2475 = vrot.slane %v2473, 4
      %v2476 = vrot.slane %v1727, 5
      %v2477 = vsel %vm1082, %v2475, %v2476
      %v2478 = vrot.slane %v2366, 5
      %v2479 = vrot.slane %v2478, 4
      %v2480 = vrot.slane %v1729, 5
      %v2481 = vsel %vm1082, %v2479, %v2480
      %v2482 = vrot.slane %v2480, 4
      %v2483 = vrot.slane %v1730, 5
      %v2484 = vsel %vm1082, %v2482, %v2483
      %v2485 = vrot.slane %v2367, 5
      %v2486 = vrot.slane %v2485, 4
      %v2487 = vrot.slane %v1732, 5
      %v2488 = vsel %vm1082, %v2486, %v2487
      %v2489 = vrot.slane %v2487, 4
      %v2490 = vrot.slane %v1733, 5
      %v2491 = vsel %vm1082, %v2489, %v2490
      %v2492 = vrot.slane %v2368, 5
      %v2493 = vrot.slane %v2492, 4
      %v2494 = vrot.slane %v1735, 5
      %v2495 = vsel %vm1082, %v2493, %v2494
      %v2496 = vrot.slane %v2494, 4
      %v2497 = vrot.slane %v1736, 5
      %v2498 = vsel %vm1082, %v2496, %v2497
      %v2499 = vrot.slane %v2369, 5
      %v2500 = vrot.slane %v2499, 4
      %v2501 = vrot.slane %v1738, 5
      %v2502 = vsel %vm1082, %v2500, %v2501
      %v2503 = vrot.slane %v2501, 4
      %v2504 = vrot.slane %v1739, 5
      %v2505 = vsel %vm1082, %v2503, %v2504
      %v2506 = vrot.slane %v2370, 5
      %v2507 = vrot.slane %v2506, 4
      %v2508 = vrot.slane %v1741, 5
      %v2509 = vsel %vm1082, %v2507, %v2508
      %v2510 = vrot.slane %v2508, 4
      %v2511 = vrot.slane %v1742, 5
      %v2512 = vsel %vm1082, %v2510, %v2511
      %v2513 = vrot.slane %v2371, 5
      %v2514 = vrot.slane %v2513, 4
      %v2515 = vrot.slane %v1744, 5
      %v2516 = vsel %vm1082, %v2514, %v2515
      %v2517 = vrot.slane %v2515, 4
      %v2518 = vrot.slane %v1745, 5
      %v2519 = vsel %vm1082, %v2517, %v2518
      %v2520 = vrot.slane %v2372, 5
      %v2521 = vrot.slane %v2520, 4
      %v2522 = vrot.slane %v1747, 5
      %v2523 = vsel %vm1082, %v2521, %v2522
      %v2524 = vrot.slane %v2522, 4
      %v2525 = vrot.slane %v1748, 5
      %v2526 = vsel %vm1082, %v2524, %v2525
      %v2527 = vrot.slane %v2373, 5
      %v2528 = vrot.slane %v2527, 4
      %v2529 = vrot.slane %v1750, 5
      %v2530 = vsel %vm1082, %v2528, %v2529
      %v2531 = vrot.slane %v2529, 4
      %v2532 = vrot.slane %v1751, 5
      %v2533 = vsel %vm1082, %v2531, %v2532
      %s2534 = scalar_lea.vmem %s1, 10
      %v2535 = vld [vmem:[%s2534] sm:$0x3]
      %v2536 = vunpack.c.l.b16 %v2425
      %v2537 = vunpack.c.l.b16 %v2428
      %v2538 = vunpack.c.l.b16 %v2432
      %v2539 = vunpack.c.l.b16 %v2435
      %v2540 = vunpack.c.l.b16 %v2439
      %v2541 = vunpack.c.l.b16 %v2442
      %v2542 = vunpack.c.l.b16 %v2446
      %v2543 = vunpack.c.l.b16 %v2449
      %v2544 = vunpack.c.l.b16 %v2453
      %v2545 = vunpack.c.l.b16 %v2456
      %v2546 = vunpack.c.l.b16 %v2460
      %v2547 = vunpack.c.l.b16 %v2463
      %v2548 = vunpack.c.l.b16 %v2467
      %v2549 = vunpack.c.l.b16 %v2470
      %v2550 = vunpack.c.l.b16 %v2474
      %v2551 = vunpack.c.l.b16 %v2477
      %v2552 = vunpack.c.l.b16 %v2481
      %v2553 = vunpack.c.l.b16 %v2484
      %v2554 = vunpack.c.l.b16 %v2488
      %v2555 = vunpack.c.l.b16 %v2491
      %v2556 = vunpack.c.l.b16 %v2495
      %v2557 = vunpack.c.l.b16 %v2498
      %v2558 = vunpack.c.l.b16 %v2502
      %v2559 = vunpack.c.l.b16 %v2505
      %v2560 = vunpack.c.l.b16 %v2509
      %v2561 = vunpack.c.l.b16 %v2512
      %v2562 = vunpack.c.l.b16 %v2516
      %v2563 = vunpack.c.l.b16 %v2519
      %v2564 = vunpack.c.l.b16 %v2523
      %v2565 = vunpack.c.l.b16 %v2526
      %v2566 = vunpack.c.l.b16 %v2530
      %v2567 = vunpack.c.l.b16 %v2533
      %v2568 = vpack.c.b16 %v2537, %v2536
      %v2569 = vpack.c.b16 %v2539, %v2538
      %v2570 = vpack.c.b16 %v2541, %v2540
      %v2571 = vpack.c.b16 %v2543, %v2542
      %v2572 = vpack.c.b16 %v2545, %v2544
      %v2573 = vpack.c.b16 %v2547, %v2546
      %v2574 = vpack.c.b16 %v2549, %v2548
      %v2575 = vpack.c.b16 %v2551, %v2550
      %v2576 = vpack.c.b16 %v2553, %v2552
      %v2577 = vpack.c.b16 %v2555, %v2554
      %v2578 = vpack.c.b16 %v2557, %v2556
      %v2579 = vpack.c.b16 %v2559, %v2558
      %v2580 = vpack.c.b16 %v2561, %v2560
      %v2581 = vpack.c.b16 %v2563, %v2562
      %v2582 = vpack.c.b16 %v2565, %v2564
      %v2583 = vpack.c.b16 %v2567, %v2566
      %v2585 = vsel %vm670, %v2568, 0
      %v2588 = vsel %vm670, %v2569, 0
      %v2591 = vsel %vm670, %v2570, 0
      %v2594 = vsel %vm670, %v2571, 0
      %v2597 = vsel %vm670, %v2572, 0
      %v2600 = vsel %vm670, %v2573, 0
      %v2603 = vsel %vm670, %v2574, 0
      %v2606 = vsel %vm670, %v2575, 0
      %v2609 = vsel %vm670, %v2576, 0
      %v2612 = vsel %vm670, %v2577, 0
      %v2615 = vsel %vm670, %v2578, 0
      %v2618 = vsel %vm670, %v2579, 0
      %v2621 = vsel %vm670, %v2580, 0
      %v2624 = vsel %vm670, %v2581, 0
      %v2627 = vsel %vm670, %v2582, 0
      %v2630 = vsel %vm670, %v2583, 0
      %v2633 = vsel %vm719, %v2535, 0
      %2635 = vmatpush.bf16.msra.mxu0 0
      %2636 = vmatpush.bf16.msra.mxu0 0
      %2637 = vmatpush.bf16.msra.mxu0 0
      %2638 = vmatpush.bf16.msra.mxu0 0
      %2639 = vmatpush.bf16.msra.mxu0 0
      %2640 = vmatpush.bf16.msra.mxu0 0
      %2641 = vmatpush.bf16.msra.mxu0 0
      %2642 = vmatpush.bf16.msra.mxu0 %v2633
      %2643 = vmatmul.bf16.gmra.mxu0 %v2585
      %v2644 = vpop.f32.mrf.mxu0
      %v2645 = vadd.f32 0.0, %v2644
      %v2646 = vpop.f32.mrf.mxu0
      %v2647 = vadd.f32 0.0, %v2646
      %2648 = vmatmul.bf16.gmra.mxu0 %v2588
      %v2649 = vpop.f32.mrf.mxu0
      %v2650 = vadd.f32 0.0, %v2649
      %v2651 = vpop.f32.mrf.mxu0
      %v2652 = vadd.f32 0.0, %v2651
      %2653 = vmatmul.bf16.gmra.mxu0 %v2591
      %v2654 = vpop.f32.mrf.mxu0
      %v2655 = vadd.f32 0.0, %v2654
      %v2656 = vpop.f32.mrf.mxu0
      %v2657 = vadd.f32 0.0, %v2656
      %2658 = vmatmul.bf16.gmra.mxu0 %v2594
      %v2659 = vpop.f32.mrf.mxu0
      %v2660 = vadd.f32 0.0, %v2659
      %v2661 = vpop.f32.mrf.mxu0
      %v2662 = vadd.f32 0.0, %v2661
      %2663 = vmatmul.bf16.gmra.mxu0 %v2597
      %v2664 = vpop.f32.mrf.mxu0
      %v2665 = vadd.f32 0.0, %v2664
      %v2666 = vpop.f32.mrf.mxu0
      %v2667 = vadd.f32 0.0, %v2666
      %2668 = vmatmul.bf16.gmra.mxu0 %v2600
      %v2669 = vpop.f32.mrf.mxu0
      %v2670 = vadd.f32 0.0, %v2669
      %v2671 = vpop.f32.mrf.mxu0
      %v2672 = vadd.f32 0.0, %v2671
      %2673 = vmatmul.bf16.gmra.mxu0 %v2603
      %v2674 = vpop.f32.mrf.mxu0
      %v2675 = vadd.f32 0.0, %v2674
      %v2676 = vpop.f32.mrf.mxu0
      %v2677 = vadd.f32 0.0, %v2676
      %2678 = vmatmul.bf16.gmra.mxu0 %v2606
      %v2679 = vpop.f32.mrf.mxu0
      %v2680 = vadd.f32 0.0, %v2679
      %v2681 = vpop.f32.mrf.mxu0
      %v2682 = vadd.f32 0.0, %v2681
      %2683 = vmatmul.bf16.gmra.mxu0 %v2609
      %v2684 = vpop.f32.mrf.mxu0
      %v2685 = vadd.f32 0.0, %v2684
      %v2686 = vpop.f32.mrf.mxu0
      %v2687 = vadd.f32 0.0, %v2686
      %2688 = vmatmul.bf16.gmra.mxu0 %v2612
      %v2689 = vpop.f32.mrf.mxu0
      %v2690 = vadd.f32 0.0, %v2689
      %v2691 = vpop.f32.mrf.mxu0
      %v2692 = vadd.f32 0.0, %v2691
      %2693 = vmatmul.bf16.gmra.mxu0 %v2615
      %v2694 = vpop.f32.mrf.mxu0
      %v2695 = vadd.f32 0.0, %v2694
      %v2696 = vpop.f32.mrf.mxu0
      %v2697 = vadd.f32 0.0, %v2696
      %2698 = vmatmul.bf16.gmra.mxu0 %v2618
      %v2699 = vpop.f32.mrf.mxu0
      %v2700 = vadd.f32 0.0, %v2699
      %v2701 = vpop.f32.mrf.mxu0
      %v2702 = vadd.f32 0.0, %v2701
      %2703 = vmatmul.bf16.gmra.mxu0 %v2621
      %v2704 = vpop.f32.mrf.mxu0
      %v2705 = vadd.f32 0.0, %v2704
      %v2706 = vpop.f32.mrf.mxu0
      %v2707 = vadd.f32 0.0, %v2706
      %2708 = vmatmul.bf16.gmra.mxu0 %v2624
      %v2709 = vpop.f32.mrf.mxu0
      %v2710 = vadd.f32 0.0, %v2709
      %v2711 = vpop.f32.mrf.mxu0
      %v2712 = vadd.f32 0.0, %v2711
      %2713 = vmatmul.bf16.gmra.mxu0 %v2627
      %v2714 = vpop.f32.mrf.mxu0
      %v2715 = vadd.f32 0.0, %v2714
      %v2716 = vpop.f32.mrf.mxu0
      %v2717 = vadd.f32 0.0, %v2716
      %2718 = vmatmul.bf16.gmra.mxu0 %v2630
      %v2719 = vpop.f32.mrf.mxu0
      %v2720 = vadd.f32 0.0, %v2719
      %v2721 = vpop.f32.mrf.mxu0
      %v2722 = vadd.f32 0.0, %v2721
      %2723 = vdwg.mxu0
      %v2724 = vadd.f32 %v2326, %v2645
      %v2725 = vadd.f32 %v2327, %v2647
      %v2726 = vadd.f32 %v2328, %v2650
      %v2727 = vadd.f32 %v2329, %v2652
      %v2728 = vadd.f32 %v2330, %v2655
      %v2729 = vadd.f32 %v2331, %v2657
      %v2730 = vadd.f32 %v2332, %v2660
      %v2731 = vadd.f32 %v2333, %v2662
      %v2732 = vadd.f32 %v2334, %v2665
      %v2733 = vadd.f32 %v2335, %v2667
      %v2734 = vadd.f32 %v2336, %v2670
      %v2735 = vadd.f32 %v2337, %v2672
      %v2736 = vadd.f32 %v2338, %v2675
      %v2737 = vadd.f32 %v2339, %v2677
      %v2738 = vadd.f32 %v2340, %v2680
      %v2739 = vadd.f32 %v2341, %v2682
      %v2740 = vadd.f32 %v2342, %v2685
      %v2741 = vadd.f32 %v2343, %v2687
      %v2742 = vadd.f32 %v2344, %v2690
      %v2743 = vadd.f32 %v2345, %v2692
      %v2744 = vadd.f32 %v2346, %v2695
      %v2745 = vadd.f32 %v2347, %v2697
      %v2746 = vadd.f32 %v2348, %v2700
      %v2747 = vadd.f32 %v2349, %v2702
      %v2748 = vadd.f32 %v2350, %v2705
      %v2749 = vadd.f32 %v2351, %v2707
      %v2750 = vadd.f32 %v2352, %v2710
      %v2751 = vadd.f32 %v2353, %v2712
      %v2752 = vadd.f32 %v2354, %v2715
      %v2753 = vadd.f32 %v2355, %v2717
      %v2754 = vadd.f32 %v2356, %v2720
      %v2755 = vadd.f32 %v2357, %v2722
      %s2756 = scalar_lea.vmem %s172, 24
      %v2757 = vld [vmem:[%s2756] sm:$0xf]
      %v2758 = vld [vmem:[%s2756 + $0x4] sm:$0xf]
      %v2759 = vld [vmem:[%s2756 + $0xc] sm:$0xf]
      %v2760 = vld [vmem:[%s2756 + $0x10] sm:$0xf]
      %v2761 = vld [vmem:[%s2756 + $0x18] sm:$0xf]
      %v2762 = vld [vmem:[%s2756 + $0x1c] sm:$0xf]
      %v2763 = vld [vmem:[%s2756 + $0x24] sm:$0xf]
      %v2764 = vld [vmem:[%s2756 + $0x28] sm:$0xf]
      %v2765 = vld [vmem:[%s2756 + $0x30] sm:$0xf]
      %v2766 = vld [vmem:[%s2756 + $0x34] sm:$0xf]
      %v2767 = vld [vmem:[%s2756 + $0x3c] sm:$0xf]
      %v2768 = vld [vmem:[%s2756 + $0x40] sm:$0xf]
      %v2769 = vld [vmem:[%s2756 + $0x48] sm:$0xf]
      %v2770 = vld [vmem:[%s2756 + $0x4c] sm:$0xf]
      %v2771 = vld [vmem:[%s2756 + $0x54] sm:$0xf]
      %v2772 = vld [vmem:[%s2756 + $0x58] sm:$0xf]
      %v2773 = vld [vmem:[%s2756 + $0x60] sm:$0xf]
      %v2774 = vld [vmem:[%s2756 + $0x64] sm:$0xf]
      %v2775 = vld [vmem:[%s2756 + $0x6c] sm:$0xf]
      %v2776 = vld [vmem:[%s2756 + $0x70] sm:$0xf]
      %v2777 = vld [vmem:[%s2756 + $0x78] sm:$0xf]
      %v2778 = vld [vmem:[%s2756 + $0x7c] sm:$0xf]
      %v2779 = vld [vmem:[%s2756 + $0x84] sm:$0xf]
      %v2780 = vld [vmem:[%s2756 + $0x88] sm:$0xf]
      %v2781 = vld [vmem:[%s2756 + $0x90] sm:$0xf]
      %v2782 = vld [vmem:[%s2756 + $0x94] sm:$0xf]
      %v2783 = vld [vmem:[%s2756 + $0x9c] sm:$0xf]
      %v2784 = vld [vmem:[%s2756 + $0xa0] sm:$0xf]
      %v2785 = vld [vmem:[%s2756 + $0xa8] sm:$0xf]
      %v2786 = vld [vmem:[%s2756 + $0xac] sm:$0xf]
      %v2787 = vld [vmem:[%s2756 + $0xb4] sm:$0xf]
      %v2788 = vld [vmem:[%s2756 + $0xb8] sm:$0xf]
      %s2789 = scalar_lea.vmem %s1, 12
      %v2790 = vld [vmem:[%s2789] sm:$0x3]
      %v2823 = vunpack.c.l.b16 %v2757
      %v2824 = vunpack.c.l.b16 %v2758
      %v2825 = vunpack.c.l.b16 %v2759
      %v2826 = vunpack.c.l.b16 %v2760
      %v2827 = vunpack.c.l.b16 %v2761
      %v2828 = vunpack.c.l.b16 %v2762
      %v2829 = vunpack.c.l.b16 %v2763
      %v2830 = vunpack.c.l.b16 %v2764
      %v2831 = vunpack.c.l.b16 %v2765
      %v2832 = vunpack.c.l.b16 %v2766
      %v2833 = vunpack.c.l.b16 %v2767
      %v2834 = vunpack.c.l.b16 %v2768
      %v2835 = vunpack.c.l.b16 %v2769
      %v2836 = vunpack.c.l.b16 %v2770
      %v2837 = vunpack.c.l.b16 %v2771
      %v2838 = vunpack.c.l.b16 %v2772
      %v2839 = vunpack.c.l.b16 %v2773
      %v2840 = vunpack.c.l.b16 %v2774
      %v2841 = vunpack.c.l.b16 %v2775
      %v2842 = vunpack.c.l.b16 %v2776
      %v2843 = vunpack.c.l.b16 %v2777
      %v2844 = vunpack.c.l.b16 %v2778
      %v2845 = vunpack.c.l.b16 %v2779
      %v2846 = vunpack.c.l.b16 %v2780
      %v2847 = vunpack.c.l.b16 %v2781
      %v2848 = vunpack.c.l.b16 %v2782
      %v2849 = vunpack.c.l.b16 %v2783
      %v2850 = vunpack.c.l.b16 %v2784
      %v2851 = vunpack.c.l.b16 %v2785
      %v2852 = vunpack.c.l.b16 %v2786
      %v2853 = vunpack.c.l.b16 %v2787
      %v2854 = vunpack.c.l.b16 %v2788
      %v2855 = vpack.c.b16 %v2824, %v2823
      %v2856 = vpack.c.b16 %v2826, %v2825
      %v2857 = vpack.c.b16 %v2828, %v2827
      %v2858 = vpack.c.b16 %v2830, %v2829
      %v2859 = vpack.c.b16 %v2832, %v2831
      %v2860 = vpack.c.b16 %v2834, %v2833
      %v2861 = vpack.c.b16 %v2836, %v2835
      %v2862 = vpack.c.b16 %v2838, %v2837
      %v2863 = vpack.c.b16 %v2840, %v2839
      %v2864 = vpack.c.b16 %v2842, %v2841
      %v2865 = vpack.c.b16 %v2844, %v2843
      %v2866 = vpack.c.b16 %v2846, %v2845
      %v2867 = vpack.c.b16 %v2848, %v2847
      %v2868 = vpack.c.b16 %v2850, %v2849
      %v2869 = vpack.c.b16 %v2852, %v2851
      %v2870 = vpack.c.b16 %v2854, %v2853
      %v2872 = vsel %vm670, %v2855, 0
      %v2875 = vsel %vm670, %v2856, 0
      %v2878 = vsel %vm670, %v2857, 0
      %v2881 = vsel %vm670, %v2858, 0
      %v2884 = vsel %vm670, %v2859, 0
      %v2887 = vsel %vm670, %v2860, 0
      %v2890 = vsel %vm670, %v2861, 0
      %v2893 = vsel %vm670, %v2862, 0
      %v2896 = vsel %vm670, %v2863, 0
      %v2899 = vsel %vm670, %v2864, 0
      %v2902 = vsel %vm670, %v2865, 0
      %v2905 = vsel %vm670, %v2866, 0
      %v2908 = vsel %vm670, %v2867, 0
      %v2911 = vsel %vm670, %v2868, 0
      %v2914 = vsel %vm670, %v2869, 0
      %v2917 = vsel %vm670, %v2870, 0
      %v2920 = vsel %vm719, %v2790, 0
      %2922 = vmatpush.bf16.msra.mxu0 0
      %2923 = vmatpush.bf16.msra.mxu0 0
      %2924 = vmatpush.bf16.msra.mxu0 0
      %2925 = vmatpush.bf16.msra.mxu0 0
      %2926 = vmatpush.bf16.msra.mxu0 0
      %2927 = vmatpush.bf16.msra.mxu0 0
      %2928 = vmatpush.bf16.msra.mxu0 0
      %2929 = vmatpush.bf16.msra.mxu0 %v2920
      %2930 = vmatmul.bf16.gmra.mxu0 %v2872
      %v2931 = vpop.f32.mrf.mxu0
      %v2932 = vadd.f32 0.0, %v2931
      %v2933 = vpop.f32.mrf.mxu0
      %v2934 = vadd.f32 0.0, %v2933
      %2935 = vmatmul.bf16.gmra.mxu0 %v2875
      %v2936 = vpop.f32.mrf.mxu0
      %v2937 = vadd.f32 0.0, %v2936
      %v2938 = vpop.f32.mrf.mxu0
      %v2939 = vadd.f32 0.0, %v2938
      %2940 = vmatmul.bf16.gmra.mxu0 %v2878
      %v2941 = vpop.f32.mrf.mxu0
      %v2942 = vadd.f32 0.0, %v2941
      %v2943 = vpop.f32.mrf.mxu0
      %v2944 = vadd.f32 0.0, %v2943
      %2945 = vmatmul.bf16.gmra.mxu0 %v2881
      %v2946 = vpop.f32.mrf.mxu0
      %v2947 = vadd.f32 0.0, %v2946
      %v2948 = vpop.f32.mrf.mxu0
      %v2949 = vadd.f32 0.0, %v2948
      %2950 = vmatmul.bf16.gmra.mxu0 %v2884
      %v2951 = vpop.f32.mrf.mxu0
      %v2952 = vadd.f32 0.0, %v2951
      %v2953 = vpop.f32.mrf.mxu0
      %v2954 = vadd.f32 0.0, %v2953
      %2955 = vmatmul.bf16.gmra.mxu0 %v2887
      %v2956 = vpop.f32.mrf.mxu0
      %v2957 = vadd.f32 0.0, %v2956
      %v2958 = vpop.f32.mrf.mxu0
      %v2959 = vadd.f32 0.0, %v2958
      %2960 = vmatmul.bf16.gmra.mxu0 %v2890
      %v2961 = vpop.f32.mrf.mxu0
      %v2962 = vadd.f32 0.0, %v2961
      %v2963 = vpop.f32.mrf.mxu0
      %v2964 = vadd.f32 0.0, %v2963
      %2965 = vmatmul.bf16.gmra.mxu0 %v2893
      %v2966 = vpop.f32.mrf.mxu0
      %v2967 = vadd.f32 0.0, %v2966
      %v2968 = vpop.f32.mrf.mxu0
      %v2969 = vadd.f32 0.0, %v2968
      %2970 = vmatmul.bf16.gmra.mxu0 %v2896
      %v2971 = vpop.f32.mrf.mxu0
      %v2972 = vadd.f32 0.0, %v2971
      %v2973 = vpop.f32.mrf.mxu0
      %v2974 = vadd.f32 0.0, %v2973
      %2975 = vmatmul.bf16.gmra.mxu0 %v2899
      %v2976 = vpop.f32.mrf.mxu0
      %v2977 = vadd.f32 0.0, %v2976
      %v2978 = vpop.f32.mrf.mxu0
      %v2979 = vadd.f32 0.0, %v2978
      %2980 = vmatmul.bf16.gmra.mxu0 %v2902
      %v2981 = vpop.f32.mrf.mxu0
      %v2982 = vadd.f32 0.0, %v2981
      %v2983 = vpop.f32.mrf.mxu0
      %v2984 = vadd.f32 0.0, %v2983
      %2985 = vmatmul.bf16.gmra.mxu0 %v2905
      %v2986 = vpop.f32.mrf.mxu0
      %v2987 = vadd.f32 0.0, %v2986
      %v2988 = vpop.f32.mrf.mxu0
      %v2989 = vadd.f32 0.0, %v2988
      %2990 = vmatmul.bf16.gmra.mxu0 %v2908
      %v2991 = vpop.f32.mrf.mxu0
      %v2992 = vadd.f32 0.0, %v2991
      %v2993 = vpop.f32.mrf.mxu0
      %v2994 = vadd.f32 0.0, %v2993
      %2995 = vmatmul.bf16.gmra.mxu0 %v2911
      %v2996 = vpop.f32.mrf.mxu0
      %v2997 = vadd.f32 0.0, %v2996
      %v2998 = vpop.f32.mrf.mxu0
      %v2999 = vadd.f32 0.0, %v2998
      %3000 = vmatmul.bf16.gmra.mxu0 %v2914
      %v3001 = vpop.f32.mrf.mxu0
      %v3002 = vadd.f32 0.0, %v3001
      %v3003 = vpop.f32.mrf.mxu0
      %v3004 = vadd.f32 0.0, %v3003
      %3005 = vmatmul.bf16.gmra.mxu0 %v2917
      %v3006 = vpop.f32.mrf.mxu0
      %v3007 = vadd.f32 0.0, %v3006
      %v3008 = vpop.f32.mrf.mxu0
      %v3009 = vadd.f32 0.0, %v3008
      %3010 = vdwg.mxu0
      %v3011 = vadd.f32 %v2724, %v2932
      %v3012 = vadd.f32 %v2725, %v2934
      %v3013 = vadd.f32 %v2726, %v2937
      %v3014 = vadd.f32 %v2727, %v2939
      %v3015 = vadd.f32 %v2728, %v2942
      %v3016 = vadd.f32 %v2729, %v2944
      %v3017 = vadd.f32 %v2730, %v2947
      %v3018 = vadd.f32 %v2731, %v2949
      %v3019 = vadd.f32 %v2732, %v2952
      %v3020 = vadd.f32 %v2733, %v2954
      %v3021 = vadd.f32 %v2734, %v2957
      %v3022 = vadd.f32 %v2735, %v2959
      %v3023 = vadd.f32 %v2736, %v2962
      %v3024 = vadd.f32 %v2737, %v2964
      %v3025 = vadd.f32 %v2738, %v2967
      %v3026 = vadd.f32 %v2739, %v2969
      %v3027 = vadd.f32 %v2740, %v2972
      %v3028 = vadd.f32 %v2741, %v2974
      %v3029 = vadd.f32 %v2742, %v2977
      %v3030 = vadd.f32 %v2743, %v2979
      %v3031 = vadd.f32 %v2744, %v2982
      %v3032 = vadd.f32 %v2745, %v2984
      %v3033 = vadd.f32 %v2746, %v2987
      %v3034 = vadd.f32 %v2747, %v2989
      %v3035 = vadd.f32 %v2748, %v2992
      %v3036 = vadd.f32 %v2749, %v2994
      %v3037 = vadd.f32 %v2750, %v2997
      %v3038 = vadd.f32 %v2751, %v2999
      %v3039 = vadd.f32 %v2752, %v3002
      %v3040 = vadd.f32 %v2753, %v3004
      %v3041 = vadd.f32 %v2754, %v3007
      %v3042 = vadd.f32 %v2755, %v3009
      %v3043 = vld [vmem:[%s2756] sm:$0xf]
      %v3044 = vld [vmem:[%s2756 + $0x4] sm:$0xf]
      %v3045 = vld [vmem:[%s2756 + $0x8] sm:$0x1]
      %v3046 = vld [vmem:[%s2756 + $0xc] sm:$0xf]
      %v3047 = vld [vmem:[%s2756 + $0x10] sm:$0xf]
      %v3048 = vld [vmem:[%s2756 + $0x14] sm:$0x1]
      %v3049 = vld [vmem:[%s2756 + $0x18] sm:$0xf]
      %v3050 = vld [vmem:[%s2756 + $0x1c] sm:$0xf]
      %v3051 = vld [vmem:[%s2756 + $0x20] sm:$0x1]
      %v3052 = vld [vmem:[%s2756 + $0x24] sm:$0xf]
      %v3053 = vld [vmem:[%s2756 + $0x28] sm:$0xf]
      %v3054 = vld [vmem:[%s2756 + $0x2c] sm:$0x1]
      %v3055 = vld [vmem:[%s2756 + $0x30] sm:$0xf]
      %v3056 = vld [vmem:[%s2756 + $0x34] sm:$0xf]
      %v3057 = vld [vmem:[%s2756 + $0x38] sm:$0x1]
      %v3058 = vld [vmem:[%s2756 + $0x3c] sm:$0xf]
      %v3059 = vld [vmem:[%s2756 + $0x40] sm:$0xf]
      %v3060 = vld [vmem:[%s2756 + $0x44] sm:$0x1]
      %v3061 = vld [vmem:[%s2756 + $0x48] sm:$0xf]
      %v3062 = vld [vmem:[%s2756 + $0x4c] sm:$0xf]
      %v3063 = vld [vmem:[%s2756 + $0x50] sm:$0x1]
      %v3064 = vld [vmem:[%s2756 + $0x54] sm:$0xf]
      %v3065 = vld [vmem:[%s2756 + $0x58] sm:$0xf]
      %v3066 = vld [vmem:[%s2756 + $0x5c] sm:$0x1]
      %v3067 = vld [vmem:[%s2756 + $0x60] sm:$0xf]
      %v3068 = vld [vmem:[%s2756 + $0x64] sm:$0xf]
      %v3069 = vld [vmem:[%s2756 + $0x68] sm:$0x1]
      %v3070 = vld [vmem:[%s2756 + $0x6c] sm:$0xf]
      %v3071 = vld [vmem:[%s2756 + $0x70] sm:$0xf]
      %v3072 = vld [vmem:[%s2756 + $0x74] sm:$0x1]
      %v3073 = vld [vmem:[%s2756 + $0x78] sm:$0xf]
      %v3074 = vld [vmem:[%s2756 + $0x7c] sm:$0xf]
      %v3075 = vld [vmem:[%s2756 + $0x80] sm:$0x1]
      %v3076 = vld [vmem:[%s2756 + $0x84] sm:$0xf]
      %v3077 = vld [vmem:[%s2756 + $0x88] sm:$0xf]
      %v3078 = vld [vmem:[%s2756 + $0x8c] sm:$0x1]
      %v3079 = vld [vmem:[%s2756 + $0x90] sm:$0xf]
      %v3080 = vld [vmem:[%s2756 + $0x94] sm:$0xf]
      %v3081 = vld [vmem:[%s2756 + $0x98] sm:$0x1]
      %v3082 = vld [vmem:[%s2756 + $0x9c] sm:$0xf]
      %v3083 = vld [vmem:[%s2756 + $0xa0] sm:$0xf]
      %v3084 = vld [vmem:[%s2756 + $0xa4] sm:$0x1]
      %v3085 = vld [vmem:[%s2756 + $0xa8] sm:$0xf]
      %v3086 = vld [vmem:[%s2756 + $0xac] sm:$0xf]
      %v3087 = vld [vmem:[%s2756 + $0xb0] sm:$0x1]
      %v3088 = vld [vmem:[%s2756 + $0xb4] sm:$0xf]
      %v3089 = vld [vmem:[%s2756 + $0xb8] sm:$0xf]
      %v3090 = vld [vmem:[%s2756 + $0xbc] sm:$0x1]
      %v3092 = vshrl.u32 %v3043, 16
      %v3094 = vrot.slane %v3092, 4
      %v3095 = vshll.u32 %v3043, 16
      %v3097 = vrot.slane %v3095, 5
      %v3098 = vor.u32 %v3094, %v3097
      %v3099 = vrot.slane %v3098, 4
      %v3101 = vshll.u32 %v3044, 16
      %v3103 = vrot.slane %v3101, 5
      %v3104 = vsel %vm235, %v3099, %v3103
      %v3105 = vshrl.u32 %v3044, 16
      %v3107 = vrot.slane %v3105, 4
      %v3108 = vor.u32 %v3107, %v3103
      %v3109 = vrot.slane %v3108, 4
      %v3111 = vshll.u32 %v3045, 16
      %v3113 = vrot.slane %v3111, 5
      %v3114 = vsel %vm235, %v3109, %v3113
      %v3116 = vshrl.u32 %v3046, 16
      %v3118 = vrot.slane %v3116, 4
      %v3119 = vshll.u32 %v3046, 16
      %v3121 = vrot.slane %v3119, 5
      %v3122 = vor.u32 %v3118, %v3121
      %v3123 = vrot.slane %v3122, 4
      %v3125 = vshll.u32 %v3047, 16
      %v3127 = vrot.slane %v3125, 5
      %v3128 = vsel %vm235, %v3123, %v3127
      %v3129 = vshrl.u32 %v3047, 16
      %v3131 = vrot.slane %v3129, 4
      %v3132 = vor.u32 %v3131, %v3127
      %v3133 = vrot.slane %v3132, 4
      %v3135 = vshll.u32 %v3048, 16
      %v3137 = vrot.slane %v3135, 5
      %v3138 = vsel %vm235, %v3133, %v3137
      %v3140 = vshrl.u32 %v3049, 16
      %v3142 = vrot.slane %v3140, 4
      %v3143 = vshll.u32 %v3049, 16
      %v3145 = vrot.slane %v3143, 5
      %v3146 = vor.u32 %v3142, %v3145
      %v3147 = vrot.slane %v3146, 4
      %v3149 = vshll.u32 %v3050, 16
      %v3151 = vrot.slane %v3149, 5
      %v3152 = vsel %vm235, %v3147, %v3151
      %v3153 = vshrl.u32 %v3050, 16
      %v3155 = vrot.slane %v3153, 4
      %v3156 = vor.u32 %v3155, %v3151
      %v3157 = vrot.slane %v3156, 4
      %v3159 = vshll.u32 %v3051, 16
      %v3161 = vrot.slane %v3159, 5
      %v3162 = vsel %vm235, %v3157, %v3161
      %v3164 = vshrl.u32 %v3052, 16
      %v3166 = vrot.slane %v3164, 4
      %v3167 = vshll.u32 %v3052, 16
      %v3169 = vrot.slane %v3167, 5
      %v3170 = vor.u32 %v3166, %v3169
      %v3171 = vrot.slane %v3170, 4
      %v3173 = vshll.u32 %v3053, 16
      %v3175 = vrot.slane %v3173, 5
      %v3176 = vsel %vm235, %v3171, %v3175
      %v3177 = vshrl.u32 %v3053, 16
      %v3179 = vrot.slane %v3177, 4
      %v3180 = vor.u32 %v3179, %v3175
      %v3181 = vrot.slane %v3180, 4
      %v3183 = vshll.u32 %v3054, 16
      %v3185 = vrot.slane %v3183, 5
      %v3186 = vsel %vm235, %v3181, %v3185
      %v3188 = vshrl.u32 %v3055, 16
      %v3190 = vrot.slane %v3188, 4
      %v3191 = vshll.u32 %v3055, 16
      %v3193 = vrot.slane %v3191, 5
      %v3194 = vor.u32 %v3190, %v3193
      %v3195 = vrot.slane %v3194, 4
      %v3197 = vshll.u32 %v3056, 16
      %v3199 = vrot.slane %v3197, 5
      %v3200 = vsel %vm235, %v3195, %v3199
      %v3201 = vshrl.u32 %v3056, 16
      %v3203 = vrot.slane %v3201, 4
      %v3204 = vor.u32 %v3203, %v3199
      %v3205 = vrot.slane %v3204, 4
      %v3207 = vshll.u32 %v3057, 16
      %v3209 = vrot.slane %v3207, 5
      %v3210 = vsel %vm235, %v3205, %v3209
      %v3212 = vshrl.u32 %v3058, 16
      %v3214 = vrot.slane %v3212, 4
      %v3215 = vshll.u32 %v3058, 16
      %v3217 = vrot.slane %v3215, 5
      %v3218 = vor.u32 %v3214, %v3217
      %v3219 = vrot.slane %v3218, 4
      %v3221 = vshll.u32 %v3059, 16
      %v3223 = vrot.slane %v3221, 5
      %v3224 = vsel %vm235, %v3219, %v3223
      %v3225 = vshrl.u32 %v3059, 16
      %v3227 = vrot.slane %v3225, 4
      %v3228 = vor.u32 %v3227, %v3223
      %v3229 = vrot.slane %v3228, 4
      %v3231 = vshll.u32 %v3060, 16
      %v3233 = vrot.slane %v3231, 5
      %v3234 = vsel %vm235, %v3229, %v3233
      %v3236 = vshrl.u32 %v3061, 16
      %v3238 = vrot.slane %v3236, 4
      %v3239 = vshll.u32 %v3061, 16
      %v3241 = vrot.slane %v3239, 5
      %v3242 = vor.u32 %v3238, %v3241
      %v3243 = vrot.slane %v3242, 4
      %v3245 = vshll.u32 %v3062, 16
      %v3247 = vrot.slane %v3245, 5
      %v3248 = vsel %vm235, %v3243, %v3247
      %v3249 = vshrl.u32 %v3062, 16
      %v3251 = vrot.slane %v3249, 4
      %v3252 = vor.u32 %v3251, %v3247
      %v3253 = vrot.slane %v3252, 4
      %v3255 = vshll.u32 %v3063, 16
      %v3257 = vrot.slane %v3255, 5
      %v3258 = vsel %vm235, %v3253, %v3257
      %v3260 = vshrl.u32 %v3064, 16
      %v3262 = vrot.slane %v3260, 4
      %v3263 = vshll.u32 %v3064, 16
      %v3265 = vrot.slane %v3263, 5
      %v3266 = vor.u32 %v3262, %v3265
      %v3267 = vrot.slane %v3266, 4
      %v3269 = vshll.u32 %v3065, 16
      %v3271 = vrot.slane %v3269, 5
      %v3272 = vsel %vm235, %v3267, %v3271
      %v3273 = vshrl.u32 %v3065, 16
      %v3275 = vrot.slane %v3273, 4
      %v3276 = vor.u32 %v3275, %v3271
      %v3277 = vrot.slane %v3276, 4
      %v3279 = vshll.u32 %v3066, 16
      %v3281 = vrot.slane %v3279, 5
      %v3282 = vsel %vm235, %v3277, %v3281
      %v3284 = vshrl.u32 %v3067, 16
      %v3286 = vrot.slane %v3284, 4
      %v3287 = vshll.u32 %v3067, 16
      %v3289 = vrot.slane %v3287, 5
      %v3290 = vor.u32 %v3286, %v3289
      %v3291 = vrot.slane %v3290, 4
      %v3293 = vshll.u32 %v3068, 16
      %v3295 = vrot.slane %v3293, 5
      %v3296 = vsel %vm235, %v3291, %v3295
      %v3297 = vshrl.u32 %v3068, 16
      %v3299 = vrot.slane %v3297, 4
      %v3300 = vor.u32 %v3299, %v3295
      %v3301 = vrot.slane %v3300, 4
      %v3303 = vshll.u32 %v3069, 16
      %v3305 = vrot.slane %v3303, 5
      %v3306 = vsel %vm235, %v3301, %v3305
      %v3308 = vshrl.u32 %v3070, 16
      %v3310 = vrot.slane %v3308, 4
      %v3311 = vshll.u32 %v3070, 16
      %v3313 = vrot.slane %v3311, 5
      %v3314 = vor.u32 %v3310, %v3313
      %v3315 = vrot.slane %v3314, 4
      %v3317 = vshll.u32 %v3071, 16
      %v3319 = vrot.slane %v3317, 5
      %v3320 = vsel %vm235, %v3315, %v3319
      %v3321 = vshrl.u32 %v3071, 16
      %v3323 = vrot.slane %v3321, 4
      %v3324 = vor.u32 %v3323, %v3319
      %v3325 = vrot.slane %v3324, 4
      %v3327 = vshll.u32 %v3072, 16
      %v3329 = vrot.slane %v3327, 5
      %v3330 = vsel %vm235, %v3325, %v3329
      %v3332 = vshrl.u32 %v3073, 16
      %v3334 = vrot.slane %v3332, 4
      %v3335 = vshll.u32 %v3073, 16
      %v3337 = vrot.slane %v3335, 5
      %v3338 = vor.u32 %v3334, %v3337
      %v3339 = vrot.slane %v3338, 4
      %v3341 = vshll.u32 %v3074, 16
      %v3343 = vrot.slane %v3341, 5
      %v3344 = vsel %vm235, %v3339, %v3343
      %v3345 = vshrl.u32 %v3074, 16
      %v3347 = vrot.slane %v3345, 4
      %v3348 = vor.u32 %v3347, %v3343
      %v3349 = vrot.slane %v3348, 4
      %v3351 = vshll.u32 %v3075, 16
      %v3353 = vrot.slane %v3351, 5
      %v3354 = vsel %vm235, %v3349, %v3353
      %v3356 = vshrl.u32 %v3076, 16
      %v3358 = vrot.slane %v3356, 4
      %v3359 = vshll.u32 %v3076, 16
      %v3361 = vrot.slane %v3359, 5
      %v3362 = vor.u32 %v3358, %v3361
      %v3363 = vrot.slane %v3362, 4
      %v3365 = vshll.u32 %v3077, 16
      %v3367 = vrot.slane %v3365, 5
      %v3368 = vsel %vm235, %v3363, %v3367
      %v3369 = vshrl.u32 %v3077, 16
      %v3371 = vrot.slane %v3369, 4
      %v3372 = vor.u32 %v3371, %v3367
      %v3373 = vrot.slane %v3372, 4
      %v3375 = vshll.u32 %v3078, 16
      %v3377 = vrot.slane %v3375, 5
      %v3378 = vsel %vm235, %v3373, %v3377
      %v3380 = vshrl.u32 %v3079, 16
      %v3382 = vrot.slane %v3380, 4
      %v3383 = vshll.u32 %v3079, 16
      %v3385 = vrot.slane %v3383, 5
      %v3386 = vor.u32 %v3382, %v3385
      %v3387 = vrot.slane %v3386, 4
      %v3389 = vshll.u32 %v3080, 16
      %v3391 = vrot.slane %v3389, 5
      %v3392 = vsel %vm235, %v3387, %v3391
      %v3393 = vshrl.u32 %v3080, 16
      %v3395 = vrot.slane %v3393, 4
      %v3396 = vor.u32 %v3395, %v3391
      %v3397 = vrot.slane %v3396, 4
      %v3399 = vshll.u32 %v3081, 16
      %v3401 = vrot.slane %v3399, 5
      %v3402 = vsel %vm235, %v3397, %v3401
      %v3404 = vshrl.u32 %v3082, 16
      %v3406 = vrot.slane %v3404, 4
      %v3407 = vshll.u32 %v3082, 16
      %v3409 = vrot.slane %v3407, 5
      %v3410 = vor.u32 %v3406, %v3409
      %v3411 = vrot.slane %v3410, 4
      %v3413 = vshll.u32 %v3083, 16
      %v3415 = vrot.slane %v3413, 5
      %v3416 = vsel %vm235, %v3411, %v3415
      %v3417 = vshrl.u32 %v3083, 16
      %v3419 = vrot.slane %v3417, 4
      %v3420 = vor.u32 %v3419, %v3415
      %v3421 = vrot.slane %v3420, 4
      %v3423 = vshll.u32 %v3084, 16
      %v3425 = vrot.slane %v3423, 5
      %v3426 = vsel %vm235, %v3421, %v3425
      %v3428 = vshrl.u32 %v3085, 16
      %v3430 = vrot.slane %v3428, 4
      %v3431 = vshll.u32 %v3085, 16
      %v3433 = vrot.slane %v3431, 5
      %v3434 = vor.u32 %v3430, %v3433
      %v3435 = vrot.slane %v3434, 4
      %v3437 = vshll.u32 %v3086, 16
      %v3439 = vrot.slane %v3437, 5
      %v3440 = vsel %vm235, %v3435, %v3439
      %v3441 = vshrl.u32 %v3086, 16
      %v3443 = vrot.slane %v3441, 4
      %v3444 = vor.u32 %v3443, %v3439
      %v3445 = vrot.slane %v3444, 4
      %v3447 = vshll.u32 %v3087, 16
      %v3449 = vrot.slane %v3447, 5
      %v3450 = vsel %vm235, %v3445, %v3449
      %v3452 = vshrl.u32 %v3088, 16
      %v3454 = vrot.slane %v3452, 4
      %v3455 = vshll.u32 %v3088, 16
      %v3457 = vrot.slane %v3455, 5
      %v3458 = vor.u32 %v3454, %v3457
      %v3459 = vrot.slane %v3458, 4
      %v3461 = vshll.u32 %v3089, 16
      %v3463 = vrot.slane %v3461, 5
      %v3464 = vsel %vm235, %v3459, %v3463
      %v3465 = vshrl.u32 %v3089, 16
      %v3467 = vrot.slane %v3465, 4
      %v3468 = vor.u32 %v3467, %v3463
      %v3469 = vrot.slane %v3468, 4
      %v3471 = vshll.u32 %v3090, 16
      %v3473 = vrot.slane %v3471, 5
      %v3474 = vsel %vm235, %v3469, %v3473
      %s3475 = scalar_lea.vmem %s1, 14
      %v3476 = vld [vmem:[%s3475] sm:$0x3]
      %v3477 = vunpack.c.l.b16 %v3104
      %v3478 = vunpack.c.l.b16 %v3114
      %v3479 = vunpack.c.l.b16 %v3128
      %v3480 = vunpack.c.l.b16 %v3138
      %v3481 = vunpack.c.l.b16 %v3152
      %v3482 = vunpack.c.l.b16 %v3162
      %v3483 = vunpack.c.l.b16 %v3176
      %v3484 = vunpack.c.l.b16 %v3186
      %v3485 = vunpack.c.l.b16 %v3200
      %v3486 = vunpack.c.l.b16 %v3210
      %v3487 = vunpack.c.l.b16 %v3224
      %v3488 = vunpack.c.l.b16 %v3234
      %v3489 = vunpack.c.l.b16 %v3248
      %v3490 = vunpack.c.l.b16 %v3258
      %v3491 = vunpack.c.l.b16 %v3272
      %v3492 = vunpack.c.l.b16 %v3282
      %v3493 = vunpack.c.l.b16 %v3296
      %v3494 = vunpack.c.l.b16 %v3306
      %v3495 = vunpack.c.l.b16 %v3320
      %v3496 = vunpack.c.l.b16 %v3330
      %v3497 = vunpack.c.l.b16 %v3344
      %v3498 = vunpack.c.l.b16 %v3354
      %v3499 = vunpack.c.l.b16 %v3368
      %v3500 = vunpack.c.l.b16 %v3378
      %v3501 = vunpack.c.l.b16 %v3392
      %v3502 = vunpack.c.l.b16 %v3402
      %v3503 = vunpack.c.l.b16 %v3416
      %v3504 = vunpack.c.l.b16 %v3426
      %v3505 = vunpack.c.l.b16 %v3440
      %v3506 = vunpack.c.l.b16 %v3450
      %v3507 = vunpack.c.l.b16 %v3464
      %v3508 = vunpack.c.l.b16 %v3474
      %v3509 = vpack.c.b16 %v3478, %v3477
      %v3510 = vpack.c.b16 %v3480, %v3479
      %v3511 = vpack.c.b16 %v3482, %v3481
      %v3512 = vpack.c.b16 %v3484, %v3483
      %v3513 = vpack.c.b16 %v3486, %v3485
      %v3514 = vpack.c.b16 %v3488, %v3487
      %v3515 = vpack.c.b16 %v3490, %v3489
      %v3516 = vpack.c.b16 %v3492, %v3491
      %v3517 = vpack.c.b16 %v3494, %v3493
      %v3518 = vpack.c.b16 %v3496, %v3495
      %v3519 = vpack.c.b16 %v3498, %v3497
      %v3520 = vpack.c.b16 %v3500, %v3499
      %v3521 = vpack.c.b16 %v3502, %v3501
      %v3522 = vpack.c.b16 %v3504, %v3503
      %v3523 = vpack.c.b16 %v3506, %v3505
      %v3524 = vpack.c.b16 %v3508, %v3507
      %v3526 = vsel %vm670, %v3509, 0
      %v3529 = vsel %vm670, %v3510, 0
      %v3532 = vsel %vm670, %v3511, 0
      %v3535 = vsel %vm670, %v3512, 0
      %v3538 = vsel %vm670, %v3513, 0
      %v3541 = vsel %vm670, %v3514, 0
      %v3544 = vsel %vm670, %v3515, 0
      %v3547 = vsel %vm670, %v3516, 0
      %v3550 = vsel %vm670, %v3517, 0
      %v3553 = vsel %vm670, %v3518, 0
      %v3556 = vsel %vm670, %v3519, 0
      %v3559 = vsel %vm670, %v3520, 0
      %v3562 = vsel %vm670, %v3521, 0
      %v3565 = vsel %vm670, %v3522, 0
      %v3568 = vsel %vm670, %v3523, 0
      %v3571 = vsel %vm670, %v3524, 0
      %v3574 = vsel %vm719, %v3476, 0
      %3576 = vmatpush.bf16.msra.mxu0 0
      %3577 = vmatpush.bf16.msra.mxu0 0
      %3578 = vmatpush.bf16.msra.mxu0 0
      %3579 = vmatpush.bf16.msra.mxu0 0
      %3580 = vmatpush.bf16.msra.mxu0 0
      %3581 = vmatpush.bf16.msra.mxu0 0
      %3582 = vmatpush.bf16.msra.mxu0 0
      %3583 = vmatpush.bf16.msra.mxu0 %v3574
      %3584 = vmatmul.bf16.gmra.mxu0 %v3526
      %v3585 = vpop.f32.mrf.mxu0
      %v3586 = vadd.f32 0.0, %v3585
      %v3587 = vpop.f32.mrf.mxu0
      %v3588 = vadd.f32 0.0, %v3587
      %3589 = vmatmul.bf16.gmra.mxu0 %v3529
      %v3590 = vpop.f32.mrf.mxu0
      %v3591 = vadd.f32 0.0, %v3590
      %v3592 = vpop.f32.mrf.mxu0
      %v3593 = vadd.f32 0.0, %v3592
      %3594 = vmatmul.bf16.gmra.mxu0 %v3532
      %v3595 = vpop.f32.mrf.mxu0
      %v3596 = vadd.f32 0.0, %v3595
      %v3597 = vpop.f32.mrf.mxu0
      %v3598 = vadd.f32 0.0, %v3597
      %3599 = vmatmul.bf16.gmra.mxu0 %v3535
      %v3600 = vpop.f32.mrf.mxu0
      %v3601 = vadd.f32 0.0, %v3600
      %v3602 = vpop.f32.mrf.mxu0
      %v3603 = vadd.f32 0.0, %v3602
      %3604 = vmatmul.bf16.gmra.mxu0 %v3538
      %v3605 = vpop.f32.mrf.mxu0
      %v3606 = vadd.f32 0.0, %v3605
      %v3607 = vpop.f32.mrf.mxu0
      %v3608 = vadd.f32 0.0, %v3607
      %3609 = vmatmul.bf16.gmra.mxu0 %v3541
      %v3610 = vpop.f32.mrf.mxu0
      %v3611 = vadd.f32 0.0, %v3610
      %v3612 = vpop.f32.mrf.mxu0
      %v3613 = vadd.f32 0.0, %v3612
      %3614 = vmatmul.bf16.gmra.mxu0 %v3544
      %v3615 = vpop.f32.mrf.mxu0
      %v3616 = vadd.f32 0.0, %v3615
      %v3617 = vpop.f32.mrf.mxu0
      %v3618 = vadd.f32 0.0, %v3617
      %3619 = vmatmul.bf16.gmra.mxu0 %v3547
      %v3620 = vpop.f32.mrf.mxu0
      %v3621 = vadd.f32 0.0, %v3620
      %v3622 = vpop.f32.mrf.mxu0
      %v3623 = vadd.f32 0.0, %v3622
      %3624 = vmatmul.bf16.gmra.mxu0 %v3550
      %v3625 = vpop.f32.mrf.mxu0
      %v3626 = vadd.f32 0.0, %v3625
      %v3627 = vpop.f32.mrf.mxu0
      %v3628 = vadd.f32 0.0, %v3627
      %3629 = vmatmul.bf16.gmra.mxu0 %v3553
      %v3630 = vpop.f32.mrf.mxu0
      %v3631 = vadd.f32 0.0, %v3630
      %v3632 = vpop.f32.mrf.mxu0
      %v3633 = vadd.f32 0.0, %v3632
      %3634 = vmatmul.bf16.gmra.mxu0 %v3556
      %v3635 = vpop.f32.mrf.mxu0
      %v3636 = vadd.f32 0.0, %v3635
      %v3637 = vpop.f32.mrf.mxu0
      %v3638 = vadd.f32 0.0, %v3637
      %3639 = vmatmul.bf16.gmra.mxu0 %v3559
      %v3640 = vpop.f32.mrf.mxu0
      %v3641 = vadd.f32 0.0, %v3640
      %v3642 = vpop.f32.mrf.mxu0
      %v3643 = vadd.f32 0.0, %v3642
      %3644 = vmatmul.bf16.gmra.mxu0 %v3562
      %v3645 = vpop.f32.mrf.mxu0
      %v3646 = vadd.f32 0.0, %v3645
      %v3647 = vpop.f32.mrf.mxu0
      %v3648 = vadd.f32 0.0, %v3647
      %3649 = vmatmul.bf16.gmra.mxu0 %v3565
      %v3650 = vpop.f32.mrf.mxu0
      %v3651 = vadd.f32 0.0, %v3650
      %v3652 = vpop.f32.mrf.mxu0
      %v3653 = vadd.f32 0.0, %v3652
      %3654 = vmatmul.bf16.gmra.mxu0 %v3568
      %v3655 = vpop.f32.mrf.mxu0
      %v3656 = vadd.f32 0.0, %v3655
      %v3657 = vpop.f32.mrf.mxu0
      %v3658 = vadd.f32 0.0, %v3657
      %3659 = vmatmul.bf16.gmra.mxu0 %v3571
      %v3660 = vpop.f32.mrf.mxu0
      %v3661 = vadd.f32 0.0, %v3660
      %v3662 = vpop.f32.mrf.mxu0
      %v3663 = vadd.f32 0.0, %v3662
      %3664 = vdwg.mxu0
      %v3665 = vadd.f32 %v3011, %v3586
      %v3666 = vadd.f32 %v3012, %v3588
      %v3667 = vadd.f32 %v3013, %v3591
      %v3668 = vadd.f32 %v3014, %v3593
      %v3669 = vadd.f32 %v3015, %v3596
      %v3670 = vadd.f32 %v3016, %v3598
      %v3671 = vadd.f32 %v3017, %v3601
      %v3672 = vadd.f32 %v3018, %v3603
      %v3673 = vadd.f32 %v3019, %v3606
      %v3674 = vadd.f32 %v3020, %v3608
      %v3675 = vadd.f32 %v3021, %v3611
      %v3676 = vadd.f32 %v3022, %v3613
      %v3677 = vadd.f32 %v3023, %v3616
      %v3678 = vadd.f32 %v3024, %v3618
      %v3679 = vadd.f32 %v3025, %v3621
      %v3680 = vadd.f32 %v3026, %v3623
      %v3681 = vadd.f32 %v3027, %v3626
      %v3682 = vadd.f32 %v3028, %v3628
      %v3683 = vadd.f32 %v3029, %v3631
      %v3684 = vadd.f32 %v3030, %v3633
      %v3685 = vadd.f32 %v3031, %v3636
      %v3686 = vadd.f32 %v3032, %v3638
      %v3687 = vadd.f32 %v3033, %v3641
      %v3688 = vadd.f32 %v3034, %v3643
      %v3689 = vadd.f32 %v3035, %v3646
      %v3690 = vadd.f32 %v3036, %v3648
      %v3691 = vadd.f32 %v3037, %v3651
      %v3692 = vadd.f32 %v3038, %v3653
      %v3693 = vadd.f32 %v3039, %v3656
      %v3694 = vadd.f32 %v3040, %v3658
      %v3695 = vadd.f32 %v3041, %v3661
      %v3696 = vadd.f32 %v3042, %v3663
      %v3697 = vld [vmem:[%s2756] sm:$0xe]
      %v3698 = vld [vmem:[%s2756 + $0xc] sm:$0xe]
      %v3699 = vld [vmem:[%s2756 + $0x18] sm:$0xe]
      %v3700 = vld [vmem:[%s2756 + $0x24] sm:$0xe]
      %v3701 = vld [vmem:[%s2756 + $0x30] sm:$0xe]
      %v3702 = vld [vmem:[%s2756 + $0x3c] sm:$0xe]
      %v3703 = vld [vmem:[%s2756 + $0x48] sm:$0xe]
      %v3704 = vld [vmem:[%s2756 + $0x54] sm:$0xe]
      %v3705 = vld [vmem:[%s2756 + $0x60] sm:$0xe]
      %v3706 = vld [vmem:[%s2756 + $0x6c] sm:$0xe]
      %v3707 = vld [vmem:[%s2756 + $0x78] sm:$0xe]
      %v3708 = vld [vmem:[%s2756 + $0x84] sm:$0xe]
      %v3709 = vld [vmem:[%s2756 + $0x90] sm:$0xe]
      %v3710 = vld [vmem:[%s2756 + $0x9c] sm:$0xe]
      %v3711 = vld [vmem:[%s2756 + $0xa8] sm:$0xe]
      %v3712 = vld [vmem:[%s2756 + $0xb4] sm:$0xe]
      %v3761 = vrot.slane %v3697, 5
      %v3762 = vrot.slane %v3761, 4
      %v3763 = vrot.slane %v3044, 5
      %v3764 = vsel %vm1082, %v3762, %v3763
      %v3765 = vrot.slane %v3763, 4
      %v3766 = vrot.slane %v3045, 5
      %v3767 = vsel %vm1082, %v3765, %v3766
      %v3768 = vrot.slane %v3698, 5
      %v3769 = vrot.slane %v3768, 4
      %v3770 = vrot.slane %v3047, 5
      %v3771 = vsel %vm1082, %v3769, %v3770
      %v3772 = vrot.slane %v3770, 4
      %v3773 = vrot.slane %v3048, 5
      %v3774 = vsel %vm1082, %v3772, %v3773
      %v3775 = vrot.slane %v3699, 5
      %v3776 = vrot.slane %v3775, 4
      %v3777 = vrot.slane %v3050, 5
      %v3778 = vsel %vm1082, %v3776, %v3777
      %v3779 = vrot.slane %v3777, 4
      %v3780 = vrot.slane %v3051, 5
      %v3781 = vsel %vm1082, %v3779, %v3780
      %v3782 = vrot.slane %v3700, 5
      %v3783 = vrot.slane %v3782, 4
      %v3784 = vrot.slane %v3053, 5
      %v3785 = vsel %vm1082, %v3783, %v3784
      %v3786 = vrot.slane %v3784, 4
      %v3787 = vrot.slane %v3054, 5
      %v3788 = vsel %vm1082, %v3786, %v3787
      %v3789 = vrot.slane %v3701, 5
      %v3790 = vrot.slane %v3789, 4
      %v3791 = vrot.slane %v3056, 5
      %v3792 = vsel %vm1082, %v3790, %v3791
      %v3793 = vrot.slane %v3791, 4
      %v3794 = vrot.slane %v3057, 5
      %v3795 = vsel %vm1082, %v3793, %v3794
      %v3796 = vrot.slane %v3702, 5
      %v3797 = vrot.slane %v3796, 4
      %v3798 = vrot.slane %v3059, 5
      %v3799 = vsel %vm1082, %v3797, %v3798
      %v3800 = vrot.slane %v3798, 4
      %v3801 = vrot.slane %v3060, 5
      %v3802 = vsel %vm1082, %v3800, %v3801
      %v3803 = vrot.slane %v3703, 5
      %v3804 = vrot.slane %v3803, 4
      %v3805 = vrot.slane %v3062, 5
      %v3806 = vsel %vm1082, %v3804, %v3805
      %v3807 = vrot.slane %v3805, 4
      %v3808 = vrot.slane %v3063, 5
      %v3809 = vsel %vm1082, %v3807, %v3808
      %v3810 = vrot.slane %v3704, 5
      %v3811 = vrot.slane %v3810, 4
      %v3812 = vrot.slane %v3065, 5
      %v3813 = vsel %vm1082, %v3811, %v3812
      %v3814 = vrot.slane %v3812, 4
      %v3815 = vrot.slane %v3066, 5
      %v3816 = vsel %vm1082, %v3814, %v3815
      %v3817 = vrot.slane %v3705, 5
      %v3818 = vrot.slane %v3817, 4
      %v3819 = vrot.slane %v3068, 5
      %v3820 = vsel %vm1082, %v3818, %v3819
      %v3821 = vrot.slane %v3819, 4
      %v3822 = vrot.slane %v3069, 5
      %v3823 = vsel %vm1082, %v3821, %v3822
      %v3824 = vrot.slane %v3706, 5
      %v3825 = vrot.slane %v3824, 4
      %v3826 = vrot.slane %v3071, 5
      %v3827 = vsel %vm1082, %v3825, %v3826
      %v3828 = vrot.slane %v3826, 4
      %v3829 = vrot.slane %v3072, 5
      %v3830 = vsel %vm1082, %v3828, %v3829
      %v3831 = vrot.slane %v3707, 5
      %v3832 = vrot.slane %v3831, 4
      %v3833 = vrot.slane %v3074, 5
      %v3834 = vsel %vm1082, %v3832, %v3833
      %v3835 = vrot.slane %v3833, 4
      %v3836 = vrot.slane %v3075, 5
      %v3837 = vsel %vm1082, %v3835, %v3836
      %v3838 = vrot.slane %v3708, 5
      %v3839 = vrot.slane %v3838, 4
      %v3840 = vrot.slane %v3077, 5
      %v3841 = vsel %vm1082, %v3839, %v3840
      %v3842 = vrot.slane %v3840, 4
      %v3843 = vrot.slane %v3078, 5
      %v3844 = vsel %vm1082, %v3842, %v3843
      %v3845 = vrot.slane %v3709, 5
      %v3846 = vrot.slane %v3845, 4
      %v3847 = vrot.slane %v3080, 5
      %v3848 = vsel %vm1082, %v3846, %v3847
      %v3849 = vrot.slane %v3847, 4
      %v3850 = vrot.slane %v3081, 5
      %v3851 = vsel %vm1082, %v3849, %v3850
      %v3852 = vrot.slane %v3710, 5
      %v3853 = vrot.slane %v3852, 4
      %v3854 = vrot.slane %v3083, 5
      %v3855 = vsel %vm1082, %v3853, %v3854
      %v3856 = vrot.slane %v3854, 4
      %v3857 = vrot.slane %v3084, 5
      %v3858 = vsel %vm1082, %v3856, %v3857
      %v3859 = vrot.slane %v3711, 5
      %v3860 = vrot.slane %v3859, 4
      %v3861 = vrot.slane %v3086, 5
      %v3862 = vsel %vm1082, %v3860, %v3861
      %v3863 = vrot.slane %v3861, 4
      %v3864 = vrot.slane %v3087, 5
      %v3865 = vsel %vm1082, %v3863, %v3864
      %v3866 = vrot.slane %v3712, 5
      %v3867 = vrot.slane %v3866, 4
      %v3868 = vrot.slane %v3089, 5
      %v3869 = vsel %vm1082, %v3867, %v3868
      %v3870 = vrot.slane %v3868, 4
      %v3871 = vrot.slane %v3090, 5
      %v3872 = vsel %vm1082, %v3870, %v3871
      %s3873 = scalar_lea.vmem %s1, 16
      %v3874 = vld [vmem:[%s3873] sm:$0x3]
      %v3875 = vunpack.c.l.b16 %v3764
      %v3876 = vunpack.c.l.b16 %v3767
      %v3877 = vunpack.c.l.b16 %v3771
      %v3878 = vunpack.c.l.b16 %v3774
      %v3879 = vunpack.c.l.b16 %v3778
      %v3880 = vunpack.c.l.b16 %v3781
      %v3881 = vunpack.c.l.b16 %v3785
      %v3882 = vunpack.c.l.b16 %v3788
      %v3883 = vunpack.c.l.b16 %v3792
      %v3884 = vunpack.c.l.b16 %v3795
      %v3885 = vunpack.c.l.b16 %v3799
      %v3886 = vunpack.c.l.b16 %v3802
      %v3887 = vunpack.c.l.b16 %v3806
      %v3888 = vunpack.c.l.b16 %v3809
      %v3889 = vunpack.c.l.b16 %v3813
      %v3890 = vunpack.c.l.b16 %v3816
      %v3891 = vunpack.c.l.b16 %v3820
      %v3892 = vunpack.c.l.b16 %v3823
      %v3893 = vunpack.c.l.b16 %v3827
      %v3894 = vunpack.c.l.b16 %v3830
      %v3895 = vunpack.c.l.b16 %v3834
      %v3896 = vunpack.c.l.b16 %v3837
      %v3897 = vunpack.c.l.b16 %v3841
      %v3898 = vunpack.c.l.b16 %v3844
      %v3899 = vunpack.c.l.b16 %v3848
      %v3900 = vunpack.c.l.b16 %v3851
      %v3901 = vunpack.c.l.b16 %v3855
      %v3902 = vunpack.c.l.b16 %v3858
      %v3903 = vunpack.c.l.b16 %v3862
      %v3904 = vunpack.c.l.b16 %v3865
      %v3905 = vunpack.c.l.b16 %v3869
      %v3906 = vunpack.c.l.b16 %v3872
      %v3907 = vpack.c.b16 %v3876, %v3875
      %v3908 = vpack.c.b16 %v3878, %v3877
      %v3909 = vpack.c.b16 %v3880, %v3879
      %v3910 = vpack.c.b16 %v3882, %v3881
      %v3911 = vpack.c.b16 %v3884, %v3883
      %v3912 = vpack.c.b16 %v3886, %v3885
      %v3913 = vpack.c.b16 %v3888, %v3887
      %v3914 = vpack.c.b16 %v3890, %v3889
      %v3915 = vpack.c.b16 %v3892, %v3891
      %v3916 = vpack.c.b16 %v3894, %v3893
      %v3917 = vpack.c.b16 %v3896, %v3895
      %v3918 = vpack.c.b16 %v3898, %v3897
      %v3919 = vpack.c.b16 %v3900, %v3899
      %v3920 = vpack.c.b16 %v3902, %v3901
      %v3921 = vpack.c.b16 %v3904, %v3903
      %v3922 = vpack.c.b16 %v3906, %v3905
      %v3924 = vsel %vm670, %v3907, 0
      %v3927 = vsel %vm670, %v3908, 0
      %v3930 = vsel %vm670, %v3909, 0
      %v3933 = vsel %vm670, %v3910, 0
      %v3936 = vsel %vm670, %v3911, 0
      %v3939 = vsel %vm670, %v3912, 0
      %v3942 = vsel %vm670, %v3913, 0
      %v3945 = vsel %vm670, %v3914, 0
      %v3948 = vsel %vm670, %v3915, 0
      %v3951 = vsel %vm670, %v3916, 0
      %v3954 = vsel %vm670, %v3917, 0
      %v3957 = vsel %vm670, %v3918, 0
      %v3960 = vsel %vm670, %v3919, 0
      %v3963 = vsel %vm670, %v3920, 0
      %v3966 = vsel %vm670, %v3921, 0
      %v3969 = vsel %vm670, %v3922, 0
      %v3972 = vsel %vm719, %v3874, 0
      %3974 = vmatpush.bf16.msra.mxu0 0
      %3975 = vmatpush.bf16.msra.mxu0 0
      %3976 = vmatpush.bf16.msra.mxu0 0
      %3977 = vmatpush.bf16.msra.mxu0 0
      %3978 = vmatpush.bf16.msra.mxu0 0
      %3979 = vmatpush.bf16.msra.mxu0 0
      %3980 = vmatpush.bf16.msra.mxu0 0
      %3981 = vmatpush.bf16.msra.mxu0 %v3972
      %3982 = vmatmul.bf16.gmra.mxu0 %v3924
      %v3983 = vpop.f32.mrf.mxu0
      %v3984 = vadd.f32 0.0, %v3983
      %v3985 = vpop.f32.mrf.mxu0
      %v3986 = vadd.f32 0.0, %v3985
      %3987 = vmatmul.bf16.gmra.mxu0 %v3927
      %v3988 = vpop.f32.mrf.mxu0
      %v3989 = vadd.f32 0.0, %v3988
      %v3990 = vpop.f32.mrf.mxu0
      %v3991 = vadd.f32 0.0, %v3990
      %3992 = vmatmul.bf16.gmra.mxu0 %v3930
      %v3993 = vpop.f32.mrf.mxu0
      %v3994 = vadd.f32 0.0, %v3993
      %v3995 = vpop.f32.mrf.mxu0
      %v3996 = vadd.f32 0.0, %v3995
      %3997 = vmatmul.bf16.gmra.mxu0 %v3933
      %v3998 = vpop.f32.mrf.mxu0
      %v3999 = vadd.f32 0.0, %v3998
      %v4000 = vpop.f32.mrf.mxu0
      %v4001 = vadd.f32 0.0, %v4000
      %4002 = vmatmul.bf16.gmra.mxu0 %v3936
      %v4003 = vpop.f32.mrf.mxu0
      %v4004 = vadd.f32 0.0, %v4003
      %v4005 = vpop.f32.mrf.mxu0
      %v4006 = vadd.f32 0.0, %v4005
      %4007 = vmatmul.bf16.gmra.mxu0 %v3939
      %v4008 = vpop.f32.mrf.mxu0
      %v4009 = vadd.f32 0.0, %v4008
      %v4010 = vpop.f32.mrf.mxu0
      %v4011 = vadd.f32 0.0, %v4010
      %4012 = vmatmul.bf16.gmra.mxu0 %v3942
      %v4013 = vpop.f32.mrf.mxu0
      %v4014 = vadd.f32 0.0, %v4013
      %v4015 = vpop.f32.mrf.mxu0
      %v4016 = vadd.f32 0.0, %v4015
      %4017 = vmatmul.bf16.gmra.mxu0 %v3945
      %v4018 = vpop.f32.mrf.mxu0
      %v4019 = vadd.f32 0.0, %v4018
      %v4020 = vpop.f32.mrf.mxu0
      %v4021 = vadd.f32 0.0, %v4020
      %4022 = vmatmul.bf16.gmra.mxu0 %v3948
      %v4023 = vpop.f32.mrf.mxu0
      %v4024 = vadd.f32 0.0, %v4023
      %v4025 = vpop.f32.mrf.mxu0
      %v4026 = vadd.f32 0.0, %v4025
      %4027 = vmatmul.bf16.gmra.mxu0 %v3951
      %v4028 = vpop.f32.mrf.mxu0
      %v4029 = vadd.f32 0.0, %v4028
      %v4030 = vpop.f32.mrf.mxu0
      %v4031 = vadd.f32 0.0, %v4030
      %4032 = vmatmul.bf16.gmra.mxu0 %v3954
      %v4033 = vpop.f32.mrf.mxu0
      %v4034 = vadd.f32 0.0, %v4033
      %v4035 = vpop.f32.mrf.mxu0
      %v4036 = vadd.f32 0.0, %v4035
      %4037 = vmatmul.bf16.gmra.mxu0 %v3957
      %v4038 = vpop.f32.mrf.mxu0
      %v4039 = vadd.f32 0.0, %v4038
      %v4040 = vpop.f32.mrf.mxu0
      %v4041 = vadd.f32 0.0, %v4040
      %4042 = vmatmul.bf16.gmra.mxu0 %v3960
      %v4043 = vpop.f32.mrf.mxu0
      %v4044 = vadd.f32 0.0, %v4043
      %v4045 = vpop.f32.mrf.mxu0
      %v4046 = vadd.f32 0.0, %v4045
      %4047 = vmatmul.bf16.gmra.mxu0 %v3963
      %v4048 = vpop.f32.mrf.mxu0
      %v4049 = vadd.f32 0.0, %v4048
      %v4050 = vpop.f32.mrf.mxu0
      %v4051 = vadd.f32 0.0, %v4050
      %4052 = vmatmul.bf16.gmra.mxu0 %v3966
      %v4053 = vpop.f32.mrf.mxu0
      %v4054 = vadd.f32 0.0, %v4053
      %v4055 = vpop.f32.mrf.mxu0
      %v4056 = vadd.f32 0.0, %v4055
      %4057 = vmatmul.bf16.gmra.mxu0 %v3969
      %v4058 = vpop.f32.mrf.mxu0
      %v4059 = vadd.f32 0.0, %v4058
      %v4060 = vpop.f32.mrf.mxu0
      %v4061 = vadd.f32 0.0, %v4060
      %4062 = vdwg.mxu0
      %v4063 = vadd.f32 %v3665, %v3984
      %v4064 = vadd.f32 %v3666, %v3986
      %v4065 = vadd.f32 %v3667, %v3989
      %v4066 = vadd.f32 %v3668, %v3991
      %v4067 = vadd.f32 %v3669, %v3994
      %v4068 = vadd.f32 %v3670, %v3996
      %v4069 = vadd.f32 %v3671, %v3999
      %v4070 = vadd.f32 %v3672, %v4001
      %v4071 = vadd.f32 %v3673, %v4004
      %v4072 = vadd.f32 %v3674, %v4006
      %v4073 = vadd.f32 %v3675, %v4009
      %v4074 = vadd.f32 %v3676, %v4011
      %v4075 = vadd.f32 %v3677, %v4014
      %v4076 = vadd.f32 %v3678, %v4016
      %v4077 = vadd.f32 %v3679, %v4019
      %v4078 = vadd.f32 %v3680, %v4021
      %v4079 = vadd.f32 %v3681, %v4024
      %v4080 = vadd.f32 %v3682, %v4026
      %v4081 = vadd.f32 %v3683, %v4029
      %v4082 = vadd.f32 %v3684, %v4031
      %v4083 = vadd.f32 %v3685, %v4034
      %v4084 = vadd.f32 %v3686, %v4036
      %v4085 = vadd.f32 %v3687, %v4039
      %v4086 = vadd.f32 %v3688, %v4041
      %v4087 = vadd.f32 %v3689, %v4044
      %v4088 = vadd.f32 %v3690, %v4046
      %v4089 = vadd.f32 %v3691, %v4049
      %v4090 = vadd.f32 %v3692, %v4051
      %v4091 = vadd.f32 %v3693, %v4054
      %v4092 = vadd.f32 %v3694, %v4056
      %v4093 = vadd.f32 %v3695, %v4059
      %v4094 = vadd.f32 %v3696, %v4061
      %v4095 = vpack.c.bf16 %v4063, %v4063
      %v4096 = vpack.c.bf16 %v4064, %v4064
      %v4097 = vpack.c.bf16 %v4065, %v4065
      %v4098 = vpack.c.bf16 %v4066, %v4066
      %v4099 = vpack.c.bf16 %v4067, %v4067
      %v4100 = vpack.c.bf16 %v4068, %v4068
      %v4101 = vpack.c.bf16 %v4069, %v4069
      %v4102 = vpack.c.bf16 %v4070, %v4070
      %v4103 = vpack.c.bf16 %v4071, %v4071
      %v4104 = vpack.c.bf16 %v4072, %v4072
      %v4105 = vpack.c.bf16 %v4073, %v4073
      %v4106 = vpack.c.bf16 %v4074, %v4074
      %v4107 = vpack.c.bf16 %v4075, %v4075
      %v4108 = vpack.c.bf16 %v4076, %v4076
      %v4109 = vpack.c.bf16 %v4077, %v4077
      %v4110 = vpack.c.bf16 %v4078, %v4078
      %v4111 = vpack.c.bf16 %v4079, %v4079
      %v4112 = vpack.c.bf16 %v4080, %v4080
      %v4113 = vpack.c.bf16 %v4081, %v4081
      %v4114 = vpack.c.bf16 %v4082, %v4082
      %v4115 = vpack.c.bf16 %v4083, %v4083
      %v4116 = vpack.c.bf16 %v4084, %v4084
      %v4117 = vpack.c.bf16 %v4085, %v4085
      %v4118 = vpack.c.bf16 %v4086, %v4086
      %v4119 = vpack.c.bf16 %v4087, %v4087
      %v4120 = vpack.c.bf16 %v4088, %v4088
      %v4121 = vpack.c.bf16 %v4089, %v4089
      %v4122 = vpack.c.bf16 %v4090, %v4090
      %v4123 = vpack.c.bf16 %v4091, %v4091
      %v4124 = vpack.c.bf16 %v4092, %v4092
      %v4125 = vpack.c.bf16 %v4093, %v4093
      %v4126 = vpack.c.bf16 %v4094, %v4094
      %vm4127 = vcmask 257024
      %4128 = vst.msk [vmem:[%s177] sm:$0xf] %vm4127, %v4095
      %4129 = vst.msk [vmem:[%s177 + $0x4] sm:$0xf] %vm4127, %v4096
      %4130 = vst.msk [vmem:[%s177 + $0x8] sm:$0xf] %vm4127, %v4097
      %4131 = vst.msk [vmem:[%s177 + $0xc] sm:$0xf] %vm4127, %v4098
      %4132 = vst.msk [vmem:[%s177 + $0x10] sm:$0xf] %vm4127, %v4099
      %4133 = vst.msk [vmem:[%s177 + $0x14] sm:$0xf] %vm4127, %v4100
      %4134 = vst.msk [vmem:[%s177 + $0x18] sm:$0xf] %vm4127, %v4101
      %4135 = vst.msk [vmem:[%s177 + $0x1c] sm:$0xf] %vm4127, %v4102
      %4136 = vst.msk [vmem:[%s177 + $0x20] sm:$0xf] %vm4127, %v4103
      %4137 = vst.msk [vmem:[%s177 + $0x24] sm:$0xf] %vm4127, %v4104
      %4138 = vst.msk [vmem:[%s177 + $0x28] sm:$0xf] %vm4127, %v4105
      %4139 = vst.msk [vmem:[%s177 + $0x2c] sm:$0xf] %vm4127, %v4106
      %4140 = vst.msk [vmem:[%s177 + $0x30] sm:$0xf] %vm4127, %v4107
      %4141 = vst.msk [vmem:[%s177 + $0x34] sm:$0xf] %vm4127, %v4108
      %4142 = vst.msk [vmem:[%s177 + $0x38] sm:$0xf] %vm4127, %v4109
      %4143 = vst.msk [vmem:[%s177 + $0x3c] sm:$0xf] %vm4127, %v4110
      %4144 = vst.msk [vmem:[%s177 + $0x40] sm:$0xf] %vm4127, %v4111
      %4145 = vst.msk [vmem:[%s177 + $0x44] sm:$0xf] %vm4127, %v4112
      %4146 = vst.msk [vmem:[%s177 + $0x48] sm:$0xf] %vm4127, %v4113
      %4147 = vst.msk [vmem:[%s177 + $0x4c] sm:$0xf] %vm4127, %v4114
      %4148 = vst.msk [vmem:[%s177 + $0x50] sm:$0xf] %vm4127, %v4115
      %4149 = vst.msk [vmem:[%s177 + $0x54] sm:$0xf] %vm4127, %v4116
      %4150 = vst.msk [vmem:[%s177 + $0x58] sm:$0xf] %vm4127, %v4117
      %4151 = vst.msk [vmem:[%s177 + $0x5c] sm:$0xf] %vm4127, %v4118
      %4152 = vst.msk [vmem:[%s177 + $0x60] sm:$0xf] %vm4127, %v4119
      %4153 = vst.msk [vmem:[%s177 + $0x64] sm:$0xf] %vm4127, %v4120
      %4154 = vst.msk [vmem:[%s177 + $0x68] sm:$0xf] %vm4127, %v4121
      %4155 = vst.msk [vmem:[%s177 + $0x6c] sm:$0xf] %vm4127, %v4122
      %4156 = vst.msk [vmem:[%s177 + $0x70] sm:$0xf] %vm4127, %v4123
      %4157 = vst.msk [vmem:[%s177 + $0x74] sm:$0xf] %vm4127, %v4124
      %4158 = vst.msk [vmem:[%s177 + $0x78] sm:$0xf] %vm4127, %v4125
      %4159 = vst.msk [vmem:[%s177 + $0x7c] sm:$0xf] %vm4127, %v4126
      %vm4160 = vcmask 261120
      %v4161 = vsel %vm4160, %v4063, 0.0
      %v4162 = vsel %vm4160, %v4064, 0.0
      %v4163 = vadd.f32 %v4161, %v4162
      %v4164 = vsel %vm4160, %v4065, 0.0
      %v4165 = vadd.f32 %v4163, %v4164
      %v4166 = vsel %vm4160, %v4066, 0.0
      %v4167 = vadd.f32 %v4165, %v4166
      %v4168 = vsel %vm4160, %v4067, 0.0
      %v4169 = vadd.f32 %v4167, %v4168
      %v4170 = vsel %vm4160, %v4068, 0.0
      %v4171 = vadd.f32 %v4169, %v4170
      %v4172 = vsel %vm4160, %v4069, 0.0
      %v4173 = vadd.f32 %v4171, %v4172
      %v4174 = vsel %vm4160, %v4070, 0.0
      %v4175 = vadd.f32 %v4173, %v4174
      %v4176 = vsel %vm4160, %v4071, 0.0
      %v4177 = vadd.f32 %v4175, %v4176
      %v4178 = vsel %vm4160, %v4072, 0.0
      %v4179 = vadd.f32 %v4177, %v4178
      %v4180 = vsel %vm4160, %v4073, 0.0
      %v4181 = vadd.f32 %v4179, %v4180
      %v4182 = vsel %vm4160, %v4074, 0.0
      %v4183 = vadd.f32 %v4181, %v4182
      %v4184 = vsel %vm4160, %v4075, 0.0
      %v4185 = vadd.f32 %v4183, %v4184
      %v4186 = vsel %vm4160, %v4076, 0.0
      %v4187 = vadd.f32 %v4185, %v4186
      %v4188 = vsel %vm4160, %v4077, 0.0
      %v4189 = vadd.f32 %v4187, %v4188
      %v4190 = vsel %vm4160, %v4078, 0.0
      %v4191 = vadd.f32 %v4189, %v4190
      %v4192 = vsel %vm4160, %v4079, 0.0
      %v4193 = vadd.f32 %v4191, %v4192
      %v4194 = vsel %vm4160, %v4080, 0.0
      %v4195 = vadd.f32 %v4193, %v4194
      %v4196 = vsel %vm4160, %v4081, 0.0
      %v4197 = vadd.f32 %v4195, %v4196
      %v4198 = vsel %vm4160, %v4082, 0.0
      %v4199 = vadd.f32 %v4197, %v4198
      %v4200 = vsel %vm4160, %v4083, 0.0
      %v4201 = vadd.f32 %v4199, %v4200
      %v4202 = vsel %vm4160, %v4084, 0.0
      %v4203 = vadd.f32 %v4201, %v4202
      %v4204 = vsel %vm4160, %v4085, 0.0
      %v4205 = vadd.f32 %v4203, %v4204
      %v4206 = vsel %vm4160, %v4086, 0.0
      %v4207 = vadd.f32 %v4205, %v4206
      %v4208 = vsel %vm4160, %v4087, 0.0
      %v4209 = vadd.f32 %v4207, %v4208
      %v4210 = vsel %vm4160, %v4088, 0.0
      %v4211 = vadd.f32 %v4209, %v4210
      %v4212 = vsel %vm4160, %v4089, 0.0
      %v4213 = vadd.f32 %v4211, %v4212
      %v4214 = vsel %vm4160, %v4090, 0.0
      %v4215 = vadd.f32 %v4213, %v4214
      %v4216 = vsel %vm4160, %v4091, 0.0
      %v4217 = vadd.f32 %v4215, %v4216
      %v4218 = vsel %vm4160, %v4092, 0.0
      %v4219 = vadd.f32 %v4217, %v4218
      %v4220 = vsel %vm4160, %v4093, 0.0
      %v4221 = vadd.f32 %v4219, %v4220
      %v4222 = vsel %vm4160, %v4094, 0.0
      %v4223 = vadd.f32 %v4221, %v4222
      %v4224 = vrot.slane %v4223, 4
      %v4225 = vadd.f32 %v4223, %v4224
      %v4226 = vrot.slane %v4225, 2
      %v4227 = vadd.f32 %v4225, %v4226
      %v4228 = vrot.slane %v4227, 1
      %v4229 = vadd.f32 %v4227, %v4228
      %v4230 = vrcp.pop 256.0
      %v4231 = vmul.f32 256.0, %v4230
      %v4232 = vsub.f32 1.0, %v4231
      %v4233 = vmul.f32 %v4230, %v4232
      %v4234 = vadd.f32 %v4230, %v4233
      %vm4235 = vweird.f32 %v4230
      %v4236 = vsel %vm4235, %v4230, %v4234
      %v4237 = vmul.f32 %v4229, %v4236
      %vm4238 = vcmask 253952
      %4239 = vst.msk [vmem:[%s182] sm:$0x1] %vm4238, %v4237
      %v4240 = vsub.f32 %v4063, %v4237
      %v4241 = vsub.f32 %v4064, %v4237
      %v4242 = vsub.f32 %v4065, %v4237
      %v4243 = vsub.f32 %v4066, %v4237
      %v4244 = vsub.f32 %v4067, %v4237
      %v4245 = vsub.f32 %v4068, %v4237
      %v4246 = vsub.f32 %v4069, %v4237
      %v4247 = vsub.f32 %v4070, %v4237
      %v4248 = vsub.f32 %v4071, %v4237
      %v4249 = vsub.f32 %v4072, %v4237
      %v4250 = vsub.f32 %v4073, %v4237
      %v4251 = vsub.f32 %v4074, %v4237
      %v4252 = vsub.f32 %v4075, %v4237
      %v4253 = vsub.f32 %v4076, %v4237
      %v4254 = vsub.f32 %v4077, %v4237
      %v4255 = vsub.f32 %v4078, %v4237
      %v4256 = vsub.f32 %v4079, %v4237
      %v4257 = vsub.f32 %v4080, %v4237
      %v4258 = vsub.f32 %v4081, %v4237
      %v4259 = vsub.f32 %v4082, %v4237
      %v4260 = vsub.f32 %v4083, %v4237
      %v4261 = vsub.f32 %v4084, %v4237
      %v4262 = vsub.f32 %v4085, %v4237
      %v4263 = vsub.f32 %v4086, %v4237
      %v4264 = vsub.f32 %v4087, %v4237
      %v4265 = vsub.f32 %v4088, %v4237
      %v4266 = vsub.f32 %v4089, %v4237
      %v4267 = vsub.f32 %v4090, %v4237
      %v4268 = vsub.f32 %v4091, %v4237
      %v4269 = vsub.f32 %v4092, %v4237
      %v4270 = vsub.f32 %v4093, %v4237
      %v4271 = vsub.f32 %v4094, %v4237
      %v4272 = vmul.f32 %v4240, %v4240
      %v4273 = vmul.f32 %v4241, %v4241
      %v4274 = vmul.f32 %v4242, %v4242
      %v4275 = vmul.f32 %v4243, %v4243
      %v4276 = vmul.f32 %v4244, %v4244
      %v4277 = vmul.f32 %v4245, %v4245
      %v4278 = vmul.f32 %v4246, %v4246
      %v4279 = vmul.f32 %v4247, %v4247
      %v4280 = vmul.f32 %v4248, %v4248
      %v4281 = vmul.f32 %v4249, %v4249
      %v4282 = vmul.f32 %v4250, %v4250
      %v4283 = vmul.f32 %v4251, %v4251
      %v4284 = vmul.f32 %v4252, %v4252
      %v4285 = vmul.f32 %v4253, %v4253
      %v4286 = vmul.f32 %v4254, %v4254
      %v4287 = vmul.f32 %v4255, %v4255
      %v4288 = vmul.f32 %v4256, %v4256
      %v4289 = vmul.f32 %v4257, %v4257
      %v4290 = vmul.f32 %v4258, %v4258
      %v4291 = vmul.f32 %v4259, %v4259
      %v4292 = vmul.f32 %v4260, %v4260
      %v4293 = vmul.f32 %v4261, %v4261
      %v4294 = vmul.f32 %v4262, %v4262
      %v4295 = vmul.f32 %v4263, %v4263
      %v4296 = vmul.f32 %v4264, %v4264
      %v4297 = vmul.f32 %v4265, %v4265
      %v4298 = vmul.f32 %v4266, %v4266
      %v4299 = vmul.f32 %v4267, %v4267
      %v4300 = vmul.f32 %v4268, %v4268
      %v4301 = vmul.f32 %v4269, %v4269
      %v4302 = vmul.f32 %v4270, %v4270
      %v4303 = vmul.f32 %v4271, %v4271
      %v4304 = vsel %vm4160, %v4272, 0.0
      %v4305 = vsel %vm4160, %v4273, 0.0
      %v4306 = vadd.f32 %v4304, %v4305
      %v4307 = vsel %vm4160, %v4274, 0.0
      %v4308 = vadd.f32 %v4306, %v4307
      %v4309 = vsel %vm4160, %v4275, 0.0
      %v4310 = vadd.f32 %v4308, %v4309
      %v4311 = vsel %vm4160, %v4276, 0.0
      %v4312 = vadd.f32 %v4310, %v4311
      %v4313 = vsel %vm4160, %v4277, 0.0
      %v4314 = vadd.f32 %v4312, %v4313
      %v4315 = vsel %vm4160, %v4278, 0.0
      %v4316 = vadd.f32 %v4314, %v4315
      %v4317 = vsel %vm4160, %v4279, 0.0
      %v4318 = vadd.f32 %v4316, %v4317
      %v4319 = vsel %vm4160, %v4280, 0.0
      %v4320 = vadd.f32 %v4318, %v4319
      %v4321 = vsel %vm4160, %v4281, 0.0
      %v4322 = vadd.f32 %v4320, %v4321
      %v4323 = vsel %vm4160, %v4282, 0.0
      %v4324 = vadd.f32 %v4322, %v4323
      %v4325 = vsel %vm4160, %v4283, 0.0
      %v4326 = vadd.f32 %v4324, %v4325
      %v4327 = vsel %vm4160, %v4284, 0.0
      %v4328 = vadd.f32 %v4326, %v4327
      %v4329 = vsel %vm4160, %v4285, 0.0
      %v4330 = vadd.f32 %v4328, %v4329
      %v4331 = vsel %vm4160, %v4286, 0.0
      %v4332 = vadd.f32 %v4330, %v4331
      %v4333 = vsel %vm4160, %v4287, 0.0
      %v4334 = vadd.f32 %v4332, %v4333
      %v4335 = vsel %vm4160, %v4288, 0.0
      %v4336 = vadd.f32 %v4334, %v4335
      %v4337 = vsel %vm4160, %v4289, 0.0
      %v4338 = vadd.f32 %v4336, %v4337
      %v4339 = vsel %vm4160, %v4290, 0.0
      %v4340 = vadd.f32 %v4338, %v4339
      %v4341 = vsel %vm4160, %v4291, 0.0
      %v4342 = vadd.f32 %v4340, %v4341
      %v4343 = vsel %vm4160, %v4292, 0.0
      %v4344 = vadd.f32 %v4342, %v4343
      %v4345 = vsel %vm4160, %v4293, 0.0
      %v4346 = vadd.f32 %v4344, %v4345
      %v4347 = vsel %vm4160, %v4294, 0.0
      %v4348 = vadd.f32 %v4346, %v4347
      %v4349 = vsel %vm4160, %v4295, 0.0
      %v4350 = vadd.f32 %v4348, %v4349
      %v4351 = vsel %vm4160, %v4296, 0.0
      %v4352 = vadd.f32 %v4350, %v4351
      %v4353 = vsel %vm4160, %v4297, 0.0
      %v4354 = vadd.f32 %v4352, %v4353
      %v4355 = vsel %vm4160, %v4298, 0.0
      %v4356 = vadd.f32 %v4354, %v4355
      %v4357 = vsel %vm4160, %v4299, 0.0
      %v4358 = vadd.f32 %v4356, %v4357
      %v4359 = vsel %vm4160, %v4300, 0.0
      %v4360 = vadd.f32 %v4358, %v4359
      %v4361 = vsel %vm4160, %v4301, 0.0
      %v4362 = vadd.f32 %v4360, %v4361
      %v4363 = vsel %vm4160, %v4302, 0.0
      %v4364 = vadd.f32 %v4362, %v4363
      %v4365 = vsel %vm4160, %v4303, 0.0
      %v4366 = vadd.f32 %v4364, %v4365
      %v4367 = vrot.slane %v4366, 4
      %v4368 = vadd.f32 %v4366, %v4367
      %v4369 = vrot.slane %v4368, 2
      %v4370 = vadd.f32 %v4368, %v4369
      %v4371 = vrot.slane %v4370, 1
      %v4372 = vadd.f32 %v4370, %v4371
      %4373 = vst.msk [vmem:[%s182 + $0x1] sm:$0x1] %vm4238, %v4372
      %s4374 = smul.u32 32, %s15
      %p4375 = scmp.lt.s32.totalorder %s4374, 63
      %s4376 = scalar_select %p4375, %s4374, 63
      %s4377 = smul.addr %s4376, 4
      %s4378 = scalar_lea.vmem %s2, %s4377
      %p4379 = scmp.lt.s32.totalorder %s15, 1
      %s4380 = scalar_select %p4379, %s15, 1
      %s4381 = smul.addr %s4380, 2
      %s4382 = scalar_lea.vmem %s3, %s4381
      // Predicated region
      $region29: #{conv_transpose_block.2} parent=27 // pred_check
        %p4383 = pneg %p80
      $region30: #{conv_transpose_block.2} parent=27 // pred_check_branch
        %4385 = sbr.rel (%p4383) target = $region32
      $region31: #{conv_transpose_block.2} parent=27 // pred_region
        %s4386 = smul.u32 32, %s15
      $region32: #{conv_transpose_block.2} parent=27 // pred_fallthru
        _
      // Predicated region
      $region33: #{conv_transpose_block.2} parent=27 // pred_check
        %p4387 = pneg %p106
      $region34: #{conv_transpose_block.2} parent=27 // pred_check_branch
        %4389 = sbr.rel (%p4387) target = $region36
      $region35: #{conv_transpose_block.2} parent=27 // pred_region
        _
      $region36: #{conv_transpose_block.2} parent=27 // pred_fallthru
        _
    $region28: #{conv_transpose_block.2} parent=5 // pred_fallthru
      _
    %p4390 = scmp.le.s32.totalorder 2, %s10
    // Predicated region
    $region37: #{conv_transpose_block.2} parent=5 // pred_check
      %p4391 = pneg %p4390
    $region38: #{conv_transpose_block.2} parent=5 // pred_check_branch
      %4393 = sbr.rel (%p4391) target = $region40
    $region39: #{conv_transpose_block.2} parent=5 // pred_region
      %s4394 = ssub.s32 %s10, 2
      // Predicated region
      $region41: #{conv_transpose_block.2} parent=39 // pred_check
        %p4395 = pneg %p86
      $region42: #{conv_transpose_block.2} parent=39 // pred_check_branch
        %4397 = sbr.rel (%p4395) target = $region44
      $region43: #{conv_transpose_block.2} parent=39 // pred_region
        %s4398 = smul.u32 32, %s16
        %p4399 = scmp.lt.s32.totalorder %s4398, 63
        %s4400 = scalar_select %p4399, %s4398, 63
        %s4401 = smul.addr %s4400, 4
        %s4402 = scalar_lea.vmem %s2, %s4401
      $region44: #{conv_transpose_block.2} parent=39 // pred_fallthru
        _
      // Predicated region
      $region45: #{conv_transpose_block.2} parent=39 // pred_check
        %p4403 = pneg %p112
      $region46: #{conv_transpose_block.2} parent=39 // pred_check_branch
        %4405 = sbr.rel (%p4403) target = $region48
      $region47: #{conv_transpose_block.2} parent=39 // pred_region
        %p4406 = scmp.lt.s32.totalorder %s16, 1
        %s4407 = scalar_select %p4406, %s16, 1
        %s4408 = smul.addr %s4407, 2
        %s4409 = scalar_lea.vmem %s3, %s4408
      $region48: #{conv_transpose_block.2} parent=39 // pred_fallthru
        _
    $region40: #{conv_transpose_block.2} parent=5 // pred_fallthru
      _
  $region6: #{conv_transpose_block.2} parent=0 // loop_footer
    %s14 = sadd.s32 1, %s10
  $region7: #{conv_transpose_block.2} parent=0 // loop_footer_branch
    %9 = sbr.rel target = $region3
  $region8: #{conv_transpose_block.2} parent=0 // loop_exit
    _

</llo_original>
